<compile_context>
chip_gen: v7x
topology: tpu7x:2x2x1
jax: 0.10.0
libtpu: 0.0.40
codegen_flags: <defaults>
</compile_context>

<pallas_src>
import functools

import jax
import jax.numpy as jnp
from jax import lax
from jax.experimental import pallas as pl
from jax.experimental.pallas import tpu as pltpu

# ---------------- configuration (small, consistent with the module) ----------------
BATCH = 2
IMG = 16          # image_size
CIN = 3           # RGB input (ConvolutionalTokenizer hard-codes 3 input channels)
EMB = 32          # embedding_dimension
NUM_HEADS = 2
HEAD_DIM = EMB // NUM_HEADS
MLP_DIM = 64      # mlp_dimension
NUM_CONV_LAYERS = 2
NUM_BLOCKS = 2    # num_layers of transformer blocks
NUM_CLASSES = 16
LN_EPS = 1e-5

H0 = IMG // 2                 # 8  : spatial side after conv0 + pool
N0 = H0 * H0                  # 64
W0P = H0 + 2                  # 10 : zero-padded side for conv1
H1 = H0 // 2                  # 4  : spatial side after conv1 + pool
NPATCH = H1 * H1              # 16 : number of tokens
SLAB1 = H0 * W0P // 2         # 40 : stride-2 flat window length per conv1 phase
FLAT0 = W0P * W0P + 2 * W0P   # 120: flat padded map + slack for strided over-read
K0 = 9 * CIN                  # 27 : im2col K for conv0
K0PAD = 32                    # lane-friendly padded K


# ============================ fused forward kernel ============================
def _cct_forward_kernel(
    col0_ref, pos_ref, w0_ref, w1_ref,
    g1_ref, b1_ref, wq_ref, wk_ref, wv_ref, wo_ref, bo_ref,
    g2_ref, b2_ref, wm1_ref, bm1_ref, wm2_ref, bm2_ref,
    wp_ref, bp_ref, wc_ref, bc_ref,
    o_ref,
    f0p_ref, tok_ref, pm_ref,
    *, num_blocks, num_heads, scale):
  f32 = jnp.float32
  bf16 = jnp.bfloat16

  # ---------- conv0 + ReLU + 2x2 max-pool ----------
  # col0_ref[0]: (4*N0, K0PAD) bf16 im2col, the 4 pooling-window phases stacked on rows.
  y0 = jnp.dot(col0_ref[0], w0_ref[...], preferred_element_type=f32)     # (4*N0, EMB)
  y0 = jnp.maximum(y0, 0.0)                                              # ReLU
  pooled0 = jnp.maximum(jnp.maximum(y0[0 * N0:1 * N0], y0[1 * N0:2 * N0]),
                        jnp.maximum(y0[2 * N0:3 * N0], y0[3 * N0:4 * N0]))  # (N0, EMB)

  # Scatter the 8x8 pooled map into a zero-padded flat (10x10) feature map in VMEM.
  f0p_ref[...] = jnp.zeros_like(f0p_ref)
  for h in range(H0):
    f0p_ref[pl.ds((h + 1) * W0P + 1, H0), :] = pooled0[h * H0:(h + 1) * H0, :]

  # ---------- conv1 + ReLU + 2x2 max-pool ----------
  # For each of the 9 taps, read the 4 pooling phases as stride-2 flat windows and do a
  # single (4*SLAB1, EMB) x (EMB, EMB) matmul; extra rows are finite garbage and discarded.
  acc = jnp.zeros((4 * SLAB1, EMB), f32)
  for kh in range(3):
    for kw in range(3):
      lhs = jnp.concatenate(
          [f0p_ref[pl.ds((a + kh) * W0P + (b + kw), SLAB1, stride=2), :]
           for a in range(2) for b in range(2)], axis=0)                 # (4*SLAB1, EMB)
      acc = acc + jnp.dot(lhs.astype(bf16), w1_ref[kh * 3 + kw],
                          preferred_element_type=f32)
  acc = jnp.maximum(acc, 0.0)                                            # ReLU
  pm = jnp.maximum(
      jnp.maximum(acc[0 * SLAB1:1 * SLAB1], acc[1 * SLAB1:2 * SLAB1]),
      jnp.maximum(acc[2 * SLAB1:3 * SLAB1], acc[3 * SLAB1:4 * SLAB1]))   # (SLAB1, EMB)
  # Valid tokens sit at rows W0P*h' + w' (w' < H1); compact them to (NPATCH, EMB).
  pm_ref[...] = pm
  for i in range(H1):
    tok_ref[pl.ds(H1 * i, H1), :] = pm_ref[pl.ds(W0P * i, H1), :]

  # ---------- positional embedding ----------
  x = tok_ref[...] + pos_ref[0]                                          # (NPATCH, EMB) f32

  def layer_norm(z, g, b):
    mu = jnp.mean(z, axis=-1, keepdims=True)
    zc = z - mu
    var = jnp.mean(zc * zc, axis=-1, keepdims=True)
    return zc * lax.rsqrt(var + LN_EPS) * g + b

  # ---------- pre-LN transformer blocks ----------
  for blk in range(num_blocks):
    # --- multi-headed self-attention ---
    xn = layer_norm(x, g1_ref[blk], b1_ref[blk]).astype(bf16)
    att = bo_ref[blk]                                                    # (1, EMB) proj bias
    for h in range(num_heads):
      q = jnp.dot(xn, wq_ref[blk, h], preferred_element_type=f32)        # (N, Dh)
      k = jnp.dot(xn, wk_ref[blk, h], preferred_element_type=f32)
      v = jnp.dot(xn, wv_ref[blk, h], preferred_element_type=f32)
      s = lax.dot_general(q.astype(bf16), k.astype(bf16),
                          (((1,), (1,)), ((), ())),
                          preferred_element_type=f32) * scale            # (N, N)
      s = s - jnp.max(s, axis=-1, keepdims=True)
      e = jnp.exp(s)
      a = e * pl.reciprocal(jnp.sum(e, axis=-1, keepdims=True), approx=True)
      o = jnp.dot(a.astype(bf16), v.astype(bf16), preferred_element_type=f32)
      # head outputs folded directly into the projection: sum_h o_h @ Wproj_h
      att = att + jnp.dot(o.astype(bf16), wo_ref[blk, h],
                          preferred_element_type=f32)                    # (N, EMB)
    x = x + att                                                          # residual 1

    # --- MLP ---
    xn2 = layer_norm(x, g2_ref[blk], b2_ref[blk]).astype(bf16)
    h1 = jnp.dot(xn2, wm1_ref[blk], preferred_element_type=f32) + bm1_ref[blk]
    # TODO(synk): nn.GELU() defaults to the exact erf-based GELU; using the tanh
    #             approximation since erf lowering is not guaranteed on Mosaic TPU.
    h1 = jax.nn.gelu(h1, approximate=True)
    y = jnp.dot(h1.astype(bf16), wm2_ref[blk], preferred_element_type=f32) + bm2_ref[blk]
    x = x + y                                                            # residual 2

  # ---------- sequence pooling (softmax over tokens) + classifier head ----------
  s = jnp.dot(x, wp_ref[...], preferred_element_type=f32) + bp_ref[...]  # (N, 1)
  s = s - jnp.max(s, axis=0, keepdims=True)
  e = jnp.exp(s)
  a = e * pl.reciprocal(jnp.sum(e, axis=0, keepdims=True), approx=True)  # (N, 1)
  pooled = jnp.sum(a * x, axis=0, keepdims=True)                         # (1, EMB) == a^T @ x
  out = jnp.dot(pooled, wc_ref[...], preferred_element_type=f32) + bc_ref[...]
  o_ref[0] = out.astype(o_ref.dtype)                                     # (1, NUM_CLASSES)


# ============================ wrapper-side preprocessing ============================
def _build_im2col_pooled(image):
  """Im2col for conv0 with the 2x2 max-pool fused as 4 stacked window phases.

  Returns (B, 4*N0, K0PAD) bf16: rows [p*N0:(p+1)*N0] hold the K0=27 patch values for the
  conv outputs at positions (2h'+a, 2w'+b), p = a*2+b, row within a phase = h'*H0 + w'.
  """
  B = image.shape[0]
  xp = jnp.pad(image, ((0, 0), (1, 1), (1, 1), (0, 0)))                  # (B, 18, 18, CIN)
  phases = []
  for a in range(2):
    for b in range(2):
      taps = [xp[:, a + kh:a + kh + IMG:2, b + kw:b + kw + IMG:2, :]
              for kh in range(3) for kw in range(3)]                      # 9 x (B, H0, H0, CIN)
      ph = jnp.concatenate(taps, axis=-1).reshape(B, N0, K0)
      phases.append(ph)
  col = jnp.concatenate(phases, axis=1)                                  # (B, 4*N0, K0)
  col = jnp.pad(col, ((0, 0), (0, 0), (0, K0PAD - K0)))
  return col.astype(jnp.bfloat16)


def _pack_params(params):
  """Stack per-block params along a leading axis and pre-split per-head weights (bf16 MXU)."""
  bf = jnp.bfloat16

  def stack(key):
    return jnp.stack([blk[key] for blk in params["blocks"]], axis=0)

  w0 = params["conv0"].reshape(K0, EMB)
  w0 = jnp.pad(w0, ((0, K0PAD - K0), (0, 0))).astype(bf)                 # (K0PAD, EMB)
  w1 = params["conv1"].reshape(9, EMB, EMB).astype(bf)                   # (9, EMB, EMB)

  wqkv = stack("wqkv")                                                   # (L, EMB, 3*EMB)

  def split_heads(w):                                                    # (L, EMB, EMB) -> (L, H, EMB, Dh)
    return w.reshape(NUM_BLOCKS, EMB, NUM_HEADS, HEAD_DIM).transpose(0, 2, 1, 3).astype(bf)

  wq = split_heads(wqkv[:, :, 0 * EMB:1 * EMB])
  wk = split_heads(wqkv[:, :, 1 * EMB:2 * EMB])
  wv = split_heads(wqkv[:, :, 2 * EMB:3 * EMB])
  wo = stack("wproj").reshape(NUM_BLOCKS, NUM_HEADS, HEAD_DIM, EMB).astype(bf)

  return dict(
      w0=w0, w1=w1, pos=params["pos"],
      g1=stack("g1"), b1=stack("b1"),
      wq=wq, wk=wk, wv=wv, wo=wo, bo=stack("bproj"),
      g2=stack("g2"), b2=stack("b2"),
      wm1=stack("w1").astype(bf), bm1=stack("bm1"),
      wm2=stack("w2").astype(bf), bm2=stack("bm2"),
      wp=params["pool_w"], bp=params["pool_b"],
      wc=params["cls_w"], bc=params["cls_b"])


def _const_spec(a):
  n = a.ndim
  return pl.BlockSpec(a.shape, lambda b, _n=n: (0,) * _n)


# ============================ full forward (single pallas_call) ============================
def cct_forward(image, params):
  # image: (B, H, W, 3) NHWC
  B = image.shape[0]
  p = _pack_params(params)
  col0 = _build_im2col_pooled(image)                                     # (B, 4*N0, K0PAD) bf16

  args = [col0, p["pos"], p["w0"], p["w1"],
          p["g1"], p["b1"], p["wq"], p["wk"], p["wv"], p["wo"], p["bo"],
          p["g2"], p["b2"], p["wm1"], p["bm1"], p["wm2"], p["bm2"],
          p["wp"], p["bp"], p["wc"], p["bc"]]

  in_specs = [pl.BlockSpec((1, 4 * N0, K0PAD), lambda b: (b, 0, 0))]
  in_specs += [_const_spec(a) for a in args[1:]]

  kernel = functools.partial(_cct_forward_kernel,
                             num_blocks=NUM_BLOCKS, num_heads=NUM_HEADS,
                             scale=HEAD_DIM ** (-0.5))

  out = pl.pallas_call(
      kernel,
      out_shape=jax.ShapeDtypeStruct((B, 1, NUM_CLASSES), jnp.float32),
      grid=(B,),
      in_specs=in_specs,
      out_specs=pl.BlockSpec((1, 1, NUM_CLASSES), lambda b: (b, 0, 0)),
      scratch_shapes=[
          pltpu.VMEM((FLAT0, EMB), jnp.float32),    # zero-padded flat 10x10 feature map
          pltpu.VMEM((NPATCH, EMB), jnp.float32),   # compacted tokens
          pltpu.VMEM((SLAB1, EMB), jnp.float32),    # pooled conv1 phase-max slab
      ],
      compiler_params=pltpu.CompilerParams(
          dimension_semantics=("parallel",),        # one image per TC on v7x; serial loop on v5e/v6e
          vmem_limit_bytes=32 * 1024 * 1024),
  )(*args)
  return out.reshape(B, NUM_CLASSES)


# ============================ deterministic parameter init ============================
def init_params(key):
  keys = iter(jax.random.split(key, 32))

  def nrm(shape, scale=0.05):
    return (scale * jax.random.normal(next(keys), shape)).astype(jnp.float32)

  params = {
      "conv0": nrm((3, 3, CIN, EMB)),
      "conv1": nrm((3, 3, EMB, EMB)),
      "pos": jax.random.normal(next(keys), (1, NPATCH, EMB)).astype(jnp.float32),
      "blocks": [],
      "pool_w": nrm((EMB, 1)),
      "pool_b": jnp.zeros((1, 1), jnp.float32),
      "cls_w": nrm((EMB, NUM_CLASSES)),
      "cls_b": jnp.zeros((1, NUM_CLASSES), jnp.float32),
  }
  for _ in range(NUM_BLOCKS):
    params["blocks"].append(dict(
        g1=jnp.ones((1, EMB), jnp.float32), b1=jnp.zeros((1, EMB), jnp.float32),
        wqkv=nrm((EMB, 3 * EMB)),
        wproj=nrm((EMB, EMB)), bproj=jnp.zeros((1, EMB), jnp.float32),
        g2=jnp.ones((1, EMB), jnp.float32), b2=jnp.zeros((1, EMB), jnp.float32),
        w1=nrm((EMB, MLP_DIM)), bm1=jnp.zeros((1, MLP_DIM), jnp.float32),
        w2=nrm((MLP_DIM, EMB)), bm2=jnp.zeros((1, EMB), jnp.float32),
    ))
  return params


if __name__ == "__main__":
  key = jax.random.PRNGKey(0)
  k_img, k_par = jax.random.split(key)
  image = jax.random.normal(k_img, (BATCH, IMG, IMG, CIN)).astype(jnp.float32)  # layout: NHWC
  params = init_params(k_par)

  out = jax.jit(cct_forward)(image, params)
  out = jax.block_until_ready(out)
  assert out.shape == (BATCH, NUM_CLASSES) and out.dtype == jnp.float32
  print("KERNEL_OK")
</pallas_src>

<mosaic_0001>
module attributes {stable_mosaic.version = 11 : i64} {
  func.func @_cct_forward_kernel(%arg0: i32, %arg1: memref<1x256x32xbf16, #tpu.memory_space<vmem>>, %arg2: memref<1x16x32xf32, #tpu.memory_space<vmem>>, %arg3: memref<32x32xbf16, #tpu.memory_space<vmem>>, %arg4: memref<9x32x32xbf16, #tpu.memory_space<vmem>>, %arg5: memref<2x1x32xf32, #tpu.memory_space<vmem>>, %arg6: memref<2x1x32xf32, #tpu.memory_space<vmem>>, %arg7: memref<2x2x32x16xbf16, #tpu.memory_space<vmem>>, %arg8: memref<2x2x32x16xbf16, #tpu.memory_space<vmem>>, %arg9: memref<2x2x32x16xbf16, #tpu.memory_space<vmem>>, %arg10: memref<2x2x16x32xbf16, #tpu.memory_space<vmem>>, %arg11: memref<2x1x32xf32, #tpu.memory_space<vmem>>, %arg12: memref<2x1x32xf32, #tpu.memory_space<vmem>>, %arg13: memref<2x1x32xf32, #tpu.memory_space<vmem>>, %arg14: memref<2x32x64xbf16, #tpu.memory_space<vmem>>, %arg15: memref<2x1x64xf32, #tpu.memory_space<vmem>>, %arg16: memref<2x64x32xbf16, #tpu.memory_space<vmem>>, %arg17: memref<2x1x32xf32, #tpu.memory_space<vmem>>, %arg18: memref<32x1xf32, #tpu.memory_space<vmem>>, %arg19: memref<1x1xf32, #tpu.memory_space<vmem>>, %arg20: memref<32x16xf32, #tpu.memory_space<vmem>>, %arg21: memref<1x16xf32, #tpu.memory_space<vmem>>, %arg22: memref<1x1x16xf32, #tpu.memory_space<vmem>>, %arg23: memref<120x32xf32, #tpu.memory_space<vmem>>, %arg24: memref<16x32xf32, #tpu.memory_space<vmem>>, %arg25: memref<40x32xf32, #tpu.memory_space<vmem>>) attributes {dimension_semantics = [#tpu.dimension_semantics<parallel>], iteration_bounds = array<i64: 2>, scalar_prefetch = 0 : i64, scratch_operands = 3 : i64, tpu.core_type = #tpu.core_type<tc>, window_params = [{transform_indices = @transform_0, window_bounds = array<i64: 1, 256, 32>}, {pipeline_mode = #tpu.pipeline_mode<synchronous>, transform_indices = @transform_1, window_bounds = array<i64: 1, 16, 32>}, {pipeline_mode = #tpu.pipeline_mode<synchronous>, transform_indices = @transform_2, window_bounds = array<i64: 32, 32>}, {pipeline_mode = #tpu.pipeline_mode<synchronous>, transform_indices = @transform_3, window_bounds = array<i64: 9, 32, 32>}, {pipeline_mode = #tpu.pipeline_mode<synchronous>, transform_indices = @transform_4, window_bounds = array<i64: 2, 1, 32>}, {pipeline_mode = #tpu.pipeline_mode<synchronous>, transform_indices = @transform_5, window_bounds = array<i64: 2, 1, 32>}, {pipeline_mode = #tpu.pipeline_mode<synchronous>, transform_indices = @transform_6, window_bounds = array<i64: 2, 2, 32, 16>}, {pipeline_mode = #tpu.pipeline_mode<synchronous>, transform_indices = @transform_7, window_bounds = array<i64: 2, 2, 32, 16>}, {pipeline_mode = #tpu.pipeline_mode<synchronous>, transform_indices = @transform_8, window_bounds = array<i64: 2, 2, 32, 16>}, {pipeline_mode = #tpu.pipeline_mode<synchronous>, transform_indices = @transform_9, window_bounds = array<i64: 2, 2, 16, 32>}, {pipeline_mode = #tpu.pipeline_mode<synchronous>, transform_indices = @transform_10, window_bounds = array<i64: 2, 1, 32>}, {pipeline_mode = #tpu.pipeline_mode<synchronous>, transform_indices = @transform_11, window_bounds = array<i64: 2, 1, 32>}, {pipeline_mode = #tpu.pipeline_mode<synchronous>, transform_indices = @transform_12, window_bounds = array<i64: 2, 1, 32>}, {pipeline_mode = #tpu.pipeline_mode<synchronous>, transform_indices = @transform_13, window_bounds = array<i64: 2, 32, 64>}, {pipeline_mode = #tpu.pipeline_mode<synchronous>, transform_indices = @transform_14, window_bounds = array<i64: 2, 1, 64>}, {pipeline_mode = #tpu.pipeline_mode<synchronous>, transform_indices = @transform_15, window_bounds = array<i64: 2, 64, 32>}, {pipeline_mode = #tpu.pipeline_mode<synchronous>, transform_indices = @transform_16, window_bounds = array<i64: 2, 1, 32>}, {pipeline_mode = #tpu.pipeline_mode<synchronous>, transform_indices = @transform_17, window_bounds = array<i64: 32, 1>}, {pipeline_mode = #tpu.pipeline_mode<synchronous>, transform_indices = @transform_18, window_bounds = array<i64: 1, 1>}, {pipeline_mode = #tpu.pipeline_mode<synchronous>, transform_indices = @transform_19, window_bounds = array<i64: 32, 16>}, {pipeline_mode = #tpu.pipeline_mode<synchronous>, transform_indices = @transform_20, window_bounds = array<i64: 1, 16>}, {transform_indices = @transform_21, window_bounds = array<i64: 1, 1, 16>}]} {
    %c0 = arith.constant 0 : index
    %c0_0 = arith.constant 0 : index
    %c0_1 = arith.constant 0 : index
    %0 = vector.load %arg1[%c0, %c0_0, %c0_1] : memref<1x256x32xbf16, #tpu.memory_space<vmem>>, vector<1x256x32xbf16>
    %1 = vector.shape_cast %0 : vector<1x256x32xbf16> to vector<256x32xbf16>
    %c0_2 = arith.constant 0 : index
    %c0_3 = arith.constant 0 : index
    %2 = vector.load %arg3[%c0_2, %c0_3] : memref<32x32xbf16, #tpu.memory_space<vmem>>, vector<32x32xbf16>
    %cst = arith.constant dense<0.000000e+00> : vector<256x32xf32>
    %3 = tpu.matmul %1, %2, %cst {dimension_numbers = #tpu.dot_dimension_numbers<[1], [0], [0], [1], [0, 0, 1, 1], [], []>} : vector<256x32xbf16>, vector<32x32xbf16>, vector<256x32xf32> -> vector<256x32xf32>
    %cst_4 = arith.constant 0.000000e+00 : f32
    %4 = vector.broadcast %cst_4 : f32 to vector<256x32xf32>
    %5 = arith.maximumf %3, %4 : vector<256x32xf32>
    %6 = vector.extract_strided_slice %5 {offsets = [0, 0], sizes = [64, 32], strides = [1, 1]} : vector<256x32xf32> to vector<64x32xf32>
    %7 = vector.extract_strided_slice %5 {offsets = [64, 0], sizes = [64, 32], strides = [1, 1]} : vector<256x32xf32> to vector<64x32xf32>
    %8 = arith.maximumf %6, %7 : vector<64x32xf32>
    %9 = vector.extract_strided_slice %5 {offsets = [128, 0], sizes = [64, 32], strides = [1, 1]} : vector<256x32xf32> to vector<64x32xf32>
    %10 = vector.extract_strided_slice %5 {offsets = [192, 0], sizes = [64, 32], strides = [1, 1]} : vector<256x32xf32> to vector<64x32xf32>
    %11 = arith.maximumf %9, %10 : vector<64x32xf32>
    %12 = arith.maximumf %8, %11 : vector<64x32xf32>
    %cst_5 = arith.constant 0.000000e+00 : f32
    %13 = vector.broadcast %cst_5 : f32 to vector<120x32xf32>
    %c0_6 = arith.constant 0 : index
    %c0_7 = arith.constant 0 : index
    %14 = vector.load %arg23[%c0_6, %c0_7] : memref<120x32xf32, #tpu.memory_space<vmem>>, vector<120x32xf32>
    tpu.vector_store %arg23[%c0_6, %c0_7], %13 {strides = array<i32>} : memref<120x32xf32, #tpu.memory_space<vmem>>, vector<120x32xf32>,
    %15 = vector.extract_strided_slice %12 {offsets = [0, 0], sizes = [8, 32], strides = [1, 1]} : vector<64x32xf32> to vector<8x32xf32>
    %c11 = arith.constant 11 : index
    %c0_8 = arith.constant 0 : index
    %16 = vector.load %arg23[%c11, %c0_8] : memref<120x32xf32, #tpu.memory_space<vmem>>, vector<8x32xf32>
    tpu.vector_store %arg23[%c11, %c0_8], %15 {strides = array<i32>} : memref<120x32xf32, #tpu.memory_space<vmem>>, vector<8x32xf32>,
    %17 = vector.extract_strided_slice %12 {offsets = [8, 0], sizes = [8, 32], strides = [1, 1]} : vector<64x32xf32> to vector<8x32xf32>
    %c21 = arith.constant 21 : index
    %c0_9 = arith.constant 0 : index
    %18 = vector.load %arg23[%c21, %c0_9] : memref<120x32xf32, #tpu.memory_space<vmem>>, vector<8x32xf32>
    tpu.vector_store %arg23[%c21, %c0_9], %17 {strides = array<i32>} : memref<120x32xf32, #tpu.memory_space<vmem>>, vector<8x32xf32>,
    %19 = vector.extract_strided_slice %12 {offsets = [16, 0], sizes = [8, 32], strides = [1, 1]} : vector<64x32xf32> to vector<8x32xf32>
    %c31 = arith.constant 31 : index
    %c0_10 = arith.constant 0 : index
    %20 = vector.load %arg23[%c31, %c0_10] : memref<120x32xf32, #tpu.memory_space<vmem>>, vector<8x32xf32>
    tpu.vector_store %arg23[%c31, %c0_10], %19 {strides = array<i32>} : memref<120x32xf32, #tpu.memory_space<vmem>>, vector<8x32xf32>,
    %21 = vector.extract_strided_slice %12 {offsets = [24, 0], sizes = [8, 32], strides = [1, 1]} : vector<64x32xf32> to vector<8x32xf32>
    %c41 = arith.constant 41 : index
    %c0_11 = arith.constant 0 : index
    %22 = vector.load %arg23[%c41, %c0_11] : memref<120x32xf32, #tpu.memory_space<vmem>>, vector<8x32xf32>
    tpu.vector_store %arg23[%c41, %c0_11], %21 {strides = array<i32>} : memref<120x32xf32, #tpu.memory_space<vmem>>, vector<8x32xf32>,
    %23 = vector.extract_strided_slice %12 {offsets = [32, 0], sizes = [8, 32], strides = [1, 1]} : vector<64x32xf32> to vector<8x32xf32>
    %c51 = arith.constant 51 : index
    %c0_12 = arith.constant 0 : index
    %24 = vector.load %arg23[%c51, %c0_12] : memref<120x32xf32, #tpu.memory_space<vmem>>, vector<8x32xf32>
    tpu.vector_store %arg23[%c51, %c0_12], %23 {strides = array<i32>} : memref<120x32xf32, #tpu.memory_space<vmem>>, vector<8x32xf32>,
    %25 = vector.extract_strided_slice %12 {offsets = [40, 0], sizes = [8, 32], strides = [1, 1]} : vector<64x32xf32> to vector<8x32xf32>
    %c61 = arith.constant 61 : index
    %c0_13 = arith.constant 0 : index
    %26 = vector.load %arg23[%c61, %c0_13] : memref<120x32xf32, #tpu.memory_space<vmem>>, vector<8x32xf32>
    tpu.vector_store %arg23[%c61, %c0_13], %25 {strides = array<i32>} : memref<120x32xf32, #tpu.memory_space<vmem>>, vector<8x32xf32>,
    %27 = vector.extract_strided_slice %12 {offsets = [48, 0], sizes = [8, 32], strides = [1, 1]} : vector<64x32xf32> to vector<8x32xf32>
    %c71 = arith.constant 71 : index
    %c0_14 = arith.constant 0 : index
    %28 = vector.load %arg23[%c71, %c0_14] : memref<120x32xf32, #tpu.memory_space<vmem>>, vector<8x32xf32>
    tpu.vector_store %arg23[%c71, %c0_14], %27 {strides = array<i32>} : memref<120x32xf32, #tpu.memory_space<vmem>>, vector<8x32xf32>,
    %29 = vector.extract_strided_slice %12 {offsets = [56, 0], sizes = [8, 32], strides = [1, 1]} : vector<64x32xf32> to vector<8x32xf32>
    %c81 = arith.constant 81 : index
    %c0_15 = arith.constant 0 : index
    %30 = vector.load %arg23[%c81, %c0_15] : memref<120x32xf32, #tpu.memory_space<vmem>>, vector<8x32xf32>
    tpu.vector_store %arg23[%c81, %c0_15], %29 {strides = array<i32>} : memref<120x32xf32, #tpu.memory_space<vmem>>, vector<8x32xf32>,
    %cst_16 = arith.constant 0.000000e+00 : f32
    %31 = vector.broadcast %cst_16 : f32 to vector<160x32xf32>
    %c0_17 = arith.constant 0 : index
    %c0_18 = arith.constant 0 : index
    %32 = tpu.strided_load %arg23[%c0_17, %c0_18] {strides = array<i32: 2, 1>} : memref<120x32xf32, #tpu.memory_space<vmem>>, vector<40x32xf32>
    %c1 = arith.constant 1 : index
    %c0_19 = arith.constant 0 : index
    %33 = tpu.strided_load %arg23[%c1, %c0_19] {strides = array<i32: 2, 1>} : memref<120x32xf32, #tpu.memory_space<vmem>>, vector<40x32xf32>
    %c10 = arith.constant 10 : index
    %c0_20 = arith.constant 0 : index
    %34 = tpu.strided_load %arg23[%c10, %c0_20] {strides = array<i32: 2, 1>} : memref<120x32xf32, #tpu.memory_space<vmem>>, vector<40x32xf32>
    %c11_21 = arith.constant 11 : index
    %c0_22 = arith.constant 0 : index
    %35 = tpu.strided_load %arg23[%c11_21, %c0_22] {strides = array<i32: 2, 1>} : memref<120x32xf32, #tpu.memory_space<vmem>>, vector<40x32xf32>
    %36 = tpu.concatenate %32, %33, %34, %35 in 0 : vector<40x32xf32>, vector<40x32xf32>, vector<40x32xf32>, vector<40x32xf32> -> vector<160x32xf32>
    %37 = arith.truncf %36 : vector<160x32xf32> to vector<160x32xbf16>
    %c0_23 = arith.constant 0 : index
    %c0_24 = arith.constant 0 : index
    %c0_25 = arith.constant 0 : index
    %38 = vector.load %arg4[%c0_23, %c0_24, %c0_25] : memref<9x32x32xbf16, #tpu.memory_space<vmem>>, vector<1x32x32xbf16>
    %39 = vector.shape_cast %38 : vector<1x32x32xbf16> to vector<32x32xbf16>
    %cst_26 = arith.constant dense<0.000000e+00> : vector<160x32xf32>
    %40 = tpu.matmul %37, %39, %cst_26 {dimension_numbers = #tpu.dot_dimension_numbers<[1], [0], [0], [1], [0, 0, 1, 1], [], []>} : vector<160x32xbf16>, vector<32x32xbf16>, vector<160x32xf32> -> vector<160x32xf32>
    %41 = arith.addf %31, %40 : vector<160x32xf32>
    %c1_27 = arith.constant 1 : index
    %c0_28 = arith.constant 0 : index
    %42 = tpu.strided_load %arg23[%c1_27, %c0_28] {strides = array<i32: 2, 1>} : memref<120x32xf32, #tpu.memory_space<vmem>>, vector<40x32xf32>
    %c2 = arith.constant 2 : index
    %c0_29 = arith.constant 0 : index
    %43 = tpu.strided_load %arg23[%c2, %c0_29] {strides = array<i32: 2, 1>} : memref<120x32xf32, #tpu.memory_space<vmem>>, vector<40x32xf32>
    %c11_30 = arith.constant 11 : index
    %c0_31 = arith.constant 0 : index
    %44 = tpu.strided_load %arg23[%c11_30, %c0_31] {strides = array<i32: 2, 1>} : memref<120x32xf32, #tpu.memory_space<vmem>>, vector<40x32xf32>
    %c12 = arith.constant 12 : index
    %c0_32 = arith.constant 0 : index
    %45 = tpu.strided_load %arg23[%c12, %c0_32] {strides = array<i32: 2, 1>} : memref<120x32xf32, #tpu.memory_space<vmem>>, vector<40x32xf32>
    %46 = tpu.concatenate %42, %43, %44, %45 in 0 : vector<40x32xf32>, vector<40x32xf32>, vector<40x32xf32>, vector<40x32xf32> -> vector<160x32xf32>
    %47 = arith.truncf %46 : vector<160x32xf32> to vector<160x32xbf16>
    %c1_33 = arith.constant 1 : index
    %c0_34 = arith.constant 0 : index
    %c0_35 = arith.constant 0 : index
    %48 = vector.load %arg4[%c1_33, %c0_34, %c0_35] : memref<9x32x32xbf16, #tpu.memory_space<vmem>>, vector<1x32x32xbf16>
    %49 = vector.shape_cast %48 : vector<1x32x32xbf16> to vector<32x32xbf16>
    %cst_36 = arith.constant dense<0.000000e+00> : vector<160x32xf32>
    %50 = tpu.matmul %47, %49, %cst_36 {dimension_numbers = #tpu.dot_dimension_numbers<[1], [0], [0], [1], [0, 0, 1, 1], [], []>} : vector<160x32xbf16>, vector<32x32xbf16>, vector<160x32xf32> -> vector<160x32xf32>
    %51 = arith.addf %41, %50 : vector<160x32xf32>
    %c2_37 = arith.constant 2 : index
    %c0_38 = arith.constant 0 : index
    %52 = tpu.strided_load %arg23[%c2_37, %c0_38] {strides = array<i32: 2, 1>} : memref<120x32xf32, #tpu.memory_space<vmem>>, vector<40x32xf32>
    %c3 = arith.constant 3 : index
    %c0_39 = arith.constant 0 : index
    %53 = tpu.strided_load %arg23[%c3, %c0_39] {strides = array<i32: 2, 1>} : memref<120x32xf32, #tpu.memory_space<vmem>>, vector<40x32xf32>
    %c12_40 = arith.constant 12 : index
    %c0_41 = arith.constant 0 : index
    %54 = tpu.strided_load %arg23[%c12_40, %c0_41] {strides = array<i32: 2, 1>} : memref<120x32xf32, #tpu.memory_space<vmem>>, vector<40x32xf32>
    %c13 = arith.constant 13 : index
    %c0_42 = arith.constant 0 : index
    %55 = tpu.strided_load %arg23[%c13, %c0_42] {strides = array<i32: 2, 1>} : memref<120x32xf32, #tpu.memory_space<vmem>>, vector<40x32xf32>
    %56 = tpu.concatenate %52, %53, %54, %55 in 0 : vector<40x32xf32>, vector<40x32xf32>, vector<40x32xf32>, vector<40x32xf32> -> vector<160x32xf32>
    %57 = arith.truncf %56 : vector<160x32xf32> to vector<160x32xbf16>
    %c2_43 = arith.constant 2 : index
    %c0_44 = arith.constant 0 : index
    %c0_45 = arith.constant 0 : index
    %58 = vector.load %arg4[%c2_43, %c0_44, %c0_45] : memref<9x32x32xbf16, #tpu.memory_space<vmem>>, vector<1x32x32xbf16>
    %59 = vector.shape_cast %58 : vector<1x32x32xbf16> to vector<32x32xbf16>
    %cst_46 = arith.constant dense<0.000000e+00> : vector<160x32xf32>
    %60 = tpu.matmul %57, %59, %cst_46 {dimension_numbers = #tpu.dot_dimension_numbers<[1], [0], [0], [1], [0, 0, 1, 1], [], []>} : vector<160x32xbf16>, vector<32x32xbf16>, vector<160x32xf32> -> vector<160x32xf32>
    %61 = arith.addf %51, %60 : vector<160x32xf32>
    %c10_47 = arith.constant 10 : index
    %c0_48 = arith.constant 0 : index
    %62 = tpu.strided_load %arg23[%c10_47, %c0_48] {strides = array<i32: 2, 1>} : memref<120x32xf32, #tpu.memory_space<vmem>>, vector<40x32xf32>
    %c11_49 = arith.constant 11 : index
    %c0_50 = arith.constant 0 : index
    %63 = tpu.strided_load %arg23[%c11_49, %c0_50] {strides = array<i32: 2, 1>} : memref<120x32xf32, #tpu.memory_space<vmem>>, vector<40x32xf32>
    %c20 = arith.constant 20 : index
    %c0_51 = arith.constant 0 : index
    %64 = tpu.strided_load %arg23[%c20, %c0_51] {strides = array<i32: 2, 1>} : memref<120x32xf32, #tpu.memory_space<vmem>>, vector<40x32xf32>
    %c21_52 = arith.constant 21 : index
    %c0_53 = arith.constant 0 : index
    %65 = tpu.strided_load %arg23[%c21_52, %c0_53] {strides = array<i32: 2, 1>} : memref<120x32xf32, #tpu.memory_space<vmem>>, vector<40x32xf32>
    %66 = tpu.concatenate %62, %63, %64, %65 in 0 : vector<40x32xf32>, vector<40x32xf32>, vector<40x32xf32>, vector<40x32xf32> -> vector<160x32xf32>
    %67 = arith.truncf %66 : vector<160x32xf32> to vector<160x32xbf16>
    %c3_54 = arith.constant 3 : index
    %c0_55 = arith.constant 0 : index
    %c0_56 = arith.constant 0 : index
    %68 = vector.load %arg4[%c3_54, %c0_55, %c0_56] : memref<9x32x32xbf16, #tpu.memory_space<vmem>>, vector<1x32x32xbf16>
    %69 = vector.shape_cast %68 : vector<1x32x32xbf16> to vector<32x32xbf16>
    %cst_57 = arith.constant dense<0.000000e+00> : vector<160x32xf32>
    %70 = tpu.matmul %67, %69, %cst_57 {dimension_numbers = #tpu.dot_dimension_numbers<[1], [0], [0], [1], [0, 0, 1, 1], [], []>} : vector<160x32xbf16>, vector<32x32xbf16>, vector<160x32xf32> -> vector<160x32xf32>
    %71 = arith.addf %61, %70 : vector<160x32xf32>
    %c11_58 = arith.constant 11 : index
    %c0_59 = arith.constant 0 : index
    %72 = tpu.strided_load %arg23[%c11_58, %c0_59] {strides = array<i32: 2, 1>} : memref<120x32xf32, #tpu.memory_space<vmem>>, vector<40x32xf32>
    %c12_60 = arith.constant 12 : index
    %c0_61 = arith.constant 0 : index
    %73 = tpu.strided_load %arg23[%c12_60, %c0_61] {strides = array<i32: 2, 1>} : memref<120x32xf32, #tpu.memory_space<vmem>>, vector<40x32xf32>
    %c21_62 = arith.constant 21 : index
    %c0_63 = arith.constant 0 : index
    %74 = tpu.strided_load %arg23[%c21_62, %c0_63] {strides = array<i32: 2, 1>} : memref<120x32xf32, #tpu.memory_space<vmem>>, vector<40x32xf32>
    %c22 = arith.constant 22 : index
    %c0_64 = arith.constant 0 : index
    %75 = tpu.strided_load %arg23[%c22, %c0_64] {strides = array<i32: 2, 1>} : memref<120x32xf32, #tpu.memory_space<vmem>>, vector<40x32xf32>
    %76 = tpu.concatenate %72, %73, %74, %75 in 0 : vector<40x32xf32>, vector<40x32xf32>, vector<40x32xf32>, vector<40x32xf32> -> vector<160x32xf32>
    %77 = arith.truncf %76 : vector<160x32xf32> to vector<160x32xbf16>
    %c4 = arith.constant 4 : index
    %c0_65 = arith.constant 0 : index
    %c0_66 = arith.constant 0 : index
    %78 = vector.load %arg4[%c4, %c0_65, %c0_66] : memref<9x32x32xbf16, #tpu.memory_space<vmem>>, vector<1x32x32xbf16>
    %79 = vector.shape_cast %78 : vector<1x32x32xbf16> to vector<32x32xbf16>
    %cst_67 = arith.constant dense<0.000000e+00> : vector<160x32xf32>
    %80 = tpu.matmul %77, %79, %cst_67 {dimension_numbers = #tpu.dot_dimension_numbers<[1], [0], [0], [1], [0, 0, 1, 1], [], []>} : vector<160x32xbf16>, vector<32x32xbf16>, vector<160x32xf32> -> vector<160x32xf32>
    %81 = arith.addf %71, %80 : vector<160x32xf32>
    %c12_68 = arith.constant 12 : index
    %c0_69 = arith.constant 0 : index
    %82 = tpu.strided_load %arg23[%c12_68, %c0_69] {strides = array<i32: 2, 1>} : memref<120x32xf32, #tpu.memory_space<vmem>>, vector<40x32xf32>
    %c13_70 = arith.constant 13 : index
    %c0_71 = arith.constant 0 : index
    %83 = tpu.strided_load %arg23[%c13_70, %c0_71] {strides = array<i32: 2, 1>} : memref<120x32xf32, #tpu.memory_space<vmem>>, vector<40x32xf32>
    %c22_72 = arith.constant 22 : index
    %c0_73 = arith.constant 0 : index
    %84 = tpu.strided_load %arg23[%c22_72, %c0_73] {strides = array<i32: 2, 1>} : memref<120x32xf32, #tpu.memory_space<vmem>>, vector<40x32xf32>
    %c23 = arith.constant 23 : index
    %c0_74 = arith.constant 0 : index
    %85 = tpu.strided_load %arg23[%c23, %c0_74] {strides = array<i32: 2, 1>} : memref<120x32xf32, #tpu.memory_space<vmem>>, vector<40x32xf32>
    %86 = tpu.concatenate %82, %83, %84, %85 in 0 : vector<40x32xf32>, vector<40x32xf32>, vector<40x32xf32>, vector<40x32xf32> -> vector<160x32xf32>
    %87 = arith.truncf %86 : vector<160x32xf32> to vector<160x32xbf16>
    %c5 = arith.constant 5 : index
    %c0_75 = arith.constant 0 : index
    %c0_76 = arith.constant 0 : index
    %88 = vector.load %arg4[%c5, %c0_75, %c0_76] : memref<9x32x32xbf16, #tpu.memory_space<vmem>>, vector<1x32x32xbf16>
    %89 = vector.shape_cast %88 : vector<1x32x32xbf16> to vector<32x32xbf16>
    %cst_77 = arith.constant dense<0.000000e+00> : vector<160x32xf32>
    %90 = tpu.matmul %87, %89, %cst_77 {dimension_numbers = #tpu.dot_dimension_numbers<[1], [0], [0], [1], [0, 0, 1, 1], [], []>} : vector<160x32xbf16>, vector<32x32xbf16>, vector<160x32xf32> -> vector<160x32xf32>
    %91 = arith.addf %81, %90 : vector<160x32xf32>
    %c20_78 = arith.constant 20 : index
    %c0_79 = arith.constant 0 : index
    %92 = tpu.strided_load %arg23[%c20_78, %c0_79] {strides = array<i32: 2, 1>} : memref<120x32xf32, #tpu.memory_space<vmem>>, vector<40x32xf32>
    %c21_80 = arith.constant 21 : index
    %c0_81 = arith.constant 0 : index
    %93 = tpu.strided_load %arg23[%c21_80, %c0_81] {strides = array<i32: 2, 1>} : memref<120x32xf32, #tpu.memory_space<vmem>>, vector<40x32xf32>
    %c30 = arith.constant 30 : index
    %c0_82 = arith.constant 0 : index
    %94 = tpu.strided_load %arg23[%c30, %c0_82] {strides = array<i32: 2, 1>} : memref<120x32xf32, #tpu.memory_space<vmem>>, vector<40x32xf32>
    %c31_83 = arith.constant 31 : index
    %c0_84 = arith.constant 0 : index
    %95 = tpu.strided_load %arg23[%c31_83, %c0_84] {strides = array<i32: 2, 1>} : memref<120x32xf32, #tpu.memory_space<vmem>>, vector<40x32xf32>
    %96 = tpu.concatenate %92, %93, %94, %95 in 0 : vector<40x32xf32>, vector<40x32xf32>, vector<40x32xf32>, vector<40x32xf32> -> vector<160x32xf32>
    %97 = arith.truncf %96 : vector<160x32xf32> to vector<160x32xbf16>
    %c6 = arith.constant 6 : index
    %c0_85 = arith.constant 0 : index
    %c0_86 = arith.constant 0 : index
    %98 = vector.load %arg4[%c6, %c0_85, %c0_86] : memref<9x32x32xbf16, #tpu.memory_space<vmem>>, vector<1x32x32xbf16>
    %99 = vector.shape_cast %98 : vector<1x32x32xbf16> to vector<32x32xbf16>
    %cst_87 = arith.constant dense<0.000000e+00> : vector<160x32xf32>
    %100 = tpu.matmul %97, %99, %cst_87 {dimension_numbers = #tpu.dot_dimension_numbers<[1], [0], [0], [1], [0, 0, 1, 1], [], []>} : vector<160x32xbf16>, vector<32x32xbf16>, vector<160x32xf32> -> vector<160x32xf32>
    %101 = arith.addf %91, %100 : vector<160x32xf32>
    %c21_88 = arith.constant 21 : index
    %c0_89 = arith.constant 0 : index
    %102 = tpu.strided_load %arg23[%c21_88, %c0_89] {strides = array<i32: 2, 1>} : memref<120x32xf32, #tpu.memory_space<vmem>>, vector<40x32xf32>
    %c22_90 = arith.constant 22 : index
    %c0_91 = arith.constant 0 : index
    %103 = tpu.strided_load %arg23[%c22_90, %c0_91] {strides = array<i32: 2, 1>} : memref<120x32xf32, #tpu.memory_space<vmem>>, vector<40x32xf32>
    %c31_92 = arith.constant 31 : index
    %c0_93 = arith.constant 0 : index
    %104 = tpu.strided_load %arg23[%c31_92, %c0_93] {strides = array<i32: 2, 1>} : memref<120x32xf32, #tpu.memory_space<vmem>>, vector<40x32xf32>
    %c32 = arith.constant 32 : index
    %c0_94 = arith.constant 0 : index
    %105 = tpu.strided_load %arg23[%c32, %c0_94] {strides = array<i32: 2, 1>} : memref<120x32xf32, #tpu.memory_space<vmem>>, vector<40x32xf32>
    %106 = tpu.concatenate %102, %103, %104, %105 in 0 : vector<40x32xf32>, vector<40x32xf32>, vector<40x32xf32>, vector<40x32xf32> -> vector<160x32xf32>
    %107 = arith.truncf %106 : vector<160x32xf32> to vector<160x32xbf16>
    %c7 = arith.constant 7 : index
    %c0_95 = arith.constant 0 : index
    %c0_96 = arith.constant 0 : index
    %108 = vector.load %arg4[%c7, %c0_95, %c0_96] : memref<9x32x32xbf16, #tpu.memory_space<vmem>>, vector<1x32x32xbf16>
    %109 = vector.shape_cast %108 : vector<1x32x32xbf16> to vector<32x32xbf16>
    %cst_97 = arith.constant dense<0.000000e+00> : vector<160x32xf32>
    %110 = tpu.matmul %107, %109, %cst_97 {dimension_numbers = #tpu.dot_dimension_numbers<[1], [0], [0], [1], [0, 0, 1, 1], [], []>} : vector<160x32xbf16>, vector<32x32xbf16>, vector<160x32xf32> -> vector<160x32xf32>
    %111 = arith.addf %101, %110 : vector<160x32xf32>
    %c22_98 = arith.constant 22 : index
    %c0_99 = arith.constant 0 : index
    %112 = tpu.strided_load %arg23[%c22_98, %c0_99] {strides = array<i32: 2, 1>} : memref<120x32xf32, #tpu.memory_space<vmem>>, vector<40x32xf32>
    %c23_100 = arith.constant 23 : index
    %c0_101 = arith.constant 0 : index
    %113 = tpu.strided_load %arg23[%c23_100, %c0_101] {strides = array<i32: 2, 1>} : memref<120x32xf32, #tpu.memory_space<vmem>>, vector<40x32xf32>
    %c32_102 = arith.constant 32 : index
    %c0_103 = arith.constant 0 : index
    %114 = tpu.strided_load %arg23[%c32_102, %c0_103] {strides = array<i32: 2, 1>} : memref<120x32xf32, #tpu.memory_space<vmem>>, vector<40x32xf32>
    %c33 = arith.constant 33 : index
    %c0_104 = arith.constant 0 : index
    %115 = tpu.strided_load %arg23[%c33, %c0_104] {strides = array<i32: 2, 1>} : memref<120x32xf32, #tpu.memory_space<vmem>>, vector<40x32xf32>
    %116 = tpu.concatenate %112, %113, %114, %115 in 0 : vector<40x32xf32>, vector<40x32xf32>, vector<40x32xf32>, vector<40x32xf32> -> vector<160x32xf32>
    %117 = arith.truncf %116 : vector<160x32xf32> to vector<160x32xbf16>
    %c8 = arith.constant 8 : index
    %c0_105 = arith.constant 0 : index
    %c0_106 = arith.constant 0 : index
    %118 = vector.load %arg4[%c8, %c0_105, %c0_106] : memref<9x32x32xbf16, #tpu.memory_space<vmem>>, vector<1x32x32xbf16>
    %119 = vector.shape_cast %118 : vector<1x32x32xbf16> to vector<32x32xbf16>
    %cst_107 = arith.constant dense<0.000000e+00> : vector<160x32xf32>
    %120 = tpu.matmul %117, %119, %cst_107 {dimension_numbers = #tpu.dot_dimension_numbers<[1], [0], [0], [1], [0, 0, 1, 1], [], []>} : vector<160x32xbf16>, vector<32x32xbf16>, vector<160x32xf32> -> vector<160x32xf32>
    %121 = arith.addf %111, %120 : vector<160x32xf32>
    %cst_108 = arith.constant 0.000000e+00 : f32
    %122 = vector.broadcast %cst_108 : f32 to vector<160x32xf32>
    %123 = arith.maximumf %121, %122 : vector<160x32xf32>
    %124 = vector.extract_strided_slice %123 {offsets = [0, 0], sizes = [40, 32], strides = [1, 1]} : vector<160x32xf32> to vector<40x32xf32>
    %125 = vector.extract_strided_slice %123 {offsets = [40, 0], sizes = [40, 32], strides = [1, 1]} : vector<160x32xf32> to vector<40x32xf32>
    %126 = arith.maximumf %124, %125 : vector<40x32xf32>
    %127 = vector.extract_strided_slice %123 {offsets = [80, 0], sizes = [40, 32], strides = [1, 1]} : vector<160x32xf32> to vector<40x32xf32>
    %128 = vector.extract_strided_slice %123 {offsets = [120, 0], sizes = [40, 32], strides = [1, 1]} : vector<160x32xf32> to vector<40x32xf32>
    %129 = arith.maximumf %127, %128 : vector<40x32xf32>
    %130 = arith.maximumf %126, %129 : vector<40x32xf32>
    %c0_109 = arith.constant 0 : index
    %c0_110 = arith.constant 0 : index
    %131 = vector.load %arg25[%c0_109, %c0_110] : memref<40x32xf32, #tpu.memory_space<vmem>>, vector<40x32xf32>
    tpu.vector_store %arg25[%c0_109, %c0_110], %130 {strides = array<i32>} : memref<40x32xf32, #tpu.memory_space<vmem>>, vector<40x32xf32>,
    %c0_111 = arith.constant 0 : index
    %c0_112 = arith.constant 0 : index
    %132 = vector.load %arg25[%c0_111, %c0_112] : memref<40x32xf32, #tpu.memory_space<vmem>>, vector<4x32xf32>
    %c0_113 = arith.constant 0 : index
    %c0_114 = arith.constant 0 : index
    %133 = vector.load %arg24[%c0_113, %c0_114] : memref<16x32xf32, #tpu.memory_space<vmem>>, vector<4x32xf32>
    tpu.vector_store %arg24[%c0_113, %c0_114], %132 {strides = array<i32>} : memref<16x32xf32, #tpu.memory_space<vmem>>, vector<4x32xf32>,
    %c10_115 = arith.constant 10 : index
    %c0_116 = arith.constant 0 : index
    %134 = vector.load %arg25[%c10_115, %c0_116] : memref<40x32xf32, #tpu.memory_space<vmem>>, vector<4x32xf32>
    %c4_117 = arith.constant 4 : index
    %c0_118 = arith.constant 0 : index
    %135 = vector.load %arg24[%c4_117, %c0_118] : memref<16x32xf32, #tpu.memory_space<vmem>>, vector<4x32xf32>
    tpu.vector_store %arg24[%c4_117, %c0_118], %134 {strides = array<i32>} : memref<16x32xf32, #tpu.memory_space<vmem>>, vector<4x32xf32>,
    %c20_119 = arith.constant 20 : index
    %c0_120 = arith.constant 0 : index
    %136 = vector.load %arg25[%c20_119, %c0_120] : memref<40x32xf32, #tpu.memory_space<vmem>>, vector<4x32xf32>
    %c8_121 = arith.constant 8 : index
    %c0_122 = arith.constant 0 : index
    %137 = vector.load %arg24[%c8_121, %c0_122] : memref<16x32xf32, #tpu.memory_space<vmem>>, vector<4x32xf32>
    tpu.vector_store %arg24[%c8_121, %c0_122], %136 {strides = array<i32>} : memref<16x32xf32, #tpu.memory_space<vmem>>, vector<4x32xf32>,
    %c30_123 = arith.constant 30 : index
    %c0_124 = arith.constant 0 : index
    %138 = vector.load %arg25[%c30_123, %c0_124] : memref<40x32xf32, #tpu.memory_space<vmem>>, vector<4x32xf32>
    %c12_125 = arith.constant 12 : index
    %c0_126 = arith.constant 0 : index
    %139 = vector.load %arg24[%c12_125, %c0_126] : memref<16x32xf32, #tpu.memory_space<vmem>>, vector<4x32xf32>
    tpu.vector_store %arg24[%c12_125, %c0_126], %138 {strides = array<i32>} : memref<16x32xf32, #tpu.memory_space<vmem>>, vector<4x32xf32>,
    %c0_127 = arith.constant 0 : index
    %c0_128 = arith.constant 0 : index
    %140 = vector.load %arg24[%c0_127, %c0_128] : memref<16x32xf32, #tpu.memory_space<vmem>>, vector<16x32xf32>
    %c0_129 = arith.constant 0 : index
    %c0_130 = arith.constant 0 : index
    %c0_131 = arith.constant 0 : index
    %141 = vector.load %arg2[%c0_129, %c0_130, %c0_131] : memref<1x16x32xf32, #tpu.memory_space<vmem>>, vector<1x16x32xf32>
    %142 = vector.shape_cast %141 : vector<1x16x32xf32> to vector<16x32xf32>
    %143 = arith.addf %140, %142 : vector<16x32xf32>
    %c0_132 = arith.constant 0 : index
    %c0_133 = arith.constant 0 : index
    %c0_134 = arith.constant 0 : index
    %144 = vector.load %arg5[%c0_132, %c0_133, %c0_134] : memref<2x1x32xf32, #tpu.memory_space<vmem>>, vector<1x1x32xf32>
    %145 = vector.shape_cast %144 : vector<1x1x32xf32> to vector<1x32xf32>
    %c0_135 = arith.constant 0 : index
    %c0_136 = arith.constant 0 : index
    %c0_137 = arith.constant 0 : index
    %146 = vector.load %arg6[%c0_135, %c0_136, %c0_137] : memref<2x1x32xf32, #tpu.memory_space<vmem>>, vector<1x1x32xf32>
    %147 = vector.shape_cast %146 : vector<1x1x32xf32> to vector<1x32xf32>
    %cst_138 = arith.constant dense<0.000000e+00> : vector<16xf32>
    %148 = vector.multi_reduction <add>, %143, %cst_138 [1] : vector<16x32xf32> to vector<16xf32>
    %149 = vector.shape_cast %148 : vector<16xf32> to vector<16x1xf32>
    %cst_139 = arith.constant 3.200000e+01 : f32
    %150 = vector.broadcast %cst_139 : f32 to vector<16x1xf32>
    %151 = arith.divf %149, %150 : vector<16x1xf32>
    %152 = vector.broadcast %151 : vector<16x1xf32> to vector<16x32xf32>
    %153 = arith.subf %143, %152 : vector<16x32xf32>
    %154 = arith.mulf %153, %153 : vector<16x32xf32>
    %cst_140 = arith.constant dense<0.000000e+00> : vector<16xf32>
    %155 = vector.multi_reduction <add>, %154, %cst_140 [1] : vector<16x32xf32> to vector<16xf32>
    %156 = vector.shape_cast %155 : vector<16xf32> to vector<16x1xf32>
    %cst_141 = arith.constant 3.200000e+01 : f32
    %157 = vector.broadcast %cst_141 : f32 to vector<16x1xf32>
    %158 = arith.divf %156, %157 : vector<16x1xf32>
    %cst_142 = arith.constant 9.99999974E-6 : f32
    %159 = vector.broadcast %cst_142 : f32 to vector<16x1xf32>
    %160 = arith.addf %158, %159 : vector<16x1xf32>
    %161 = math.rsqrt %160 : vector<16x1xf32>
    %162 = vector.broadcast %161 : vector<16x1xf32> to vector<16x32xf32>
    %163 = arith.mulf %153, %162 : vector<16x32xf32>
    %164 = vector.broadcast %145 : vector<1x32xf32> to vector<16x32xf32>
    %165 = arith.mulf %163, %164 : vector<16x32xf32>
    %166 = vector.broadcast %147 : vector<1x32xf32> to vector<16x32xf32>
    %167 = arith.addf %165, %166 : vector<16x32xf32>
    %168 = arith.truncf %167 : vector<16x32xf32> to vector<16x32xbf16>
    %c0_143 = arith.constant 0 : index
    %c0_144 = arith.constant 0 : index
    %c0_145 = arith.constant 0 : index
    %169 = vector.load %arg11[%c0_143, %c0_144, %c0_145] : memref<2x1x32xf32, #tpu.memory_space<vmem>>, vector<1x1x32xf32>
    %170 = vector.shape_cast %169 : vector<1x1x32xf32> to vector<1x32xf32>
    %c0_146 = arith.constant 0 : index
    %c0_147 = arith.constant 0 : index
    %c0_148 = arith.constant 0 : index
    %c0_149 = arith.constant 0 : index
    %171 = vector.load %arg7[%c0_146, %c0_147, %c0_148, %c0_149] : memref<2x2x32x16xbf16, #tpu.memory_space<vmem>>, vector<1x1x32x16xbf16>
    %172 = vector.shape_cast %171 : vector<1x1x32x16xbf16> to vector<32x16xbf16>
    %cst_150 = arith.constant dense<0.000000e+00> : vector<16x16xf32>
    %173 = tpu.matmul %168, %172, %cst_150 {dimension_numbers = #tpu.dot_dimension_numbers<[1], [0], [0], [1], [0, 0, 1, 1], [], []>} : vector<16x32xbf16>, vector<32x16xbf16>, vector<16x16xf32> -> vector<16x16xf32>
    %c0_151 = arith.constant 0 : index
    %c0_152 = arith.constant 0 : index
    %c0_153 = arith.constant 0 : index
    %c0_154 = arith.constant 0 : index
    %174 = vector.load %arg8[%c0_151, %c0_152, %c0_153, %c0_154] : memref<2x2x32x16xbf16, #tpu.memory_space<vmem>>, vector<1x1x32x16xbf16>
    %175 = vector.shape_cast %174 : vector<1x1x32x16xbf16> to vector<32x16xbf16>
    %cst_155 = arith.constant dense<0.000000e+00> : vector<16x16xf32>
    %176 = tpu.matmul %168, %175, %cst_155 {dimension_numbers = #tpu.dot_dimension_numbers<[1], [0], [0], [1], [0, 0, 1, 1], [], []>} : vector<16x32xbf16>, vector<32x16xbf16>, vector<16x16xf32> -> vector<16x16xf32>
    %c0_156 = arith.constant 0 : index
    %c0_157 = arith.constant 0 : index
    %c0_158 = arith.constant 0 : index
    %c0_159 = arith.constant 0 : index
    %177 = vector.load %arg9[%c0_156, %c0_157, %c0_158, %c0_159] : memref<2x2x32x16xbf16, #tpu.memory_space<vmem>>, vector<1x1x32x16xbf16>
    %178 = vector.shape_cast %177 : vector<1x1x32x16xbf16> to vector<32x16xbf16>
    %cst_160 = arith.constant dense<0.000000e+00> : vector<16x16xf32>
    %179 = tpu.matmul %168, %178, %cst_160 {dimension_numbers = #tpu.dot_dimension_numbers<[1], [0], [0], [1], [0, 0, 1, 1], [], []>} : vector<16x32xbf16>, vector<32x16xbf16>, vector<16x16xf32> -> vector<16x16xf32>
    %180 = arith.truncf %173 : vector<16x16xf32> to vector<16x16xbf16>
    %181 = arith.truncf %176 : vector<16x16xf32> to vector<16x16xbf16>
    %cst_161 = arith.constant dense<0.000000e+00> : vector<16x16xf32>
    %182 = tpu.matmul %180, %181, %cst_161 {dimension_numbers = #tpu.dot_dimension_numbers<[1], [1], [0], [0], [0, 0, 1, 0], [], []>} : vector<16x16xbf16>, vector<16x16xbf16>, vector<16x16xf32> -> vector<16x16xf32>
    %cst_162 = arith.constant 2.500000e-01 : f32
    %183 = vector.broadcast %cst_162 : f32 to vector<16x16xf32>
    %184 = arith.mulf %182, %183 : vector<16x16xf32>
    %cst_163 = arith.constant dense<0xFF800000> : vector<16xf32>
    %185 = vector.multi_reduction <maximumf>, %184, %cst_163 [1] : vector<16x16xf32> to vector<16xf32>
    %186 = vector.shape_cast %185 : vector<16xf32> to vector<16x1xf32>
    %187 = vector.broadcast %186 : vector<16x1xf32> to vector<16x16xf32>
    %188 = arith.subf %184, %187 : vector<16x16xf32>
    %189 = math.exp %188 : vector<16x16xf32>
    %cst_164 = arith.constant dense<0.000000e+00> : vector<16xf32>
    %190 = vector.multi_reduction <add>, %189, %cst_164 [1] : vector<16x16xf32> to vector<16xf32>
    %191 = vector.shape_cast %190 : vector<16xf32> to vector<16x1xf32>
    %192 = tpu.reciprocal %191 {approx = true} : vector<16x1xf32> -> vector<16x1xf32>
    %193 = vector.broadcast %192 : vector<16x1xf32> to vector<16x16xf32>
    %194 = arith.mulf %189, %193 : vector<16x16xf32>
    %195 = arith.truncf %194 : vector<16x16xf32> to vector<16x16xbf16>
    %196 = arith.truncf %179 : vector<16x16xf32> to vector<16x16xbf16>
    %cst_165 = arith.constant dense<0.000000e+00> : vector<16x16xf32>
    %197 = tpu.matmul %195, %196, %cst_165 {dimension_numbers = #tpu.dot_dimension_numbers<[1], [0], [0], [1], [0, 0, 1, 1], [], []>} : vector<16x16xbf16>, vector<16x16xbf16>, vector<16x16xf32> -> vector<16x16xf32>
    %198 = arith.truncf %197 : vector<16x16xf32> to vector<16x16xbf16>
    %c0_166 = arith.constant 0 : index
    %c0_167 = arith.constant 0 : index
    %c0_168 = arith.constant 0 : index
    %c0_169 = arith.constant 0 : index
    %199 = vector.load %arg10[%c0_166, %c0_167, %c0_168, %c0_169] : memref<2x2x16x32xbf16, #tpu.memory_space<vmem>>, vector<1x1x16x32xbf16>
    %200 = vector.shape_cast %199 : vector<1x1x16x32xbf16> to vector<16x32xbf16>
    %cst_170 = arith.constant dense<0.000000e+00> : vector<16x32xf32>
    %201 = tpu.matmul %198, %200, %cst_170 {dimension_numbers = #tpu.dot_dimension_numbers<[1], [0], [0], [1], [0, 0, 1, 1], [], []>} : vector<16x16xbf16>, vector<16x32xbf16>, vector<16x32xf32> -> vector<16x32xf32>
    %202 = vector.broadcast %170 : vector<1x32xf32> to vector<16x32xf32>
    %203 = arith.addf %202, %201 : vector<16x32xf32>
    %c0_171 = arith.constant 0 : index
    %c1_172 = arith.constant 1 : index
    %c0_173 = arith.constant 0 : index
    %c0_174 = arith.constant 0 : index
    %204 = vector.load %arg7[%c0_171, %c1_172, %c0_173, %c0_174] : memref<2x2x32x16xbf16, #tpu.memory_space<vmem>>, vector<1x1x32x16xbf16>
    %205 = vector.shape_cast %204 : vector<1x1x32x16xbf16> to vector<32x16xbf16>
    %cst_175 = arith.constant dense<0.000000e+00> : vector<16x16xf32>
    %206 = tpu.matmul %168, %205, %cst_175 {dimension_numbers = #tpu.dot_dimension_numbers<[1], [0], [0], [1], [0, 0, 1, 1], [], []>} : vector<16x32xbf16>, vector<32x16xbf16>, vector<16x16xf32> -> vector<16x16xf32>
    %c0_176 = arith.constant 0 : index
    %c1_177 = arith.constant 1 : index
    %c0_178 = arith.constant 0 : index
    %c0_179 = arith.constant 0 : index
    %207 = vector.load %arg8[%c0_176, %c1_177, %c0_178, %c0_179] : memref<2x2x32x16xbf16, #tpu.memory_space<vmem>>, vector<1x1x32x16xbf16>
    %208 = vector.shape_cast %207 : vector<1x1x32x16xbf16> to vector<32x16xbf16>
    %cst_180 = arith.constant dense<0.000000e+00> : vector<16x16xf32>
    %209 = tpu.matmul %168, %208, %cst_180 {dimension_numbers = #tpu.dot_dimension_numbers<[1], [0], [0], [1], [0, 0, 1, 1], [], []>} : vector<16x32xbf16>, vector<32x16xbf16>, vector<16x16xf32> -> vector<16x16xf32>
    %c0_181 = arith.constant 0 : index
    %c1_182 = arith.constant 1 : index
    %c0_183 = arith.constant 0 : index
    %c0_184 = arith.constant 0 : index
    %210 = vector.load %arg9[%c0_181, %c1_182, %c0_183, %c0_184] : memref<2x2x32x16xbf16, #tpu.memory_space<vmem>>, vector<1x1x32x16xbf16>
    %211 = vector.shape_cast %210 : vector<1x1x32x16xbf16> to vector<32x16xbf16>
    %cst_185 = arith.constant dense<0.000000e+00> : vector<16x16xf32>
    %212 = tpu.matmul %168, %211, %cst_185 {dimension_numbers = #tpu.dot_dimension_numbers<[1], [0], [0], [1], [0, 0, 1, 1], [], []>} : vector<16x32xbf16>, vector<32x16xbf16>, vector<16x16xf32> -> vector<16x16xf32>
    %213 = arith.truncf %206 : vector<16x16xf32> to vector<16x16xbf16>
    %214 = arith.truncf %209 : vector<16x16xf32> to vector<16x16xbf16>
    %cst_186 = arith.constant dense<0.000000e+00> : vector<16x16xf32>
    %215 = tpu.matmul %213, %214, %cst_186 {dimension_numbers = #tpu.dot_dimension_numbers<[1], [1], [0], [0], [0, 0, 1, 0], [], []>} : vector<16x16xbf16>, vector<16x16xbf16>, vector<16x16xf32> -> vector<16x16xf32>
    %cst_187 = arith.constant 2.500000e-01 : f32
    %216 = vector.broadcast %cst_187 : f32 to vector<16x16xf32>
    %217 = arith.mulf %215, %216 : vector<16x16xf32>
    %cst_188 = arith.constant dense<0xFF800000> : vector<16xf32>
    %218 = vector.multi_reduction <maximumf>, %217, %cst_188 [1] : vector<16x16xf32> to vector<16xf32>
    %219 = vector.shape_cast %218 : vector<16xf32> to vector<16x1xf32>
    %220 = vector.broadcast %219 : vector<16x1xf32> to vector<16x16xf32>
    %221 = arith.subf %217, %220 : vector<16x16xf32>
    %222 = math.exp %221 : vector<16x16xf32>
    %cst_189 = arith.constant dense<0.000000e+00> : vector<16xf32>
    %223 = vector.multi_reduction <add>, %222, %cst_189 [1] : vector<16x16xf32> to vector<16xf32>
    %224 = vector.shape_cast %223 : vector<16xf32> to vector<16x1xf32>
    %225 = tpu.reciprocal %224 {approx = true} : vector<16x1xf32> -> vector<16x1xf32>
    %226 = vector.broadcast %225 : vector<16x1xf32> to vector<16x16xf32>
    %227 = arith.mulf %222, %226 : vector<16x16xf32>
    %228 = arith.truncf %227 : vector<16x16xf32> to vector<16x16xbf16>
    %229 = arith.truncf %212 : vector<16x16xf32> to vector<16x16xbf16>
    %cst_190 = arith.constant dense<0.000000e+00> : vector<16x16xf32>
    %230 = tpu.matmul %228, %229, %cst_190 {dimension_numbers = #tpu.dot_dimension_numbers<[1], [0], [0], [1], [0, 0, 1, 1], [], []>} : vector<16x16xbf16>, vector<16x16xbf16>, vector<16x16xf32> -> vector<16x16xf32>
    %231 = arith.truncf %230 : vector<16x16xf32> to vector<16x16xbf16>
    %c0_191 = arith.constant 0 : index
    %c1_192 = arith.constant 1 : index
    %c0_193 = arith.constant 0 : index
    %c0_194 = arith.constant 0 : index
    %232 = vector.load %arg10[%c0_191, %c1_192, %c0_193, %c0_194] : memref<2x2x16x32xbf16, #tpu.memory_space<vmem>>, vector<1x1x16x32xbf16>
    %233 = vector.shape_cast %232 : vector<1x1x16x32xbf16> to vector<16x32xbf16>
    %cst_195 = arith.constant dense<0.000000e+00> : vector<16x32xf32>
    %234 = tpu.matmul %231, %233, %cst_195 {dimension_numbers = #tpu.dot_dimension_numbers<[1], [0], [0], [1], [0, 0, 1, 1], [], []>} : vector<16x16xbf16>, vector<16x32xbf16>, vector<16x32xf32> -> vector<16x32xf32>
    %235 = arith.addf %203, %234 : vector<16x32xf32>
    %236 = arith.addf %143, %235 : vector<16x32xf32>
    %c0_196 = arith.constant 0 : index
    %c0_197 = arith.constant 0 : index
    %c0_198 = arith.constant 0 : index
    %237 = vector.load %arg12[%c0_196, %c0_197, %c0_198] : memref<2x1x32xf32, #tpu.memory_space<vmem>>, vector<1x1x32xf32>
    %238 = vector.shape_cast %237 : vector<1x1x32xf32> to vector<1x32xf32>
    %c0_199 = arith.constant 0 : index
    %c0_200 = arith.constant 0 : index
    %c0_201 = arith.constant 0 : index
    %239 = vector.load %arg13[%c0_199, %c0_200, %c0_201] : memref<2x1x32xf32, #tpu.memory_space<vmem>>, vector<1x1x32xf32>
    %240 = vector.shape_cast %239 : vector<1x1x32xf32> to vector<1x32xf32>
    %cst_202 = arith.constant dense<0.000000e+00> : vector<16xf32>
    %241 = vector.multi_reduction <add>, %236, %cst_202 [1] : vector<16x32xf32> to vector<16xf32>
    %242 = vector.shape_cast %241 : vector<16xf32> to vector<16x1xf32>
    %cst_203 = arith.constant 3.200000e+01 : f32
    %243 = vector.broadcast %cst_203 : f32 to vector<16x1xf32>
    %244 = arith.divf %242, %243 : vector<16x1xf32>
    %245 = vector.broadcast %244 : vector<16x1xf32> to vector<16x32xf32>
    %246 = arith.subf %236, %245 : vector<16x32xf32>
    %247 = arith.mulf %246, %246 : vector<16x32xf32>
    %cst_204 = arith.constant dense<0.000000e+00> : vector<16xf32>
    %248 = vector.multi_reduction <add>, %247, %cst_204 [1] : vector<16x32xf32> to vector<16xf32>
    %249 = vector.shape_cast %248 : vector<16xf32> to vector<16x1xf32>
    %cst_205 = arith.constant 3.200000e+01 : f32
    %250 = vector.broadcast %cst_205 : f32 to vector<16x1xf32>
    %251 = arith.divf %249, %250 : vector<16x1xf32>
    %cst_206 = arith.constant 9.99999974E-6 : f32
    %252 = vector.broadcast %cst_206 : f32 to vector<16x1xf32>
    %253 = arith.addf %251, %252 : vector<16x1xf32>
    %254 = math.rsqrt %253 : vector<16x1xf32>
    %255 = vector.broadcast %254 : vector<16x1xf32> to vector<16x32xf32>
    %256 = arith.mulf %246, %255 : vector<16x32xf32>
    %257 = vector.broadcast %238 : vector<1x32xf32> to vector<16x32xf32>
    %258 = arith.mulf %256, %257 : vector<16x32xf32>
    %259 = vector.broadcast %240 : vector<1x32xf32> to vector<16x32xf32>
    %260 = arith.addf %258, %259 : vector<16x32xf32>
    %261 = arith.truncf %260 : vector<16x32xf32> to vector<16x32xbf16>
    %c0_207 = arith.constant 0 : index
    %c0_208 = arith.constant 0 : index
    %c0_209 = arith.constant 0 : index
    %262 = vector.load %arg14[%c0_207, %c0_208, %c0_209] : memref<2x32x64xbf16, #tpu.memory_space<vmem>>, vector<1x32x64xbf16>
    %263 = vector.shape_cast %262 : vector<1x32x64xbf16> to vector<32x64xbf16>
    %cst_210 = arith.constant dense<0.000000e+00> : vector<16x64xf32>
    %264 = tpu.matmul %261, %263, %cst_210 {dimension_numbers = #tpu.dot_dimension_numbers<[1], [0], [0], [1], [0, 0, 1, 1], [], []>} : vector<16x32xbf16>, vector<32x64xbf16>, vector<16x64xf32> -> vector<16x64xf32>
    %c0_211 = arith.constant 0 : index
    %c0_212 = arith.constant 0 : index
    %c0_213 = arith.constant 0 : index
    %265 = vector.load %arg15[%c0_211, %c0_212, %c0_213] : memref<2x1x64xf32, #tpu.memory_space<vmem>>, vector<1x1x64xf32>
    %266 = vector.shape_cast %265 : vector<1x1x64xf32> to vector<1x64xf32>
    %267 = vector.broadcast %266 : vector<1x64xf32> to vector<16x64xf32>
    %268 = arith.addf %264, %267 : vector<16x64xf32>
    %269 = arith.mulf %268, %268 : vector<16x64xf32>
    %270 = arith.mulf %268, %269 : vector<16x64xf32>
    %cst_214 = arith.constant 4.471500e-02 : f32
    %271 = vector.broadcast %cst_214 : f32 to vector<16x64xf32>
    %272 = arith.mulf %271, %270 : vector<16x64xf32>
    %273 = arith.addf %268, %272 : vector<16x64xf32>
    %cst_215 = arith.constant 0.797884583 : f32
    %274 = vector.broadcast %cst_215 : f32 to vector<16x64xf32>
    %275 = arith.mulf %274, %273 : vector<16x64xf32>
    %276 = math.tanh %275 : vector<16x64xf32>
    %cst_216 = arith.constant 1.000000e+00 : f32
    %277 = vector.broadcast %cst_216 : f32 to vector<16x64xf32>
    %278 = arith.addf %277, %276 : vector<16x64xf32>
    %cst_217 = arith.constant 5.000000e-01 : f32
    %279 = vector.broadcast %cst_217 : f32 to vector<16x64xf32>
    %280 = arith.mulf %279, %278 : vector<16x64xf32>
    %281 = arith.mulf %268, %280 : vector<16x64xf32>
    %282 = arith.truncf %281 : vector<16x64xf32> to vector<16x64xbf16>
    %c0_218 = arith.constant 0 : index
    %c0_219 = arith.constant 0 : index
    %c0_220 = arith.constant 0 : index
    %283 = vector.load %arg16[%c0_218, %c0_219, %c0_220] : memref<2x64x32xbf16, #tpu.memory_space<vmem>>, vector<1x64x32xbf16>
    %284 = vector.shape_cast %283 : vector<1x64x32xbf16> to vector<64x32xbf16>
    %cst_221 = arith.constant dense<0.000000e+00> : vector<16x32xf32>
    %285 = tpu.matmul %282, %284, %cst_221 {dimension_numbers = #tpu.dot_dimension_numbers<[1], [0], [0], [1], [0, 0, 1, 1], [], []>} : vector<16x64xbf16>, vector<64x32xbf16>, vector<16x32xf32> -> vector<16x32xf32>
    %c0_222 = arith.constant 0 : index
    %c0_223 = arith.constant 0 : index
    %c0_224 = arith.constant 0 : index
    %286 = vector.load %arg17[%c0_222, %c0_223, %c0_224] : memref<2x1x32xf32, #tpu.memory_space<vmem>>, vector<1x1x32xf32>
    %287 = vector.shape_cast %286 : vector<1x1x32xf32> to vector<1x32xf32>
    %288 = vector.broadcast %287 : vector<1x32xf32> to vector<16x32xf32>
    %289 = arith.addf %285, %288 : vector<16x32xf32>
    %290 = arith.addf %236, %289 : vector<16x32xf32>
    %c1_225 = arith.constant 1 : index
    %c0_226 = arith.constant 0 : index
    %c0_227 = arith.constant 0 : index
    %291 = vector.load %arg5[%c1_225, %c0_226, %c0_227] : memref<2x1x32xf32, #tpu.memory_space<vmem>>, vector<1x1x32xf32>
    %292 = vector.shape_cast %291 : vector<1x1x32xf32> to vector<1x32xf32>
    %c1_228 = arith.constant 1 : index
    %c0_229 = arith.constant 0 : index
    %c0_230 = arith.constant 0 : index
    %293 = vector.load %arg6[%c1_228, %c0_229, %c0_230] : memref<2x1x32xf32, #tpu.memory_space<vmem>>, vector<1x1x32xf32>
    %294 = vector.shape_cast %293 : vector<1x1x32xf32> to vector<1x32xf32>
    %cst_231 = arith.constant dense<0.000000e+00> : vector<16xf32>
    %295 = vector.multi_reduction <add>, %290, %cst_231 [1] : vector<16x32xf32> to vector<16xf32>
    %296 = vector.shape_cast %295 : vector<16xf32> to vector<16x1xf32>
    %cst_232 = arith.constant 3.200000e+01 : f32
    %297 = vector.broadcast %cst_232 : f32 to vector<16x1xf32>
    %298 = arith.divf %296, %297 : vector<16x1xf32>
    %299 = vector.broadcast %298 : vector<16x1xf32> to vector<16x32xf32>
    %300 = arith.subf %290, %299 : vector<16x32xf32>
    %301 = arith.mulf %300, %300 : vector<16x32xf32>
    %cst_233 = arith.constant dense<0.000000e+00> : vector<16xf32>
    %302 = vector.multi_reduction <add>, %301, %cst_233 [1] : vector<16x32xf32> to vector<16xf32>
    %303 = vector.shape_cast %302 : vector<16xf32> to vector<16x1xf32>
    %cst_234 = arith.constant 3.200000e+01 : f32
    %304 = vector.broadcast %cst_234 : f32 to vector<16x1xf32>
    %305 = arith.divf %303, %304 : vector<16x1xf32>
    %cst_235 = arith.constant 9.99999974E-6 : f32
    %306 = vector.broadcast %cst_235 : f32 to vector<16x1xf32>
    %307 = arith.addf %305, %306 : vector<16x1xf32>
    %308 = math.rsqrt %307 : vector<16x1xf32>
    %309 = vector.broadcast %308 : vector<16x1xf32> to vector<16x32xf32>
    %310 = arith.mulf %300, %309 : vector<16x32xf32>
    %311 = vector.broadcast %292 : vector<1x32xf32> to vector<16x32xf32>
    %312 = arith.mulf %310, %311 : vector<16x32xf32>
    %313 = vector.broadcast %294 : vector<1x32xf32> to vector<16x32xf32>
    %314 = arith.addf %312, %313 : vector<16x32xf32>
    %315 = arith.truncf %314 : vector<16x32xf32> to vector<16x32xbf16>
    %c1_236 = arith.constant 1 : index
    %c0_237 = arith.constant 0 : index
    %c0_238 = arith.constant 0 : index
    %316 = vector.load %arg11[%c1_236, %c0_237, %c0_238] : memref<2x1x32xf32, #tpu.memory_space<vmem>>, vector<1x1x32xf32>
    %317 = vector.shape_cast %316 : vector<1x1x32xf32> to vector<1x32xf32>
    %c1_239 = arith.constant 1 : index
    %c0_240 = arith.constant 0 : index
    %c0_241 = arith.constant 0 : index
    %c0_242 = arith.constant 0 : index
    %318 = vector.load %arg7[%c1_239, %c0_240, %c0_241, %c0_242] : memref<2x2x32x16xbf16, #tpu.memory_space<vmem>>, vector<1x1x32x16xbf16>
    %319 = vector.shape_cast %318 : vector<1x1x32x16xbf16> to vector<32x16xbf16>
    %cst_243 = arith.constant dense<0.000000e+00> : vector<16x16xf32>
    %320 = tpu.matmul %315, %319, %cst_243 {dimension_numbers = #tpu.dot_dimension_numbers<[1], [0], [0], [1], [0, 0, 1, 1], [], []>} : vector<16x32xbf16>, vector<32x16xbf16>, vector<16x16xf32> -> vector<16x16xf32>
    %c1_244 = arith.constant 1 : index
    %c0_245 = arith.constant 0 : index
    %c0_246 = arith.constant 0 : index
    %c0_247 = arith.constant 0 : index
    %321 = vector.load %arg8[%c1_244, %c0_245, %c0_246, %c0_247] : memref<2x2x32x16xbf16, #tpu.memory_space<vmem>>, vector<1x1x32x16xbf16>
    %322 = vector.shape_cast %321 : vector<1x1x32x16xbf16> to vector<32x16xbf16>
    %cst_248 = arith.constant dense<0.000000e+00> : vector<16x16xf32>
    %323 = tpu.matmul %315, %322, %cst_248 {dimension_numbers = #tpu.dot_dimension_numbers<[1], [0], [0], [1], [0, 0, 1, 1], [], []>} : vector<16x32xbf16>, vector<32x16xbf16>, vector<16x16xf32> -> vector<16x16xf32>
    %c1_249 = arith.constant 1 : index
    %c0_250 = arith.constant 0 : index
    %c0_251 = arith.constant 0 : index
    %c0_252 = arith.constant 0 : index
    %324 = vector.load %arg9[%c1_249, %c0_250, %c0_251, %c0_252] : memref<2x2x32x16xbf16, #tpu.memory_space<vmem>>, vector<1x1x32x16xbf16>
    %325 = vector.shape_cast %324 : vector<1x1x32x16xbf16> to vector<32x16xbf16>
    %cst_253 = arith.constant dense<0.000000e+00> : vector<16x16xf32>
    %326 = tpu.matmul %315, %325, %cst_253 {dimension_numbers = #tpu.dot_dimension_numbers<[1], [0], [0], [1], [0, 0, 1, 1], [], []>} : vector<16x32xbf16>, vector<32x16xbf16>, vector<16x16xf32> -> vector<16x16xf32>
    %327 = arith.truncf %320 : vector<16x16xf32> to vector<16x16xbf16>
    %328 = arith.truncf %323 : vector<16x16xf32> to vector<16x16xbf16>
    %cst_254 = arith.constant dense<0.000000e+00> : vector<16x16xf32>
    %329 = tpu.matmul %327, %328, %cst_254 {dimension_numbers = #tpu.dot_dimension_numbers<[1], [1], [0], [0], [0, 0, 1, 0], [], []>} : vector<16x16xbf16>, vector<16x16xbf16>, vector<16x16xf32> -> vector<16x16xf32>
    %cst_255 = arith.constant 2.500000e-01 : f32
    %330 = vector.broadcast %cst_255 : f32 to vector<16x16xf32>
    %331 = arith.mulf %329, %330 : vector<16x16xf32>
    %cst_256 = arith.constant dense<0xFF800000> : vector<16xf32>
    %332 = vector.multi_reduction <maximumf>, %331, %cst_256 [1] : vector<16x16xf32> to vector<16xf32>
    %333 = vector.shape_cast %332 : vector<16xf32> to vector<16x1xf32>
    %334 = vector.broadcast %333 : vector<16x1xf32> to vector<16x16xf32>
    %335 = arith.subf %331, %334 : vector<16x16xf32>
    %336 = math.exp %335 : vector<16x16xf32>
    %cst_257 = arith.constant dense<0.000000e+00> : vector<16xf32>
    %337 = vector.multi_reduction <add>, %336, %cst_257 [1] : vector<16x16xf32> to vector<16xf32>
    %338 = vector.shape_cast %337 : vector<16xf32> to vector<16x1xf32>
    %339 = tpu.reciprocal %338 {approx = true} : vector<16x1xf32> -> vector<16x1xf32>
    %340 = vector.broadcast %339 : vector<16x1xf32> to vector<16x16xf32>
    %341 = arith.mulf %336, %340 : vector<16x16xf32>
    %342 = arith.truncf %341 : vector<16x16xf32> to vector<16x16xbf16>
    %343 = arith.truncf %326 : vector<16x16xf32> to vector<16x16xbf16>
    %cst_258 = arith.constant dense<0.000000e+00> : vector<16x16xf32>
    %344 = tpu.matmul %342, %343, %cst_258 {dimension_numbers = #tpu.dot_dimension_numbers<[1], [0], [0], [1], [0, 0, 1, 1], [], []>} : vector<16x16xbf16>, vector<16x16xbf16>, vector<16x16xf32> -> vector<16x16xf32>
    %345 = arith.truncf %344 : vector<16x16xf32> to vector<16x16xbf16>
    %c1_259 = arith.constant 1 : index
    %c0_260 = arith.constant 0 : index
    %c0_261 = arith.constant 0 : index
    %c0_262 = arith.constant 0 : index
    %346 = vector.load %arg10[%c1_259, %c0_260, %c0_261, %c0_262] : memref<2x2x16x32xbf16, #tpu.memory_space<vmem>>, vector<1x1x16x32xbf16>
    %347 = vector.shape_cast %346 : vector<1x1x16x32xbf16> to vector<16x32xbf16>
    %cst_263 = arith.constant dense<0.000000e+00> : vector<16x32xf32>
    %348 = tpu.matmul %345, %347, %cst_263 {dimension_numbers = #tpu.dot_dimension_numbers<[1], [0], [0], [1], [0, 0, 1, 1], [], []>} : vector<16x16xbf16>, vector<16x32xbf16>, vector<16x32xf32> -> vector<16x32xf32>
    %349 = vector.broadcast %317 : vector<1x32xf32> to vector<16x32xf32>
    %350 = arith.addf %349, %348 : vector<16x32xf32>
    %c1_264 = arith.constant 1 : index
    %c1_265 = arith.constant 1 : index
    %c0_266 = arith.constant 0 : index
    %c0_267 = arith.constant 0 : index
    %351 = vector.load %arg7[%c1_264, %c1_265, %c0_266, %c0_267] : memref<2x2x32x16xbf16, #tpu.memory_space<vmem>>, vector<1x1x32x16xbf16>
    %352 = vector.shape_cast %351 : vector<1x1x32x16xbf16> to vector<32x16xbf16>
    %cst_268 = arith.constant dense<0.000000e+00> : vector<16x16xf32>
    %353 = tpu.matmul %315, %352, %cst_268 {dimension_numbers = #tpu.dot_dimension_numbers<[1], [0], [0], [1], [0, 0, 1, 1], [], []>} : vector<16x32xbf16>, vector<32x16xbf16>, vector<16x16xf32> -> vector<16x16xf32>
    %c1_269 = arith.constant 1 : index
    %c1_270 = arith.constant 1 : index
    %c0_271 = arith.constant 0 : index
    %c0_272 = arith.constant 0 : index
    %354 = vector.load %arg8[%c1_269, %c1_270, %c0_271, %c0_272] : memref<2x2x32x16xbf16, #tpu.memory_space<vmem>>, vector<1x1x32x16xbf16>
    %355 = vector.shape_cast %354 : vector<1x1x32x16xbf16> to vector<32x16xbf16>
    %cst_273 = arith.constant dense<0.000000e+00> : vector<16x16xf32>
    %356 = tpu.matmul %315, %355, %cst_273 {dimension_numbers = #tpu.dot_dimension_numbers<[1], [0], [0], [1], [0, 0, 1, 1], [], []>} : vector<16x32xbf16>, vector<32x16xbf16>, vector<16x16xf32> -> vector<16x16xf32>
    %c1_274 = arith.constant 1 : index
    %c1_275 = arith.constant 1 : index
    %c0_276 = arith.constant 0 : index
    %c0_277 = arith.constant 0 : index
    %357 = vector.load %arg9[%c1_274, %c1_275, %c0_276, %c0_277] : memref<2x2x32x16xbf16, #tpu.memory_space<vmem>>, vector<1x1x32x16xbf16>
    %358 = vector.shape_cast %357 : vector<1x1x32x16xbf16> to vector<32x16xbf16>
    %cst_278 = arith.constant dense<0.000000e+00> : vector<16x16xf32>
    %359 = tpu.matmul %315, %358, %cst_278 {dimension_numbers = #tpu.dot_dimension_numbers<[1], [0], [0], [1], [0, 0, 1, 1], [], []>} : vector<16x32xbf16>, vector<32x16xbf16>, vector<16x16xf32> -> vector<16x16xf32>
    %360 = arith.truncf %353 : vector<16x16xf32> to vector<16x16xbf16>
    %361 = arith.truncf %356 : vector<16x16xf32> to vector<16x16xbf16>
    %cst_279 = arith.constant dense<0.000000e+00> : vector<16x16xf32>
    %362 = tpu.matmul %360, %361, %cst_279 {dimension_numbers = #tpu.dot_dimension_numbers<[1], [1], [0], [0], [0, 0, 1, 0], [], []>} : vector<16x16xbf16>, vector<16x16xbf16>, vector<16x16xf32> -> vector<16x16xf32>
    %cst_280 = arith.constant 2.500000e-01 : f32
    %363 = vector.broadcast %cst_280 : f32 to vector<16x16xf32>
    %364 = arith.mulf %362, %363 : vector<16x16xf32>
    %cst_281 = arith.constant dense<0xFF800000> : vector<16xf32>
    %365 = vector.multi_reduction <maximumf>, %364, %cst_281 [1] : vector<16x16xf32> to vector<16xf32>
    %366 = vector.shape_cast %365 : vector<16xf32> to vector<16x1xf32>
    %367 = vector.broadcast %366 : vector<16x1xf32> to vector<16x16xf32>
    %368 = arith.subf %364, %367 : vector<16x16xf32>
    %369 = math.exp %368 : vector<16x16xf32>
    %cst_282 = arith.constant dense<0.000000e+00> : vector<16xf32>
    %370 = vector.multi_reduction <add>, %369, %cst_282 [1] : vector<16x16xf32> to vector<16xf32>
    %371 = vector.shape_cast %370 : vector<16xf32> to vector<16x1xf32>
    %372 = tpu.reciprocal %371 {approx = true} : vector<16x1xf32> -> vector<16x1xf32>
    %373 = vector.broadcast %372 : vector<16x1xf32> to vector<16x16xf32>
    %374 = arith.mulf %369, %373 : vector<16x16xf32>
    %375 = arith.truncf %374 : vector<16x16xf32> to vector<16x16xbf16>
    %376 = arith.truncf %359 : vector<16x16xf32> to vector<16x16xbf16>
    %cst_283 = arith.constant dense<0.000000e+00> : vector<16x16xf32>
    %377 = tpu.matmul %375, %376, %cst_283 {dimension_numbers = #tpu.dot_dimension_numbers<[1], [0], [0], [1], [0, 0, 1, 1], [], []>} : vector<16x16xbf16>, vector<16x16xbf16>, vector<16x16xf32> -> vector<16x16xf32>
    %378 = arith.truncf %377 : vector<16x16xf32> to vector<16x16xbf16>
    %c1_284 = arith.constant 1 : index
    %c1_285 = arith.constant 1 : index
    %c0_286 = arith.constant 0 : index
    %c0_287 = arith.constant 0 : index
    %379 = vector.load %arg10[%c1_284, %c1_285, %c0_286, %c0_287] : memref<2x2x16x32xbf16, #tpu.memory_space<vmem>>, vector<1x1x16x32xbf16>
    %380 = vector.shape_cast %379 : vector<1x1x16x32xbf16> to vector<16x32xbf16>
    %cst_288 = arith.constant dense<0.000000e+00> : vector<16x32xf32>
    %381 = tpu.matmul %378, %380, %cst_288 {dimension_numbers = #tpu.dot_dimension_numbers<[1], [0], [0], [1], [0, 0, 1, 1], [], []>} : vector<16x16xbf16>, vector<16x32xbf16>, vector<16x32xf32> -> vector<16x32xf32>
    %382 = arith.addf %350, %381 : vector<16x32xf32>
    %383 = arith.addf %290, %382 : vector<16x32xf32>
    %c1_289 = arith.constant 1 : index
    %c0_290 = arith.constant 0 : index
    %c0_291 = arith.constant 0 : index
    %384 = vector.load %arg12[%c1_289, %c0_290, %c0_291] : memref<2x1x32xf32, #tpu.memory_space<vmem>>, vector<1x1x32xf32>
    %385 = vector.shape_cast %384 : vector<1x1x32xf32> to vector<1x32xf32>
    %c1_292 = arith.constant 1 : index
    %c0_293 = arith.constant 0 : index
    %c0_294 = arith.constant 0 : index
    %386 = vector.load %arg13[%c1_292, %c0_293, %c0_294] : memref<2x1x32xf32, #tpu.memory_space<vmem>>, vector<1x1x32xf32>
    %387 = vector.shape_cast %386 : vector<1x1x32xf32> to vector<1x32xf32>
    %cst_295 = arith.constant dense<0.000000e+00> : vector<16xf32>
    %388 = vector.multi_reduction <add>, %383, %cst_295 [1] : vector<16x32xf32> to vector<16xf32>
    %389 = vector.shape_cast %388 : vector<16xf32> to vector<16x1xf32>
    %cst_296 = arith.constant 3.200000e+01 : f32
    %390 = vector.broadcast %cst_296 : f32 to vector<16x1xf32>
    %391 = arith.divf %389, %390 : vector<16x1xf32>
    %392 = vector.broadcast %391 : vector<16x1xf32> to vector<16x32xf32>
    %393 = arith.subf %383, %392 : vector<16x32xf32>
    %394 = arith.mulf %393, %393 : vector<16x32xf32>
    %cst_297 = arith.constant dense<0.000000e+00> : vector<16xf32>
    %395 = vector.multi_reduction <add>, %394, %cst_297 [1] : vector<16x32xf32> to vector<16xf32>
    %396 = vector.shape_cast %395 : vector<16xf32> to vector<16x1xf32>
    %cst_298 = arith.constant 3.200000e+01 : f32
    %397 = vector.broadcast %cst_298 : f32 to vector<16x1xf32>
    %398 = arith.divf %396, %397 : vector<16x1xf32>
    %cst_299 = arith.constant 9.99999974E-6 : f32
    %399 = vector.broadcast %cst_299 : f32 to vector<16x1xf32>
    %400 = arith.addf %398, %399 : vector<16x1xf32>
    %401 = math.rsqrt %400 : vector<16x1xf32>
    %402 = vector.broadcast %401 : vector<16x1xf32> to vector<16x32xf32>
    %403 = arith.mulf %393, %402 : vector<16x32xf32>
    %404 = vector.broadcast %385 : vector<1x32xf32> to vector<16x32xf32>
    %405 = arith.mulf %403, %404 : vector<16x32xf32>
    %406 = vector.broadcast %387 : vector<1x32xf32> to vector<16x32xf32>
    %407 = arith.addf %405, %406 : vector<16x32xf32>
    %408 = arith.truncf %407 : vector<16x32xf32> to vector<16x32xbf16>
    %c1_300 = arith.constant 1 : index
    %c0_301 = arith.constant 0 : index
    %c0_302 = arith.constant 0 : index
    %409 = vector.load %arg14[%c1_300, %c0_301, %c0_302] : memref<2x32x64xbf16, #tpu.memory_space<vmem>>, vector<1x32x64xbf16>
    %410 = vector.shape_cast %409 : vector<1x32x64xbf16> to vector<32x64xbf16>
    %cst_303 = arith.constant dense<0.000000e+00> : vector<16x64xf32>
    %411 = tpu.matmul %408, %410, %cst_303 {dimension_numbers = #tpu.dot_dimension_numbers<[1], [0], [0], [1], [0, 0, 1, 1], [], []>} : vector<16x32xbf16>, vector<32x64xbf16>, vector<16x64xf32> -> vector<16x64xf32>
    %c1_304 = arith.constant 1 : index
    %c0_305 = arith.constant 0 : index
    %c0_306 = arith.constant 0 : index
    %412 = vector.load %arg15[%c1_304, %c0_305, %c0_306] : memref<2x1x64xf32, #tpu.memory_space<vmem>>, vector<1x1x64xf32>
    %413 = vector.shape_cast %412 : vector<1x1x64xf32> to vector<1x64xf32>
    %414 = vector.broadcast %413 : vector<1x64xf32> to vector<16x64xf32>
    %415 = arith.addf %411, %414 : vector<16x64xf32>
    %416 = arith.mulf %415, %415 : vector<16x64xf32>
    %417 = arith.mulf %415, %416 : vector<16x64xf32>
    %cst_307 = arith.constant 4.471500e-02 : f32
    %418 = vector.broadcast %cst_307 : f32 to vector<16x64xf32>
    %419 = arith.mulf %418, %417 : vector<16x64xf32>
    %420 = arith.addf %415, %419 : vector<16x64xf32>
    %cst_308 = arith.constant 0.797884583 : f32
    %421 = vector.broadcast %cst_308 : f32 to vector<16x64xf32>
    %422 = arith.mulf %421, %420 : vector<16x64xf32>
    %423 = math.tanh %422 : vector<16x64xf32>
    %cst_309 = arith.constant 1.000000e+00 : f32
    %424 = vector.broadcast %cst_309 : f32 to vector<16x64xf32>
    %425 = arith.addf %424, %423 : vector<16x64xf32>
    %cst_310 = arith.constant 5.000000e-01 : f32
    %426 = vector.broadcast %cst_310 : f32 to vector<16x64xf32>
    %427 = arith.mulf %426, %425 : vector<16x64xf32>
    %428 = arith.mulf %415, %427 : vector<16x64xf32>
    %429 = arith.truncf %428 : vector<16x64xf32> to vector<16x64xbf16>
    %c1_311 = arith.constant 1 : index
    %c0_312 = arith.constant 0 : index
    %c0_313 = arith.constant 0 : index
    %430 = vector.load %arg16[%c1_311, %c0_312, %c0_313] : memref<2x64x32xbf16, #tpu.memory_space<vmem>>, vector<1x64x32xbf16>
    %431 = vector.shape_cast %430 : vector<1x64x32xbf16> to vector<64x32xbf16>
    %cst_314 = arith.constant dense<0.000000e+00> : vector<16x32xf32>
    %432 = tpu.matmul %429, %431, %cst_314 {dimension_numbers = #tpu.dot_dimension_numbers<[1], [0], [0], [1], [0, 0, 1, 1], [], []>} : vector<16x64xbf16>, vector<64x32xbf16>, vector<16x32xf32> -> vector<16x32xf32>
    %c1_315 = arith.constant 1 : index
    %c0_316 = arith.constant 0 : index
    %c0_317 = arith.constant 0 : index
    %433 = vector.load %arg17[%c1_315, %c0_316, %c0_317] : memref<2x1x32xf32, #tpu.memory_space<vmem>>, vector<1x1x32xf32>
    %434 = vector.shape_cast %433 : vector<1x1x32xf32> to vector<1x32xf32>
    %435 = vector.broadcast %434 : vector<1x32xf32> to vector<16x32xf32>
    %436 = arith.addf %432, %435 : vector<16x32xf32>
    %437 = arith.addf %383, %436 : vector<16x32xf32>
    %c0_318 = arith.constant 0 : index
    %c0_319 = arith.constant 0 : index
    %438 = vector.load %arg18[%c0_318, %c0_319] : memref<32x1xf32, #tpu.memory_space<vmem>>, vector<32x1xf32>
    %cst_320 = arith.constant dense<0.000000e+00> : vector<16x1xf32>
    %439 = tpu.matmul %437, %438, %cst_320 {dimension_numbers = #tpu.dot_dimension_numbers<[1], [0], [0], [1], [0, 0, 1, 1], [], []>} : vector<16x32xf32>, vector<32x1xf32>, vector<16x1xf32> -> vector<16x1xf32>
    %c0_321 = arith.constant 0 : index
    %c0_322 = arith.constant 0 : index
    %440 = vector.load %arg19[%c0_321, %c0_322] : memref<1x1xf32, #tpu.memory_space<vmem>>, vector<1x1xf32>
    %441 = vector.broadcast %440 : vector<1x1xf32> to vector<16x1xf32>
    %442 = arith.addf %439, %441 : vector<16x1xf32>
    %cst_323 = arith.constant dense<0xFF800000> : vector<1xf32>
    %443 = vector.multi_reduction <maximumf>, %442, %cst_323 [0] : vector<16x1xf32> to vector<1xf32>
    %444 = vector.shape_cast %443 : vector<1xf32> to vector<1x1xf32>
    %445 = vector.broadcast %444 : vector<1x1xf32> to vector<16x1xf32>
    %446 = arith.subf %442, %445 : vector<16x1xf32>
    %447 = math.exp %446 : vector<16x1xf32>
    %cst_324 = arith.constant dense<0.000000e+00> : vector<1xf32>
    %448 = vector.multi_reduction <add>, %447, %cst_324 [0] : vector<16x1xf32> to vector<1xf32>
    %449 = vector.shape_cast %448 : vector<1xf32> to vector<1x1xf32>
    %450 = tpu.reciprocal %449 {approx = true} : vector<1x1xf32> -> vector<1x1xf32>
    %451 = vector.broadcast %450 : vector<1x1xf32> to vector<16x1xf32>
    %452 = arith.mulf %447, %451 : vector<16x1xf32>
    %453 = vector.broadcast %452 : vector<16x1xf32> to vector<16x32xf32>
    %454 = arith.mulf %453, %437 : vector<16x32xf32>
    %cst_325 = arith.constant dense<0.000000e+00> : vector<32xf32>
    %455 = vector.multi_reduction <add>, %454, %cst_325 [0] : vector<16x32xf32> to vector<32xf32>
    %456 = vector.shape_cast %455 : vector<32xf32> to vector<1x32xf32>
    %c0_326 = arith.constant 0 : index
    %c0_327 = arith.constant 0 : index
    %457 = vector.load %arg20[%c0_326, %c0_327] : memref<32x16xf32, #tpu.memory_space<vmem>>, vector<32x16xf32>
    %cst_328 = arith.constant dense<0.000000e+00> : vector<1x16xf32>
    %458 = tpu.matmul %456, %457, %cst_328 {dimension_numbers = #tpu.dot_dimension_numbers<[1], [0], [0], [1], [0, 0, 1, 1], [], []>} : vector<1x32xf32>, vector<32x16xf32>, vector<1x16xf32> -> vector<1x16xf32>
    %c0_329 = arith.constant 0 : index
    %c0_330 = arith.constant 0 : index
    %459 = vector.load %arg21[%c0_329, %c0_330] : memref<1x16xf32, #tpu.memory_space<vmem>>, vector<1x16xf32>
    %460 = arith.addf %458, %459 : vector<1x16xf32>
    %c0_331 = arith.constant 0 : index
    %c0_332 = arith.constant 0 : index
    %c0_333 = arith.constant 0 : index
    %461 = vector.load %arg22[%c0_331, %c0_332, %c0_333] : memref<1x1x16xf32, #tpu.memory_space<vmem>>, vector<1x1x16xf32>
    %462 = vector.shape_cast %461 : vector<1x1x16xf32> to vector<1x16xf32>
    %463 = vector.shape_cast %460 : vector<1x16xf32> to vector<1x1x16xf32>
    tpu.vector_store %arg22[%c0_331, %c0_332, %c0_333], %463 {strides = array<i32>} : memref<1x1x16xf32, #tpu.memory_space<vmem>>, vector<1x1x16xf32>,
    return
  }
  func.func @transform_0(%arg0: i32) -> (i32, i32, i32) {
    %c0_i32 = arith.constant 0 : i32
    %c0_i32_0 = arith.constant 0 : i32
    %c0_i32_1 = arith.constant 0 : i32
    return %arg0, %c0_i32, %c0_i32_0 : i32, i32, i32
  }
  func.func @transform_1(%arg0: i32) -> (i32, i32, i32) {
    %c0_i32 = arith.constant 0 : i32
    %c0_i32_0 = arith.constant 0 : i32
    %c0_i32_1 = arith.constant 0 : i32
    %c0_i32_2 = arith.constant 0 : i32
    return %c0_i32, %c0_i32_0, %c0_i32_1 : i32, i32, i32
  }
  func.func @transform_2(%arg0: i32) -> (i32, i32) {
    %c0_i32 = arith.constant 0 : i32
    %c0_i32_0 = arith.constant 0 : i32
    %c0_i32_1 = arith.constant 0 : i32
    return %c0_i32, %c0_i32_0 : i32, i32
  }
  func.func @transform_3(%arg0: i32) -> (i32, i32, i32) {
    %c0_i32 = arith.constant 0 : i32
    %c0_i32_0 = arith.constant 0 : i32
    %c0_i32_1 = arith.constant 0 : i32
    %c0_i32_2 = arith.constant 0 : i32
    return %c0_i32, %c0_i32_0, %c0_i32_1 : i32, i32, i32
  }
  func.func @transform_4(%arg0: i32) -> (i32, i32, i32) {
    %c0_i32 = arith.constant 0 : i32
    %c0_i32_0 = arith.constant 0 : i32
    %c0_i32_1 = arith.constant 0 : i32
    %c0_i32_2 = arith.constant 0 : i32
    return %c0_i32, %c0_i32_0, %c0_i32_1 : i32, i32, i32
  }
  func.func @transform_5(%arg0: i32) -> (i32, i32, i32) {
    %c0_i32 = arith.constant 0 : i32
    %c0_i32_0 = arith.constant 0 : i32
    %c0_i32_1 = arith.constant 0 : i32
    %c0_i32_2 = arith.constant 0 : i32
    return %c0_i32, %c0_i32_0, %c0_i32_1 : i32, i32, i32
  }
  func.func @transform_6(%arg0: i32) -> (i32, i32, i32, i32) {
    %c0_i32 = arith.constant 0 : i32
    %c0_i32_0 = arith.constant 0 : i32
    %c0_i32_1 = arith.constant 0 : i32
    %c0_i32_2 = arith.constant 0 : i32
    %c0_i32_3 = arith.constant 0 : i32
    return %c0_i32, %c0_i32_0, %c0_i32_1, %c0_i32_2 : i32, i32, i32, i32
  }
  func.func @transform_7(%arg0: i32) -> (i32, i32, i32, i32) {
    %c0_i32 = arith.constant 0 : i32
    %c0_i32_0 = arith.constant 0 : i32
    %c0_i32_1 = arith.constant 0 : i32
    %c0_i32_2 = arith.constant 0 : i32
    %c0_i32_3 = arith.constant 0 : i32
    return %c0_i32, %c0_i32_0, %c0_i32_1, %c0_i32_2 : i32, i32, i32, i32
  }
  func.func @transform_8(%arg0: i32) -> (i32, i32, i32, i32) {
    %c0_i32 = arith.constant 0 : i32
    %c0_i32_0 = arith.constant 0 : i32
    %c0_i32_1 = arith.constant 0 : i32
    %c0_i32_2 = arith.constant 0 : i32
    %c0_i32_3 = arith.constant 0 : i32
    return %c0_i32, %c0_i32_0, %c0_i32_1, %c0_i32_2 : i32, i32, i32, i32
  }
  func.func @transform_9(%arg0: i32) -> (i32, i32, i32, i32) {
    %c0_i32 = arith.constant 0 : i32
    %c0_i32_0 = arith.constant 0 : i32
    %c0_i32_1 = arith.constant 0 : i32
    %c0_i32_2 = arith.constant 0 : i32
    %c0_i32_3 = arith.constant 0 : i32
    return %c0_i32, %c0_i32_0, %c0_i32_1, %c0_i32_2 : i32, i32, i32, i32
  }
  func.func @transform_10(%arg0: i32) -> (i32, i32, i32) {
    %c0_i32 = arith.constant 0 : i32
    %c0_i32_0 = arith.constant 0 : i32
    %c0_i32_1 = arith.constant 0 : i32
    %c0_i32_2 = arith.constant 0 : i32
    return %c0_i32, %c0_i32_0, %c0_i32_1 : i32, i32, i32
  }
  func.func @transform_11(%arg0: i32) -> (i32, i32, i32) {
    %c0_i32 = arith.constant 0 : i32
    %c0_i32_0 = arith.constant 0 : i32
    %c0_i32_1 = arith.constant 0 : i32
    %c0_i32_2 = arith.constant 0 : i32
    return %c0_i32, %c0_i32_0, %c0_i32_1 : i32, i32, i32
  }
  func.func @transform_12(%arg0: i32) -> (i32, i32, i32) {
    %c0_i32 = arith.constant 0 : i32
    %c0_i32_0 = arith.constant 0 : i32
    %c0_i32_1 = arith.constant 0 : i32
    %c0_i32_2 = arith.constant 0 : i32
    return %c0_i32, %c0_i32_0, %c0_i32_1 : i32, i32, i32
  }
  func.func @transform_13(%arg0: i32) -> (i32, i32, i32) {
    %c0_i32 = arith.constant 0 : i32
    %c0_i32_0 = arith.constant 0 : i32
    %c0_i32_1 = arith.constant 0 : i32
    %c0_i32_2 = arith.constant 0 : i32
    return %c0_i32, %c0_i32_0, %c0_i32_1 : i32, i32, i32
  }
  func.func @transform_14(%arg0: i32) -> (i32, i32, i32) {
    %c0_i32 = arith.constant 0 : i32
    %c0_i32_0 = arith.constant 0 : i32
    %c0_i32_1 = arith.constant 0 : i32
    %c0_i32_2 = arith.constant 0 : i32
    return %c0_i32, %c0_i32_0, %c0_i32_1 : i32, i32, i32
  }
  func.func @transform_15(%arg0: i32) -> (i32, i32, i32) {
    %c0_i32 = arith.constant 0 : i32
    %c0_i32_0 = arith.constant 0 : i32
    %c0_i32_1 = arith.constant 0 : i32
    %c0_i32_2 = arith.constant 0 : i32
    return %c0_i32, %c0_i32_0, %c0_i32_1 : i32, i32, i32
  }
  func.func @transform_16(%arg0: i32) -> (i32, i32, i32) {
    %c0_i32 = arith.constant 0 : i32
    %c0_i32_0 = arith.constant 0 : i32
    %c0_i32_1 = arith.constant 0 : i32
    %c0_i32_2 = arith.constant 0 : i32
    return %c0_i32, %c0_i32_0, %c0_i32_1 : i32, i32, i32
  }
  func.func @transform_17(%arg0: i32) -> (i32, i32) {
    %c0_i32 = arith.constant 0 : i32
    %c0_i32_0 = arith.constant 0 : i32
    %c0_i32_1 = arith.constant 0 : i32
    return %c0_i32, %c0_i32_0 : i32, i32
  }
  func.func @transform_18(%arg0: i32) -> (i32, i32) {
    %c0_i32 = arith.constant 0 : i32
    %c0_i32_0 = arith.constant 0 : i32
    %c0_i32_1 = arith.constant 0 : i32
    return %c0_i32, %c0_i32_0 : i32, i32
  }
  func.func @transform_19(%arg0: i32) -> (i32, i32) {
    %c0_i32 = arith.constant 0 : i32
    %c0_i32_0 = arith.constant 0 : i32
    %c0_i32_1 = arith.constant 0 : i32
    return %c0_i32, %c0_i32_0 : i32, i32
  }
  func.func @transform_20(%arg0: i32) -> (i32, i32) {
    %c0_i32 = arith.constant 0 : i32
    %c0_i32_0 = arith.constant 0 : i32
    %c0_i32_1 = arith.constant 0 : i32
    return %c0_i32, %c0_i32_0 : i32, i32
  }
  func.func @transform_21(%arg0: i32) -> (i32, i32, i32) {
    %c0_i32 = arith.constant 0 : i32
    %c0_i32_0 = arith.constant 0 : i32
    %c0_i32_1 = arith.constant 0 : i32
    return %arg0, %c0_i32, %c0_i32_0 : i32, i32, i32
  }
}

</mosaic_0001>

<llo_original>
// kernel: cct_forward.1
$region0: #{cct_forward.1}
  #allocation0 [shape = 'u32[]', space=smem, size = 0x4, offset = 0x4, fixed_abs, tag = 'smem constant byte address 0x4 - core index']
  #allocation1 [shape = 'u32[144,128]{1,0:T(1,128)}', space=vmem, size = 0x12000, scoped, tag = 'internal scratch']
  #allocation2 [shape = 'f32[120,32]{1,0:T(8,128)}', space=vmem, size = 0xf000, scoped, tag = 'scratch operand']
  #allocation3 [shape = 'f32[16,32]{1,0:T(8,128)}', space=vmem, size = 0x2000, scoped, tag = 'scratch operand']
  #allocation4 [shape = 'f32[40,32]{1,0:T(8,128)}', space=vmem, size = 0x5000, scoped, tag = 'scratch operand']
  #allocation5 [shape = 'f32[1,1]{1,0:T(1,128)S(1)}', space=vmem, size = 0x200, scoped, tag = 'scoped memory for cct_forward.1']
  %s0 = inlined_call_operand.vmem [shape: bf16[2,256,32], index: 0, kind: input, shape index: {}]
  %s1 = inlined_call_operand.vmem [shape: f32[1,16,32], index: 1, kind: input, shape index: {}]
  %s2 = inlined_call_operand.vmem [shape: bf16[32,32], index: 2, kind: input, shape index: {}]
  %s3 = inlined_call_operand.vmem [shape: bf16[9,32,32], index: 3, kind: input, shape index: {}]
  %s4 = inlined_call_operand.vmem [shape: f32[2,1,32], index: 4, kind: input, shape index: {}]
  %s5 = inlined_call_operand.vmem [shape: f32[2,1,32], index: 5, kind: input, shape index: {}]
  %s6 = inlined_call_operand.vmem [shape: bf16[2,2,32,16], index: 6, kind: input, shape index: {}]
  %s7 = inlined_call_operand.vmem [shape: bf16[2,2,32,16], index: 7, kind: input, shape index: {}]
  %s8 = inlined_call_operand.vmem [shape: bf16[2,2,32,16], index: 8, kind: input, shape index: {}]
  %s9 = inlined_call_operand.vmem [shape: bf16[2,2,16,32], index: 9, kind: input, shape index: {}]
  %s10 = inlined_call_operand.vmem [shape: f32[2,1,32], index: 10, kind: input, shape index: {}]
  %s11 = inlined_call_operand.vmem [shape: f32[2,1,32], index: 11, kind: input, shape index: {}]
  %s12 = inlined_call_operand.vmem [shape: f32[2,1,32], index: 12, kind: input, shape index: {}]
  %s13 = inlined_call_operand.vmem [shape: bf16[2,32,64], index: 13, kind: input, shape index: {}]
  %s14 = inlined_call_operand.vmem [shape: f32[2,1,64], index: 14, kind: input, shape index: {}]
  %s15 = inlined_call_operand.vmem [shape: bf16[2,64,32], index: 15, kind: input, shape index: {}]
  %s16 = inlined_call_operand.vmem [shape: f32[2,1,32], index: 16, kind: input, shape index: {}]
  %s17 = inlined_call_operand.vmem [shape: f32[32,1], index: 17, kind: input, shape index: {}]
  %s18 = inlined_call_operand.<no memory space> [shape: f32[1,1], index: 18, kind: input, shape index: {}]
  %s19 = inlined_call_operand.vmem [shape: f32[32,16], index: 19, kind: input, shape index: {}]
  %s20 = inlined_call_operand.vmem [shape: f32[1,16], index: 20, kind: input, shape index: {}]
  %s21 = inlined_call_operand.hbm [shape: f32[2,1,16], index: 21, kind: output, shape index: {}]
  %s22 = sld [smem:[#allocation0]]
  $region117: #{cct_forward.1} parent=0
    _
  %s24 = ssub.s32 1, %s22
  %s25 = scalar_select 0, %s24, %s22
  %v26 = vstv %s18
  %27 = vst [vmem:[#allocation5] sm:$0x1] %v26
  $region1: #{cct_forward.1} parent=0
    #allocation6 [shape = 'u8[1024]{0}', space=vmem, size = 0x400, scoped, tag = 'output window, operand 0']
    #allocation7 [shape = 's32[2]{0}', space=sflag, size = 0x8, scoped, tag = 'scoped memory for cct_forward.1']
    %28 = vsyncpa [#allocation7], 0
    %s29 = scalar_lea.sflag [#allocation7], 1
    %30 = vsyncpa %s29, 0
    loop: start=0, step=1, limit=4
    $region2: #{cct_forward.1} parent=1 // loop_pre_header
      _
    $region3: #{cct_forward.1} parent=1 // loop_header
      %s32 = sphi 0, %s36
      %p33 = scmp.ge.s32.totalorder %s32, 4
      %s42 = sphi 0, %s44
      %s45 = sphi 0, %s42
      %s46 = sphi 0, %s45
      %s62 = sphi 0, %s46
      %s66 = sphi 0, %s66
      %s68 = sphi 0, %s66
      %s69 = sphi 0, %s68
      %s83 = sphi 0, %s69
      %s87 = sphi 0, %s87
      %s89 = sphi 0, %s87
      %s90 = sphi 0, %s89
      %s104 = sphi 0, %s90
      %s108 = sphi 0, %s108
      %s110 = sphi 0, %s108
      %s111 = sphi 0, %s110
      %s125 = sphi 0, %s111
      %s129 = sphi 0, %s129
      %s131 = sphi 0, %s129
      %s132 = sphi 0, %s131
      %s146 = sphi 0, %s132
      %s150 = sphi 0, %s150
      %s152 = sphi 0, %s150
      %s153 = sphi 0, %s152
      %s167 = sphi 0, %s153
      %s171 = sphi 0, %s171
      %s173 = sphi 0, %s171
      %s174 = sphi 0, %s173
      %s188 = sphi 0, %s174
      %s192 = sphi 0, %s192
      %s194 = sphi 0, %s192
      %s195 = sphi 0, %s194
      %s209 = sphi 0, %s195
      %s213 = sphi 0, %s213
      %s215 = sphi 0, %s213
      %s216 = sphi 0, %s215
      %s230 = sphi 0, %s216
      %s234 = sphi 0, %s234
      %s236 = sphi 0, %s234
      %s237 = sphi 0, %s236
      %s251 = sphi 0, %s237
      %s255 = sphi 0, %s255
      %s257 = sphi 0, %s255
      %s258 = sphi 0, %s257
      %s272 = sphi 0, %s258
      %s276 = sphi 0, %s276
      %s278 = sphi 0, %s276
      %s279 = sphi 0, %s278
      %s293 = sphi 0, %s279
      %s297 = sphi 0, %s297
      %s299 = sphi 0, %s297
      %s300 = sphi 0, %s299
      %s314 = sphi 0, %s300
      %s318 = sphi 0, %s318
      %s320 = sphi 0, %s318
      %s321 = sphi 0, %s320
      %s335 = sphi 0, %s321
      %s339 = sphi 0, %s339
      %s341 = sphi 0, %s339
      %s342 = sphi 0, %s341
      %s356 = sphi 0, %s342
      %s360 = sphi 0, %s360
      %s362 = sphi 0, %s360
      %s363 = sphi 0, %s362
      %s377 = sphi 0, %s363
      %s381 = sphi 0, %s381
      %s383 = sphi 0, %s381
      %s384 = sphi 0, %s383
      %s398 = sphi 0, %s384
      %s402 = sphi 0, %s402
      %s404 = sphi 0, %s402
      %s405 = sphi 0, %s404
      %s419 = sphi 0, %s405
      %s423 = sphi 0, %s423
      %s425 = sphi 0, %s423
      %s426 = sphi 0, %s425
      %s440 = sphi 0, %s426
      %s444 = sphi 0, %s444
      %s446 = sphi 0, %s444
      %s447 = sphi 0, %s446
      %s461 = sphi 0, %s447
      %s465 = sphi 0, %s465
      %s467 = sphi 0, %s465
      %s468 = sphi 0, %s467
      %s482 = sphi 0, %s468
      %s488 = sphi 0, %s490
      %s491 = sphi 0, %s488
      %s492 = sphi 0, %s491
      %s508 = sphi 0, %s492
    $region4: #{cct_forward.1} parent=1 // loop_header_branch
      %35 = sbr.rel (%p33) target = $region8
    $region5: #{cct_forward.1} parent=1 // loop_body
      %s37 = ssub.s32 %s32, 1
      %s38 = ssub.s32 %s32, 2
      %s39 = sadd.s32 %s32, 1
      %s40 = ssub.s32 %s32, %s39
      %p41 = scmp.eq.s32.totalorder %s40, 0
      %s43 = sadd.s32 %s42, 1
      %s44 = scalar_select %p41, %s42, %s43
      %p47 = pneg %p41
      %p48 = scmp.eq.s32.totalorder %s32, 1
      %p49 = por %p47, %p48
      %p50 = scmp.ne.s32.totalorder %s42, %s45
      %p51 = scmp.eq.s32.totalorder %s32, 0
      %p52 = por %p50, %p51
      %p53 = scmp.ne.s32.totalorder %s42, %s45
      %p54 = scmp.eq.s32.totalorder %s37, 1
      %p55 = por %p53, %p54
      %p56 = scmp.ne.s32.totalorder %s45, %s46
      %p57 = scmp.eq.s32.totalorder %s37, 0
      %p58 = por %p56, %p57
      %p59 = scmp.ne.s32.totalorder %s45, %s46
      %p60 = scmp.eq.s32.totalorder %s38, 1
      %p61 = por %p59, %p60
      %p63 = scmp.ne.s32.totalorder %s46, %s62
      %p64 = scmp.eq.s32.totalorder %s38, 0
      %p65 = por %p63, %p64
      %s67 = sadd.s32 %s66, 1
      %p70 = scmp.eq.s32.totalorder %s32, 1
      %p71 = scmp.ne.s32.totalorder %s66, %s68
      %p72 = scmp.eq.s32.totalorder %s32, 0
      %p73 = por %p71, %p72
      %p74 = scmp.ne.s32.totalorder %s66, %s68
      %p75 = scmp.eq.s32.totalorder %s37, 1
      %p76 = por %p74, %p75
      %p77 = scmp.ne.s32.totalorder %s68, %s69
      %p78 = scmp.eq.s32.totalorder %s37, 0
      %p79 = por %p77, %p78
      %p80 = scmp.ne.s32.totalorder %s68, %s69
      %p81 = scmp.eq.s32.totalorder %s38, 1
      %p82 = por %p80, %p81
      %p84 = scmp.ne.s32.totalorder %s69, %s83
      %p85 = scmp.eq.s32.totalorder %s38, 0
      %p86 = por %p84, %p85
      %s88 = sadd.s32 %s87, 1
      %p91 = scmp.eq.s32.totalorder %s32, 1
      %p92 = scmp.ne.s32.totalorder %s87, %s89
      %p93 = scmp.eq.s32.totalorder %s32, 0
      %p94 = por %p92, %p93
      %p95 = scmp.ne.s32.totalorder %s87, %s89
      %p96 = scmp.eq.s32.totalorder %s37, 1
      %p97 = por %p95, %p96
      %p98 = scmp.ne.s32.totalorder %s89, %s90
      %p99 = scmp.eq.s32.totalorder %s37, 0
      %p100 = por %p98, %p99
      %p101 = scmp.ne.s32.totalorder %s89, %s90
      %p102 = scmp.eq.s32.totalorder %s38, 1
      %p103 = por %p101, %p102
      %p105 = scmp.ne.s32.totalorder %s90, %s104
      %p106 = scmp.eq.s32.totalorder %s38, 0
      %p107 = por %p105, %p106
      %s109 = sadd.s32 %s108, 1
      %p112 = scmp.eq.s32.totalorder %s32, 1
      %p113 = scmp.ne.s32.totalorder %s108, %s110
      %p114 = scmp.eq.s32.totalorder %s32, 0
      %p115 = por %p113, %p114
      %p116 = scmp.ne.s32.totalorder %s108, %s110
      %p117 = scmp.eq.s32.totalorder %s37, 1
      %p118 = por %p116, %p117
      %p119 = scmp.ne.s32.totalorder %s110, %s111
      %p120 = scmp.eq.s32.totalorder %s37, 0
      %p121 = por %p119, %p120
      %p122 = scmp.ne.s32.totalorder %s110, %s111
      %p123 = scmp.eq.s32.totalorder %s38, 1
      %p124 = por %p122, %p123
      %p126 = scmp.ne.s32.totalorder %s111, %s125
      %p127 = scmp.eq.s32.totalorder %s38, 0
      %p128 = por %p126, %p127
      %s130 = sadd.s32 %s129, 1
      %p133 = scmp.eq.s32.totalorder %s32, 1
      %p134 = scmp.ne.s32.totalorder %s129, %s131
      %p135 = scmp.eq.s32.totalorder %s32, 0
      %p136 = por %p134, %p135
      %p137 = scmp.ne.s32.totalorder %s129, %s131
      %p138 = scmp.eq.s32.totalorder %s37, 1
      %p139 = por %p137, %p138
      %p140 = scmp.ne.s32.totalorder %s131, %s132
      %p141 = scmp.eq.s32.totalorder %s37, 0
      %p142 = por %p140, %p141
      %p143 = scmp.ne.s32.totalorder %s131, %s132
      %p144 = scmp.eq.s32.totalorder %s38, 1
      %p145 = por %p143, %p144
      %p147 = scmp.ne.s32.totalorder %s132, %s146
      %p148 = scmp.eq.s32.totalorder %s38, 0
      %p149 = por %p147, %p148
      %s151 = sadd.s32 %s150, 1
      %p154 = scmp.eq.s32.totalorder %s32, 1
      %p155 = scmp.ne.s32.totalorder %s150, %s152
      %p156 = scmp.eq.s32.totalorder %s32, 0
      %p157 = por %p155, %p156
      %p158 = scmp.ne.s32.totalorder %s150, %s152
      %p159 = scmp.eq.s32.totalorder %s37, 1
      %p160 = por %p158, %p159
      %p161 = scmp.ne.s32.totalorder %s152, %s153
      %p162 = scmp.eq.s32.totalorder %s37, 0
      %p163 = por %p161, %p162
      %p164 = scmp.ne.s32.totalorder %s152, %s153
      %p165 = scmp.eq.s32.totalorder %s38, 1
      %p166 = por %p164, %p165
      %p168 = scmp.ne.s32.totalorder %s153, %s167
      %p169 = scmp.eq.s32.totalorder %s38, 0
      %p170 = por %p168, %p169
      %s172 = sadd.s32 %s171, 1
      %p175 = scmp.eq.s32.totalorder %s32, 1
      %p176 = scmp.ne.s32.totalorder %s171, %s173
      %p177 = scmp.eq.s32.totalorder %s32, 0
      %p178 = por %p176, %p177
      %p179 = scmp.ne.s32.totalorder %s171, %s173
      %p180 = scmp.eq.s32.totalorder %s37, 1
      %p181 = por %p179, %p180
      %p182 = scmp.ne.s32.totalorder %s173, %s174
      %p183 = scmp.eq.s32.totalorder %s37, 0
      %p184 = por %p182, %p183
      %p185 = scmp.ne.s32.totalorder %s173, %s174
      %p186 = scmp.eq.s32.totalorder %s38, 1
      %p187 = por %p185, %p186
      %p189 = scmp.ne.s32.totalorder %s174, %s188
      %p190 = scmp.eq.s32.totalorder %s38, 0
      %p191 = por %p189, %p190
      %s193 = sadd.s32 %s192, 1
      %p196 = scmp.eq.s32.totalorder %s32, 1
      %p197 = scmp.ne.s32.totalorder %s192, %s194
      %p198 = scmp.eq.s32.totalorder %s32, 0
      %p199 = por %p197, %p198
      %p200 = scmp.ne.s32.totalorder %s192, %s194
      %p201 = scmp.eq.s32.totalorder %s37, 1
      %p202 = por %p200, %p201
      %p203 = scmp.ne.s32.totalorder %s194, %s195
      %p204 = scmp.eq.s32.totalorder %s37, 0
      %p205 = por %p203, %p204
      %p206 = scmp.ne.s32.totalorder %s194, %s195
      %p207 = scmp.eq.s32.totalorder %s38, 1
      %p208 = por %p206, %p207
      %p210 = scmp.ne.s32.totalorder %s195, %s209
      %p211 = scmp.eq.s32.totalorder %s38, 0
      %p212 = por %p210, %p211
      %s214 = sadd.s32 %s213, 1
      %p217 = scmp.eq.s32.totalorder %s32, 1
      %p218 = scmp.ne.s32.totalorder %s213, %s215
      %p219 = scmp.eq.s32.totalorder %s32, 0
      %p220 = por %p218, %p219
      %p221 = scmp.ne.s32.totalorder %s213, %s215
      %p222 = scmp.eq.s32.totalorder %s37, 1
      %p223 = por %p221, %p222
      %p224 = scmp.ne.s32.totalorder %s215, %s216
      %p225 = scmp.eq.s32.totalorder %s37, 0
      %p226 = por %p224, %p225
      %p227 = scmp.ne.s32.totalorder %s215, %s216
      %p228 = scmp.eq.s32.totalorder %s38, 1
      %p229 = por %p227, %p228
      %p231 = scmp.ne.s32.totalorder %s216, %s230
      %p232 = scmp.eq.s32.totalorder %s38, 0
      %p233 = por %p231, %p232
      %s235 = sadd.s32 %s234, 1
      %p238 = scmp.eq.s32.totalorder %s32, 1
      %p239 = scmp.ne.s32.totalorder %s234, %s236
      %p240 = scmp.eq.s32.totalorder %s32, 0
      %p241 = por %p239, %p240
      %p242 = scmp.ne.s32.totalorder %s234, %s236
      %p243 = scmp.eq.s32.totalorder %s37, 1
      %p244 = por %p242, %p243
      %p245 = scmp.ne.s32.totalorder %s236, %s237
      %p246 = scmp.eq.s32.totalorder %s37, 0
      %p247 = por %p245, %p246
      %p248 = scmp.ne.s32.totalorder %s236, %s237
      %p249 = scmp.eq.s32.totalorder %s38, 1
      %p250 = por %p248, %p249
      %p252 = scmp.ne.s32.totalorder %s237, %s251
      %p253 = scmp.eq.s32.totalorder %s38, 0
      %p254 = por %p252, %p253
      %s256 = sadd.s32 %s255, 1
      %p259 = scmp.eq.s32.totalorder %s32, 1
      %p260 = scmp.ne.s32.totalorder %s255, %s257
      %p261 = scmp.eq.s32.totalorder %s32, 0
      %p262 = por %p260, %p261
      %p263 = scmp.ne.s32.totalorder %s255, %s257
      %p264 = scmp.eq.s32.totalorder %s37, 1
      %p265 = por %p263, %p264
      %p266 = scmp.ne.s32.totalorder %s257, %s258
      %p267 = scmp.eq.s32.totalorder %s37, 0
      %p268 = por %p266, %p267
      %p269 = scmp.ne.s32.totalorder %s257, %s258
      %p270 = scmp.eq.s32.totalorder %s38, 1
      %p271 = por %p269, %p270
      %p273 = scmp.ne.s32.totalorder %s258, %s272
      %p274 = scmp.eq.s32.totalorder %s38, 0
      %p275 = por %p273, %p274
      %s277 = sadd.s32 %s276, 1
      %p280 = scmp.eq.s32.totalorder %s32, 1
      %p281 = scmp.ne.s32.totalorder %s276, %s278
      %p282 = scmp.eq.s32.totalorder %s32, 0
      %p283 = por %p281, %p282
      %p284 = scmp.ne.s32.totalorder %s276, %s278
      %p285 = scmp.eq.s32.totalorder %s37, 1
      %p286 = por %p284, %p285
      %p287 = scmp.ne.s32.totalorder %s278, %s279
      %p288 = scmp.eq.s32.totalorder %s37, 0
      %p289 = por %p287, %p288
      %p290 = scmp.ne.s32.totalorder %s278, %s279
      %p291 = scmp.eq.s32.totalorder %s38, 1
      %p292 = por %p290, %p291
      %p294 = scmp.ne.s32.totalorder %s279, %s293
      %p295 = scmp.eq.s32.totalorder %s38, 0
      %p296 = por %p294, %p295
      %s298 = sadd.s32 %s297, 1
      %p301 = scmp.eq.s32.totalorder %s32, 1
      %p302 = scmp.ne.s32.totalorder %s297, %s299
      %p303 = scmp.eq.s32.totalorder %s32, 0
      %p304 = por %p302, %p303
      %p305 = scmp.ne.s32.totalorder %s297, %s299
      %p306 = scmp.eq.s32.totalorder %s37, 1
      %p307 = por %p305, %p306
      %p308 = scmp.ne.s32.totalorder %s299, %s300
      %p309 = scmp.eq.s32.totalorder %s37, 0
      %p310 = por %p308, %p309
      %p311 = scmp.ne.s32.totalorder %s299, %s300
      %p312 = scmp.eq.s32.totalorder %s38, 1
      %p313 = por %p311, %p312
      %p315 = scmp.ne.s32.totalorder %s300, %s314
      %p316 = scmp.eq.s32.totalorder %s38, 0
      %p317 = por %p315, %p316
      %s319 = sadd.s32 %s318, 1
      %p322 = scmp.eq.s32.totalorder %s32, 1
      %p323 = scmp.ne.s32.totalorder %s318, %s320
      %p324 = scmp.eq.s32.totalorder %s32, 0
      %p325 = por %p323, %p324
      %p326 = scmp.ne.s32.totalorder %s318, %s320
      %p327 = scmp.eq.s32.totalorder %s37, 1
      %p328 = por %p326, %p327
      %p329 = scmp.ne.s32.totalorder %s320, %s321
      %p330 = scmp.eq.s32.totalorder %s37, 0
      %p331 = por %p329, %p330
      %p332 = scmp.ne.s32.totalorder %s320, %s321
      %p333 = scmp.eq.s32.totalorder %s38, 1
      %p334 = por %p332, %p333
      %p336 = scmp.ne.s32.totalorder %s321, %s335
      %p337 = scmp.eq.s32.totalorder %s38, 0
      %p338 = por %p336, %p337
      %s340 = sadd.s32 %s339, 1
      %p343 = scmp.eq.s32.totalorder %s32, 1
      %p344 = scmp.ne.s32.totalorder %s339, %s341
      %p345 = scmp.eq.s32.totalorder %s32, 0
      %p346 = por %p344, %p345
      %p347 = scmp.ne.s32.totalorder %s339, %s341
      %p348 = scmp.eq.s32.totalorder %s37, 1
      %p349 = por %p347, %p348
      %p350 = scmp.ne.s32.totalorder %s341, %s342
      %p351 = scmp.eq.s32.totalorder %s37, 0
      %p352 = por %p350, %p351
      %p353 = scmp.ne.s32.totalorder %s341, %s342
      %p354 = scmp.eq.s32.totalorder %s38, 1
      %p355 = por %p353, %p354
      %p357 = scmp.ne.s32.totalorder %s342, %s356
      %p358 = scmp.eq.s32.totalorder %s38, 0
      %p359 = por %p357, %p358
      %s361 = sadd.s32 %s360, 1
      %p364 = scmp.eq.s32.totalorder %s32, 1
      %p365 = scmp.ne.s32.totalorder %s360, %s362
      %p366 = scmp.eq.s32.totalorder %s32, 0
      %p367 = por %p365, %p366
      %p368 = scmp.ne.s32.totalorder %s360, %s362
      %p369 = scmp.eq.s32.totalorder %s37, 1
      %p370 = por %p368, %p369
      %p371 = scmp.ne.s32.totalorder %s362, %s363
      %p372 = scmp.eq.s32.totalorder %s37, 0
      %p373 = por %p371, %p372
      %p374 = scmp.ne.s32.totalorder %s362, %s363
      %p375 = scmp.eq.s32.totalorder %s38, 1
      %p376 = por %p374, %p375
      %p378 = scmp.ne.s32.totalorder %s363, %s377
      %p379 = scmp.eq.s32.totalorder %s38, 0
      %p380 = por %p378, %p379
      %s382 = sadd.s32 %s381, 1
      %p385 = scmp.eq.s32.totalorder %s32, 1
      %p386 = scmp.ne.s32.totalorder %s381, %s383
      %p387 = scmp.eq.s32.totalorder %s32, 0
      %p388 = por %p386, %p387
      %p389 = scmp.ne.s32.totalorder %s381, %s383
      %p390 = scmp.eq.s32.totalorder %s37, 1
      %p391 = por %p389, %p390
      %p392 = scmp.ne.s32.totalorder %s383, %s384
      %p393 = scmp.eq.s32.totalorder %s37, 0
      %p394 = por %p392, %p393
      %p395 = scmp.ne.s32.totalorder %s383, %s384
      %p396 = scmp.eq.s32.totalorder %s38, 1
      %p397 = por %p395, %p396
      %p399 = scmp.ne.s32.totalorder %s384, %s398
      %p400 = scmp.eq.s32.totalorder %s38, 0
      %p401 = por %p399, %p400
      %s403 = sadd.s32 %s402, 1
      %p406 = scmp.eq.s32.totalorder %s32, 1
      %p407 = scmp.ne.s32.totalorder %s402, %s404
      %p408 = scmp.eq.s32.totalorder %s32, 0
      %p409 = por %p407, %p408
      %p410 = scmp.ne.s32.totalorder %s402, %s404
      %p411 = scmp.eq.s32.totalorder %s37, 1
      %p412 = por %p410, %p411
      %p413 = scmp.ne.s32.totalorder %s404, %s405
      %p414 = scmp.eq.s32.totalorder %s37, 0
      %p415 = por %p413, %p414
      %p416 = scmp.ne.s32.totalorder %s404, %s405
      %p417 = scmp.eq.s32.totalorder %s38, 1
      %p418 = por %p416, %p417
      %p420 = scmp.ne.s32.totalorder %s405, %s419
      %p421 = scmp.eq.s32.totalorder %s38, 0
      %p422 = por %p420, %p421
      %s424 = sadd.s32 %s423, 1
      %p427 = scmp.eq.s32.totalorder %s32, 1
      %p428 = scmp.ne.s32.totalorder %s423, %s425
      %p429 = scmp.eq.s32.totalorder %s32, 0
      %p430 = por %p428, %p429
      %p431 = scmp.ne.s32.totalorder %s423, %s425
      %p432 = scmp.eq.s32.totalorder %s37, 1
      %p433 = por %p431, %p432
      %p434 = scmp.ne.s32.totalorder %s425, %s426
      %p435 = scmp.eq.s32.totalorder %s37, 0
      %p436 = por %p434, %p435
      %p437 = scmp.ne.s32.totalorder %s425, %s426
      %p438 = scmp.eq.s32.totalorder %s38, 1
      %p439 = por %p437, %p438
      %p441 = scmp.ne.s32.totalorder %s426, %s440
      %p442 = scmp.eq.s32.totalorder %s38, 0
      %p443 = por %p441, %p442
      %s445 = sadd.s32 %s444, 1
      %p448 = scmp.eq.s32.totalorder %s32, 1
      %p449 = scmp.ne.s32.totalorder %s444, %s446
      %p450 = scmp.eq.s32.totalorder %s32, 0
      %p451 = por %p449, %p450
      %p452 = scmp.ne.s32.totalorder %s444, %s446
      %p453 = scmp.eq.s32.totalorder %s37, 1
      %p454 = por %p452, %p453
      %p455 = scmp.ne.s32.totalorder %s446, %s447
      %p456 = scmp.eq.s32.totalorder %s37, 0
      %p457 = por %p455, %p456
      %p458 = scmp.ne.s32.totalorder %s446, %s447
      %p459 = scmp.eq.s32.totalorder %s38, 1
      %p460 = por %p458, %p459
      %p462 = scmp.ne.s32.totalorder %s447, %s461
      %p463 = scmp.eq.s32.totalorder %s38, 0
      %p464 = por %p462, %p463
      %s466 = sadd.s32 %s465, 1
      %p469 = scmp.eq.s32.totalorder %s32, 1
      %p470 = scmp.ne.s32.totalorder %s465, %s467
      %p471 = scmp.eq.s32.totalorder %s32, 0
      %p472 = por %p470, %p471
      %p473 = scmp.ne.s32.totalorder %s465, %s467
      %p474 = scmp.eq.s32.totalorder %s37, 1
      %p475 = por %p473, %p474
      %p476 = scmp.ne.s32.totalorder %s467, %s468
      %p477 = scmp.eq.s32.totalorder %s37, 0
      %p478 = por %p476, %p477
      %p479 = scmp.ne.s32.totalorder %s467, %s468
      %p480 = scmp.eq.s32.totalorder %s38, 1
      %p481 = por %p479, %p480
      %p483 = scmp.ne.s32.totalorder %s468, %s482
      %p484 = scmp.eq.s32.totalorder %s38, 0
      %p485 = por %p483, %p484
      %s486 = ssub.s32 %s32, %s39
      %p487 = scmp.eq.s32.totalorder %s486, 0
      %s489 = sadd.s32 %s488, 1
      %s490 = scalar_select %p487, %s488, %s489
      %p493 = pneg %p487
      %p494 = scmp.eq.s32.totalorder %s32, 1
      %p495 = por %p493, %p494
      %p496 = scmp.ne.s32.totalorder %s488, %s491
      %p497 = scmp.eq.s32.totalorder %s32, 0
      %p498 = por %p496, %p497
      %p499 = scmp.ne.s32.totalorder %s488, %s491
      %p500 = scmp.eq.s32.totalorder %s37, 1
      %p501 = por %p499, %p500
      %p502 = scmp.ne.s32.totalorder %s491, %s492
      %p503 = scmp.eq.s32.totalorder %s37, 0
      %p504 = por %p502, %p503
      %p505 = scmp.ne.s32.totalorder %s491, %s492
      %p506 = scmp.eq.s32.totalorder %s38, 1
      %p507 = por %p505, %p506
      %p509 = scmp.ne.s32.totalorder %s492, %s508
      %p510 = scmp.eq.s32.totalorder %s38, 0
      %p511 = por %p509, %p510
      %p512 = scmp.le.s32.totalorder 1, %s32
      %p513 = scmp.lt.s32.totalorder %s32, 3
      %p514 = pnand %p512, %p513
      %p515 = pneg %p514
      // Predicated region
      $region9: #{cct_forward.1} parent=5 // pred_check
        _
      $region10: #{cct_forward.1} parent=5 // pred_check_branch
        %517 = sbr.rel (%p514) target = $region12
      $region11: #{cct_forward.1} parent=5 // pred_region
        %s518 = ssub.s32 %s32, 1
        // Predicated region
        $region13: #{cct_forward.1} parent=11 // pred_check
          %p519 = pneg %p79
        $region14: #{cct_forward.1} parent=11 // pred_check_branch
          %521 = sbr.rel (%p519) target = $region16
        $region15: #{cct_forward.1} parent=11 // pred_region
          _
        $region16: #{cct_forward.1} parent=11 // pred_fallthru
          _
        // Predicated region
        $region17: #{cct_forward.1} parent=11 // pred_check
          %p522 = pneg %p100
        $region18: #{cct_forward.1} parent=11 // pred_check_branch
          %524 = sbr.rel (%p522) target = $region20
        $region19: #{cct_forward.1} parent=11 // pred_region
          _
        $region20: #{cct_forward.1} parent=11 // pred_fallthru
          _
        // Predicated region
        $region21: #{cct_forward.1} parent=11 // pred_check
          %p525 = pneg %p121
        $region22: #{cct_forward.1} parent=11 // pred_check_branch
          %527 = sbr.rel (%p525) target = $region24
        $region23: #{cct_forward.1} parent=11 // pred_region
          _
        $region24: #{cct_forward.1} parent=11 // pred_fallthru
          _
        // Predicated region
        $region25: #{cct_forward.1} parent=11 // pred_check
          %p528 = pneg %p142
        $region26: #{cct_forward.1} parent=11 // pred_check_branch
          %530 = sbr.rel (%p528) target = $region28
        $region27: #{cct_forward.1} parent=11 // pred_region
          _
        $region28: #{cct_forward.1} parent=11 // pred_fallthru
          _
        // Predicated region
        $region29: #{cct_forward.1} parent=11 // pred_check
          %p531 = pneg %p163
        $region30: #{cct_forward.1} parent=11 // pred_check_branch
          %533 = sbr.rel (%p531) target = $region32
        $region31: #{cct_forward.1} parent=11 // pred_region
          _
        $region32: #{cct_forward.1} parent=11 // pred_fallthru
          _
        // Predicated region
        $region33: #{cct_forward.1} parent=11 // pred_check
          %p534 = pneg %p184
        $region34: #{cct_forward.1} parent=11 // pred_check_branch
          %536 = sbr.rel (%p534) target = $region36
        $region35: #{cct_forward.1} parent=11 // pred_region
          _
        $region36: #{cct_forward.1} parent=11 // pred_fallthru
          _
        // Predicated region
        $region37: #{cct_forward.1} parent=11 // pred_check
          %p537 = pneg %p205
        $region38: #{cct_forward.1} parent=11 // pred_check_branch
          %539 = sbr.rel (%p537) target = $region40
        $region39: #{cct_forward.1} parent=11 // pred_region
          _
        $region40: #{cct_forward.1} parent=11 // pred_fallthru
          _
        // Predicated region
        $region41: #{cct_forward.1} parent=11 // pred_check
          %p540 = pneg %p226
        $region42: #{cct_forward.1} parent=11 // pred_check_branch
          %542 = sbr.rel (%p540) target = $region44
        $region43: #{cct_forward.1} parent=11 // pred_region
          _
        $region44: #{cct_forward.1} parent=11 // pred_fallthru
          _
        // Predicated region
        $region45: #{cct_forward.1} parent=11 // pred_check
          %p543 = pneg %p247
        $region46: #{cct_forward.1} parent=11 // pred_check_branch
          %545 = sbr.rel (%p543) target = $region48
        $region47: #{cct_forward.1} parent=11 // pred_region
          _
        $region48: #{cct_forward.1} parent=11 // pred_fallthru
          _
        // Predicated region
        $region49: #{cct_forward.1} parent=11 // pred_check
          %p546 = pneg %p268
        $region50: #{cct_forward.1} parent=11 // pred_check_branch
          %548 = sbr.rel (%p546) target = $region52
        $region51: #{cct_forward.1} parent=11 // pred_region
          _
        $region52: #{cct_forward.1} parent=11 // pred_fallthru
          _
        // Predicated region
        $region53: #{cct_forward.1} parent=11 // pred_check
          %p549 = pneg %p289
        $region54: #{cct_forward.1} parent=11 // pred_check_branch
          %551 = sbr.rel (%p549) target = $region56
        $region55: #{cct_forward.1} parent=11 // pred_region
          _
        $region56: #{cct_forward.1} parent=11 // pred_fallthru
          _
        // Predicated region
        $region57: #{cct_forward.1} parent=11 // pred_check
          %p552 = pneg %p310
        $region58: #{cct_forward.1} parent=11 // pred_check_branch
          %554 = sbr.rel (%p552) target = $region60
        $region59: #{cct_forward.1} parent=11 // pred_region
          _
        $region60: #{cct_forward.1} parent=11 // pred_fallthru
          _
        // Predicated region
        $region61: #{cct_forward.1} parent=11 // pred_check
          %p555 = pneg %p331
        $region62: #{cct_forward.1} parent=11 // pred_check_branch
          %557 = sbr.rel (%p555) target = $region64
        $region63: #{cct_forward.1} parent=11 // pred_region
          _
        $region64: #{cct_forward.1} parent=11 // pred_fallthru
          _
        // Predicated region
        $region65: #{cct_forward.1} parent=11 // pred_check
          %p558 = pneg %p352
        $region66: #{cct_forward.1} parent=11 // pred_check_branch
          %560 = sbr.rel (%p558) target = $region68
        $region67: #{cct_forward.1} parent=11 // pred_region
          _
        $region68: #{cct_forward.1} parent=11 // pred_fallthru
          _
        // Predicated region
        $region69: #{cct_forward.1} parent=11 // pred_check
          %p561 = pneg %p373
        $region70: #{cct_forward.1} parent=11 // pred_check_branch
          %563 = sbr.rel (%p561) target = $region72
        $region71: #{cct_forward.1} parent=11 // pred_region
          _
        $region72: #{cct_forward.1} parent=11 // pred_fallthru
          _
        // Predicated region
        $region73: #{cct_forward.1} parent=11 // pred_check
          %p564 = pneg %p394
        $region74: #{cct_forward.1} parent=11 // pred_check_branch
          %566 = sbr.rel (%p564) target = $region76
        $region75: #{cct_forward.1} parent=11 // pred_region
          _
        $region76: #{cct_forward.1} parent=11 // pred_fallthru
          _
        // Predicated region
        $region77: #{cct_forward.1} parent=11 // pred_check
          %p567 = pneg %p415
        $region78: #{cct_forward.1} parent=11 // pred_check_branch
          %569 = sbr.rel (%p567) target = $region80
        $region79: #{cct_forward.1} parent=11 // pred_region
          _
        $region80: #{cct_forward.1} parent=11 // pred_fallthru
          _
        // Predicated region
        $region81: #{cct_forward.1} parent=11 // pred_check
          %p570 = pneg %p436
        $region82: #{cct_forward.1} parent=11 // pred_check_branch
          %572 = sbr.rel (%p570) target = $region84
        $region83: #{cct_forward.1} parent=11 // pred_region
          _
        $region84: #{cct_forward.1} parent=11 // pred_fallthru
          _
        // Predicated region
        $region85: #{cct_forward.1} parent=11 // pred_check
          %p573 = pneg %p457
        $region86: #{cct_forward.1} parent=11 // pred_check_branch
          %575 = sbr.rel (%p573) target = $region88
        $region87: #{cct_forward.1} parent=11 // pred_region
          _
        $region88: #{cct_forward.1} parent=11 // pred_fallthru
          _
        // Predicated region
        $region89: #{cct_forward.1} parent=11 // pred_check
          %p576 = pneg %p478
        $region90: #{cct_forward.1} parent=11 // pred_check_branch
          %578 = sbr.rel (%p576) target = $region92
        $region91: #{cct_forward.1} parent=11 // pred_region
          _
        $region92: #{cct_forward.1} parent=11 // pred_fallthru
          _
      $region12: #{cct_forward.1} parent=5 // pred_fallthru
        _
      %p579 = scmp.lt.s32.totalorder %s32, 2
      // Predicated region
      $region93: #{cct_forward.1} parent=5 // pred_check
        %p580 = pneg %p579
      $region94: #{cct_forward.1} parent=5 // pred_check_branch
        %582 = sbr.rel (%p580) target = $region96
      $region95: #{cct_forward.1} parent=5 // pred_region
        // Predicated region
        $region97: #{cct_forward.1} parent=95 // pred_check
          %p583 = pneg %p52
        $region98: #{cct_forward.1} parent=95 // pred_check_branch
          %585 = sbr.rel (%p583) target = $region100
        $region99: #{cct_forward.1} parent=95 // pred_region
          %p586 = scmp.lt.s32.totalorder %s32, 1
          %s587 = scalar_select %p586, %s32, 1
          %s588 = smul.addr %s587, 32
          %s589 = smul.addr %s588, 4
          %s590 = scalar_lea.vmem %s0, %s589
        $region100: #{cct_forward.1} parent=95 // pred_fallthru
          _
      $region96: #{cct_forward.1} parent=5 // pred_fallthru
        _
      %p591 = scmp.le.s32.totalorder 1, %s32
      %p592 = scmp.lt.s32.totalorder %s32, 3
      %p593 = pnand %p591, %p592
      %p594 = pneg %p593
      // Predicated region
      $region101: #{cct_forward.1} parent=5 // pred_check
        _
      $region102: #{cct_forward.1} parent=5 // pred_check_branch
        %596 = sbr.rel (%p593) target = $region104
      $region103: #{cct_forward.1} parent=5 // pred_region
        %s597 = ssub.s32 %s32, 1
        %p598 = scmp.lt.s32.totalorder %s37, 1
        %s599 = scalar_select %p598, %s37, 1
        %s600 = smul.addr %s599, 32
        %s601 = smul.addr %s600, 4
        %s602 = scalar_lea.vmem %s0, %s601
        %p603 = pneg %p58
        %p604 = pneg %p55
        %p605 = pneg %p79
        %p606 = pneg %p76
        %p607 = pneg %p100
        %p608 = pneg %p97
        %p609 = pneg %p121
        %p610 = pneg %p118
        %p611 = pneg %p142
        %p612 = pneg %p139
        %p613 = pneg %p163
        %p614 = pneg %p160
        %p615 = pneg %p184
        %p616 = pneg %p181
        %p617 = pneg %p205
        %p618 = pneg %p202
        %p619 = pneg %p226
        %p620 = pneg %p223
        %p621 = pneg %p247
        %p622 = pneg %p244
        %p623 = pneg %p268
        %p624 = pneg %p265
        %p625 = pneg %p289
        %p626 = pneg %p286
        %p627 = pneg %p310
        %p628 = pneg %p307
        %p629 = pneg %p331
        %p630 = pneg %p328
        %p631 = pneg %p352
        %p632 = pneg %p349
        %p633 = pneg %p373
        %p634 = pneg %p370
        %p635 = pneg %p394
        %p636 = pneg %p391
        %p637 = pneg %p415
        %p638 = pneg %p412
        %p639 = pneg %p436
        %p640 = pneg %p433
        %p641 = pneg %p457
        %p642 = pneg %p454
        %p643 = pneg %p478
        %p644 = pneg %p475
        %p645 = pneg %p504
        %p646 = pneg %p501
        %s647 = sand.u32 %s491, 1
        %s648 = scalar_lea.sflag [#allocation7], %s647
        %s649 = sand.u32 %s491, 1
        %s650 = scalar_lea.vmem [#allocation6], %s649
        %p651 = scmp.lt.s32.totalorder %s37, 1
        %s652 = scalar_select %p651, %s37, 1
        %s653 = smul.addr %s652, 32
        %s654 = smul.addr %s653, 4
        %s655 = scalar_lea.vmem %s0, %s654
        %v657 = vld [vmem:[%s655] sm:$0xf]
        %v658 = vld [vmem:[%s655 + $0x4] sm:$0xf]
        %v659 = vld [vmem:[%s655 + $0x8] sm:$0xf]
        %v660 = vld [vmem:[%s655 + $0xc] sm:$0xf]
        %v661 = vld [vmem:[%s655 + $0x10] sm:$0xf]
        %v662 = vld [vmem:[%s655 + $0x14] sm:$0xf]
        %v663 = vld [vmem:[%s655 + $0x18] sm:$0xf]
        %v664 = vld [vmem:[%s655 + $0x1c] sm:$0xf]
        %v665 = vld [vmem:[%s655 + $0x20] sm:$0xf]
        %v666 = vld [vmem:[%s655 + $0x24] sm:$0xf]
        %v667 = vld [vmem:[%s655 + $0x28] sm:$0xf]
        %v668 = vld [vmem:[%s655 + $0x2c] sm:$0xf]
        %v669 = vld [vmem:[%s655 + $0x30] sm:$0xf]
        %v670 = vld [vmem:[%s655 + $0x34] sm:$0xf]
        %v671 = vld [vmem:[%s655 + $0x38] sm:$0xf]
        %v672 = vld [vmem:[%s655 + $0x3c] sm:$0xf]
        %v673 = vld [vmem:[%s655 + $0x40] sm:$0xf]
        %v674 = vld [vmem:[%s655 + $0x44] sm:$0xf]
        %v675 = vld [vmem:[%s655 + $0x48] sm:$0xf]
        %v676 = vld [vmem:[%s655 + $0x4c] sm:$0xf]
        %v677 = vld [vmem:[%s655 + $0x50] sm:$0xf]
        %v678 = vld [vmem:[%s655 + $0x54] sm:$0xf]
        %v679 = vld [vmem:[%s655 + $0x58] sm:$0xf]
        %v680 = vld [vmem:[%s655 + $0x5c] sm:$0xf]
        %v681 = vld [vmem:[%s655 + $0x60] sm:$0xf]
        %v682 = vld [vmem:[%s655 + $0x64] sm:$0xf]
        %v683 = vld [vmem:[%s655 + $0x68] sm:$0xf]
        %v684 = vld [vmem:[%s655 + $0x6c] sm:$0xf]
        %v685 = vld [vmem:[%s655 + $0x70] sm:$0xf]
        %v686 = vld [vmem:[%s655 + $0x74] sm:$0xf]
        %v687 = vld [vmem:[%s655 + $0x78] sm:$0xf]
        %v688 = vld [vmem:[%s655 + $0x7c] sm:$0xf]
        %v689 = vld [vmem:[%s2] sm:$0xf]
        %v690 = vld [vmem:[%s2 + $0x4] sm:$0xf]
        %v691 = vld [vmem:[%s2 + $0x8] sm:$0xf]
        %v692 = vld [vmem:[%s2 + $0xc] sm:$0xf]
        %v725 = vunpack.c.l.b16 %v657
        %v726 = vunpack.c.l.b16 %v658
        %v727 = vunpack.c.l.b16 %v659
        %v728 = vunpack.c.l.b16 %v660
        %v729 = vunpack.c.l.b16 %v661
        %v730 = vunpack.c.l.b16 %v662
        %v731 = vunpack.c.l.b16 %v663
        %v732 = vunpack.c.l.b16 %v664
        %v733 = vunpack.c.l.b16 %v665
        %v734 = vunpack.c.l.b16 %v666
        %v735 = vunpack.c.l.b16 %v667
        %v736 = vunpack.c.l.b16 %v668
        %v737 = vunpack.c.l.b16 %v669
        %v738 = vunpack.c.l.b16 %v670
        %v739 = vunpack.c.l.b16 %v671
        %v740 = vunpack.c.l.b16 %v672
        %v741 = vunpack.c.l.b16 %v673
        %v742 = vunpack.c.l.b16 %v674
        %v743 = vunpack.c.l.b16 %v675
        %v744 = vunpack.c.l.b16 %v676
        %v745 = vunpack.c.l.b16 %v677
        %v746 = vunpack.c.l.b16 %v678
        %v747 = vunpack.c.l.b16 %v679
        %v748 = vunpack.c.l.b16 %v680
        %v749 = vunpack.c.l.b16 %v681
        %v750 = vunpack.c.l.b16 %v682
        %v751 = vunpack.c.l.b16 %v683
        %v752 = vunpack.c.l.b16 %v684
        %v753 = vunpack.c.l.b16 %v685
        %v754 = vunpack.c.l.b16 %v686
        %v755 = vunpack.c.l.b16 %v687
        %v756 = vunpack.c.l.b16 %v688
        %v757 = vpack.c.b16 %v726, %v725
        %v758 = vpack.c.b16 %v728, %v727
        %v759 = vpack.c.b16 %v730, %v729
        %v760 = vpack.c.b16 %v732, %v731
        %v761 = vpack.c.b16 %v734, %v733
        %v762 = vpack.c.b16 %v736, %v735
        %v763 = vpack.c.b16 %v738, %v737
        %v764 = vpack.c.b16 %v740, %v739
        %v765 = vpack.c.b16 %v742, %v741
        %v766 = vpack.c.b16 %v744, %v743
        %v767 = vpack.c.b16 %v746, %v745
        %v768 = vpack.c.b16 %v748, %v747
        %v769 = vpack.c.b16 %v750, %v749
        %v770 = vpack.c.b16 %v752, %v751
        %v771 = vpack.c.b16 %v754, %v753
        %v772 = vpack.c.b16 %v756, %v755
        %v777 = vunpack.c.l.b16 %v689
        %v778 = vunpack.c.l.b16 %v690
        %v779 = vunpack.c.l.b16 %v691
        %v780 = vunpack.c.l.b16 %v692
        %v781 = vpack.c.b16 %v778, %v777
        %v782 = vpack.c.b16 %v780, %v779
        %vm785 = vcmask 261120
        %v787 = vsel %vm785, %v757, 0
        %v790 = vsel %vm785, %v758, 0
        %v793 = vsel %vm785, %v759, 0
        %v796 = vsel %vm785, %v760, 0
        %v799 = vsel %vm785, %v761, 0
        %v802 = vsel %vm785, %v762, 0
        %v805 = vsel %vm785, %v763, 0
        %v808 = vsel %vm785, %v764, 0
        %v811 = vsel %vm785, %v765, 0
        %v814 = vsel %vm785, %v766, 0
        %v817 = vsel %vm785, %v767, 0
        %v820 = vsel %vm785, %v768, 0
        %v823 = vsel %vm785, %v769, 0
        %v826 = vsel %vm785, %v770, 0
        %v829 = vsel %vm785, %v771, 0
        %v832 = vsel %vm785, %v772, 0
        %834 = vmatprep.subr.bf16.mxu0 0
        %835 = vmatpush1.bf16.msra.mxu0 %v781
        %836 = vmatprep.subr.bf16.mxu0 0
        %837 = vmatpush1.bf16.msra.mxu0 %v782
        %838 = vmatprep.subr.bf16.mxu0 0
        %839 = vmatpush1.bf16.msra.mxu0 0
        %840 = vmatprep.subr.bf16.mxu0 0
        %841 = vmatpush1.bf16.msra.mxu0 0
        %842 = vmatprep.subr.bf16.mxu0 0
        %843 = vmatpush1.bf16.msra.mxu0 0
        %844 = vmatprep.subr.bf16.mxu0 0
        %845 = vmatpush1.bf16.msra.mxu0 0
        %846 = vmatprep.subr.bf16.mxu0 0
        %847 = vmatpush1.bf16.msra.mxu0 0
        %848 = vmatprep.subr.bf16.mxu0 0
        %849 = vmatpush1.bf16.msra.mxu0 0
        %850 = vmatprep.subr.bf16.mxu0 0
        %851 = vmatpush1.bf16.msra.mxu0 0
        %852 = vmatprep.subr.bf16.mxu0 0
        %853 = vmatpush1.bf16.msra.mxu0 0
        %854 = vmatprep.subr.bf16.mxu0 0
        %855 = vmatpush1.bf16.msra.mxu0 0
        %856 = vmatprep.subr.bf16.mxu0 0
        %857 = vmatpush1.bf16.msra.mxu0 0
        %858 = vmatprep.subr.bf16.mxu0 0
        %859 = vmatpush1.bf16.msra.mxu0 0
        %860 = vmatprep.subr.bf16.mxu0 0
        %861 = vmatpush1.bf16.msra.mxu0 0
        %862 = vmatprep.subr.bf16.mxu0 0
        %863 = vmatpush1.bf16.msra.mxu0 0
        %864 = vmatprep.subr.bf16.mxu0 0
        %865 = vmatpush1.bf16.msra.mxu0 0
        %866 = vmatprep.mubr.bf16.mxu0 0
        %867 = vmatmul.mubr.bf16.gmra.mrb[0].mxu0 %v787
        %v868 = vpop.f32.mrb[0].mxu0
        %v869 = vadd.f32 0.0, %v868
        %v870 = vpop.f32.mrb[0].mxu0
        %v871 = vpop.f32.mrb[0].mxu0
        %v872 = vadd.f32 0.0, %v871
        %v873 = vpop.f32.mrb[0].mxu0
        %874 = vmatprep.mubr.bf16.mxu0 0
        %875 = vmatmul.mubr.bf16.gmra.mrb[0].mxu0 %v790
        %v876 = vpop.f32.mrb[0].mxu0
        %v877 = vadd.f32 0.0, %v876
        %v878 = vpop.f32.mrb[0].mxu0
        %v879 = vpop.f32.mrb[0].mxu0
        %v880 = vadd.f32 0.0, %v879
        %v881 = vpop.f32.mrb[0].mxu0
        %882 = vmatprep.mubr.bf16.mxu0 0
        %883 = vmatmul.mubr.bf16.gmra.mrb[0].mxu0 %v793
        %v884 = vpop.f32.mrb[0].mxu0
        %v885 = vadd.f32 0.0, %v884
        %v886 = vpop.f32.mrb[0].mxu0
        %v887 = vpop.f32.mrb[0].mxu0
        %v888 = vadd.f32 0.0, %v887
        %v889 = vpop.f32.mrb[0].mxu0
        %890 = vmatprep.mubr.bf16.mxu0 0
        %891 = vmatmul.mubr.bf16.gmra.mrb[0].mxu0 %v796
        %v892 = vpop.f32.mrb[0].mxu0
        %v893 = vadd.f32 0.0, %v892
        %v894 = vpop.f32.mrb[0].mxu0
        %v895 = vpop.f32.mrb[0].mxu0
        %v896 = vadd.f32 0.0, %v895
        %v897 = vpop.f32.mrb[0].mxu0
        %898 = vmatprep.mubr.bf16.mxu0 0
        %899 = vmatmul.mubr.bf16.gmra.mrb[0].mxu0 %v799
        %v900 = vpop.f32.mrb[0].mxu0
        %v901 = vadd.f32 0.0, %v900
        %v902 = vpop.f32.mrb[0].mxu0
        %v903 = vpop.f32.mrb[0].mxu0
        %v904 = vadd.f32 0.0, %v903
        %v905 = vpop.f32.mrb[0].mxu0
        %906 = vmatprep.mubr.bf16.mxu0 0
        %907 = vmatmul.mubr.bf16.gmra.mrb[0].mxu0 %v802
        %v908 = vpop.f32.mrb[0].mxu0
        %v909 = vadd.f32 0.0, %v908
        %v910 = vpop.f32.mrb[0].mxu0
        %v911 = vpop.f32.mrb[0].mxu0
        %v912 = vadd.f32 0.0, %v911
        %v913 = vpop.f32.mrb[0].mxu0
        %914 = vmatprep.mubr.bf16.mxu0 0
        %915 = vmatmul.mubr.bf16.gmra.mrb[0].mxu0 %v805
        %v916 = vpop.f32.mrb[0].mxu0
        %v917 = vadd.f32 0.0, %v916
        %v918 = vpop.f32.mrb[0].mxu0
        %v919 = vpop.f32.mrb[0].mxu0
        %v920 = vadd.f32 0.0, %v919
        %v921 = vpop.f32.mrb[0].mxu0
        %922 = vmatprep.mubr.bf16.mxu0 0
        %923 = vmatmul.mubr.bf16.gmra.mrb[0].mxu0 %v808
        %v924 = vpop.f32.mrb[0].mxu0
        %v925 = vadd.f32 0.0, %v924
        %v926 = vpop.f32.mrb[0].mxu0
        %v927 = vpop.f32.mrb[0].mxu0
        %v928 = vadd.f32 0.0, %v927
        %v929 = vpop.f32.mrb[0].mxu0
        %930 = vmatprep.mubr.bf16.mxu0 0
        %931 = vmatmul.mubr.bf16.gmra.mrb[0].mxu0 %v811
        %v932 = vpop.f32.mrb[0].mxu0
        %v933 = vadd.f32 0.0, %v932
        %v934 = vpop.f32.mrb[0].mxu0
        %v935 = vpop.f32.mrb[0].mxu0
        %v936 = vadd.f32 0.0, %v935
        %v937 = vpop.f32.mrb[0].mxu0
        %938 = vmatprep.mubr.bf16.mxu0 0
        %939 = vmatmul.mubr.bf16.gmra.mrb[0].mxu0 %v814
        %v940 = vpop.f32.mrb[0].mxu0
        %v941 = vadd.f32 0.0, %v940
        %v942 = vpop.f32.mrb[0].mxu0
        %v943 = vpop.f32.mrb[0].mxu0
        %v944 = vadd.f32 0.0, %v943
        %v945 = vpop.f32.mrb[0].mxu0
        %946 = vmatprep.mubr.bf16.mxu0 0
        %947 = vmatmul.mubr.bf16.gmra.mrb[0].mxu0 %v817
        %v948 = vpop.f32.mrb[0].mxu0
        %v949 = vadd.f32 0.0, %v948
        %v950 = vpop.f32.mrb[0].mxu0
        %v951 = vpop.f32.mrb[0].mxu0
        %v952 = vadd.f32 0.0, %v951
        %v953 = vpop.f32.mrb[0].mxu0
        %954 = vmatprep.mubr.bf16.mxu0 0
        %955 = vmatmul.mubr.bf16.gmra.mrb[0].mxu0 %v820
        %v956 = vpop.f32.mrb[0].mxu0
        %v957 = vadd.f32 0.0, %v956
        %v958 = vpop.f32.mrb[0].mxu0
        %v959 = vpop.f32.mrb[0].mxu0
        %v960 = vadd.f32 0.0, %v959
        %v961 = vpop.f32.mrb[0].mxu0
        %962 = vmatprep.mubr.bf16.mxu0 0
        %963 = vmatmul.mubr.bf16.gmra.mrb[0].mxu0 %v823
        %v964 = vpop.f32.mrb[0].mxu0
        %v965 = vadd.f32 0.0, %v964
        %v966 = vpop.f32.mrb[0].mxu0
        %v967 = vpop.f32.mrb[0].mxu0
        %v968 = vadd.f32 0.0, %v967
        %v969 = vpop.f32.mrb[0].mxu0
        %970 = vmatprep.mubr.bf16.mxu0 0
        %971 = vmatmul.mubr.bf16.gmra.mrb[0].mxu0 %v826
        %v972 = vpop.f32.mrb[0].mxu0
        %v973 = vadd.f32 0.0, %v972
        %v974 = vpop.f32.mrb[0].mxu0
        %v975 = vpop.f32.mrb[0].mxu0
        %v976 = vadd.f32 0.0, %v975
        %v977 = vpop.f32.mrb[0].mxu0
        %978 = vmatprep.mubr.bf16.mxu0 0
        %979 = vmatmul.mubr.bf16.gmra.mrb[0].mxu0 %v829
        %v980 = vpop.f32.mrb[0].mxu0
        %v981 = vadd.f32 0.0, %v980
        %v982 = vpop.f32.mrb[0].mxu0
        %v983 = vpop.f32.mrb[0].mxu0
        %v984 = vadd.f32 0.0, %v983
        %v985 = vpop.f32.mrb[0].mxu0
        %986 = vmatprep.mubr.bf16.mxu0 0
        %987 = vmatmul.mubr.bf16.gmra.mrb[0].mxu0 %v832
        %v988 = vpop.f32.mrb[0].mxu0
        %v989 = vadd.f32 0.0, %v988
        %v990 = vpop.f32.mrb[0].mxu0
        %v991 = vpop.f32.mrb[0].mxu0
        %v992 = vadd.f32 0.0, %v991
        %v993 = vpop.f32.mrb[0].mxu0
        %994 = vdwg.mxu0
        %v995 = vmax.f32 %v869, 0.0
        %v996 = vmax.f32 %v872, 0.0
        %v997 = vmax.f32 %v877, 0.0
        %v998 = vmax.f32 %v880, 0.0
        %v999 = vmax.f32 %v885, 0.0
        %v1000 = vmax.f32 %v888, 0.0
        %v1001 = vmax.f32 %v893, 0.0
        %v1002 = vmax.f32 %v896, 0.0
        %v1003 = vmax.f32 %v901, 0.0
        %v1004 = vmax.f32 %v904, 0.0
        %v1005 = vmax.f32 %v909, 0.0
        %v1006 = vmax.f32 %v912, 0.0
        %v1007 = vmax.f32 %v917, 0.0
        %v1008 = vmax.f32 %v920, 0.0
        %v1009 = vmax.f32 %v925, 0.0
        %v1010 = vmax.f32 %v928, 0.0
        %v1011 = vmax.f32 %v933, 0.0
        %v1012 = vmax.f32 %v936, 0.0
        %v1013 = vmax.f32 %v941, 0.0
        %v1014 = vmax.f32 %v944, 0.0
        %v1015 = vmax.f32 %v949, 0.0
        %v1016 = vmax.f32 %v952, 0.0
        %v1017 = vmax.f32 %v957, 0.0
        %v1018 = vmax.f32 %v960, 0.0
        %v1019 = vmax.f32 %v965, 0.0
        %v1020 = vmax.f32 %v968, 0.0
        %v1021 = vmax.f32 %v973, 0.0
        %v1022 = vmax.f32 %v976, 0.0
        %v1023 = vmax.f32 %v981, 0.0
        %v1024 = vmax.f32 %v984, 0.0
        %v1025 = vmax.f32 %v989, 0.0
        %v1026 = vmax.f32 %v992, 0.0
        %v1027 = vmax.f32 %v995, %v1003
        %v1028 = vmax.f32 %v996, %v1004
        %v1029 = vmax.f32 %v997, %v1005
        %v1030 = vmax.f32 %v998, %v1006
        %v1031 = vmax.f32 %v999, %v1007
        %v1032 = vmax.f32 %v1000, %v1008
        %v1033 = vmax.f32 %v1001, %v1009
        %v1034 = vmax.f32 %v1002, %v1010
        %v1035 = vmax.f32 %v1011, %v1019
        %v1036 = vmax.f32 %v1012, %v1020
        %v1037 = vmax.f32 %v1013, %v1021
        %v1038 = vmax.f32 %v1014, %v1022
        %v1039 = vmax.f32 %v1015, %v1023
        %v1040 = vmax.f32 %v1016, %v1024
        %v1041 = vmax.f32 %v1017, %v1025
        %v1042 = vmax.f32 %v1018, %v1026
        %v1043 = vmax.f32 %v1027, %v1035
        %v1044 = vmax.f32 %v1028, %v1036
        %v1045 = vmax.f32 %v1029, %v1037
        %v1046 = vmax.f32 %v1030, %v1038
        %v1047 = vmax.f32 %v1031, %v1039
        %v1048 = vmax.f32 %v1032, %v1040
        %v1049 = vmax.f32 %v1033, %v1041
        %v1050 = vmax.f32 %v1034, %v1042
        %1051 = vst.msk [vmem:[#allocation2] sm:$0xff] %vm785, 0.0
        %1052 = vst.msk [vmem:[#allocation2 + $0x8] sm:$0xff] %vm785, 0.0
        %1053 = vst.msk [vmem:[#allocation2 + $0x10] sm:$0xff] %vm785, 0.0
        %1054 = vst.msk [vmem:[#allocation2 + $0x18] sm:$0xff] %vm785, 0.0
        %1055 = vst.msk [vmem:[#allocation2 + $0x20] sm:$0xff] %vm785, 0.0
        %1056 = vst.msk [vmem:[#allocation2 + $0x28] sm:$0xff] %vm785, 0.0
        %1057 = vst.msk [vmem:[#allocation2 + $0x30] sm:$0xff] %vm785, 0.0
        %1058 = vst.msk [vmem:[#allocation2 + $0x38] sm:$0xff] %vm785, 0.0
        %1059 = vst.msk [vmem:[#allocation2 + $0x40] sm:$0xff] %vm785, 0.0
        %1060 = vst.msk [vmem:[#allocation2 + $0x48] sm:$0xff] %vm785, 0.0
        %1061 = vst.msk [vmem:[#allocation2 + $0x50] sm:$0xff] %vm785, 0.0
        %1062 = vst.msk [vmem:[#allocation2 + $0x58] sm:$0xff] %vm785, 0.0
        %1063 = vst.msk [vmem:[#allocation2 + $0x60] sm:$0xff] %vm785, 0.0
        %1064 = vst.msk [vmem:[#allocation2 + $0x68] sm:$0xff] %vm785, 0.0
        %1065 = vst.msk [vmem:[#allocation2 + $0x70] sm:$0xff] %vm785, 0.0
        %1066 = vst.msk [vmem:[#allocation2 + $0xb] sm:$0xff] %vm785, %v1043
        %1067 = vst.msk [vmem:[#allocation2 + $0x15] sm:$0xff] %vm785, %v1044
        %1068 = vst.msk [vmem:[#allocation2 + $0x1f] sm:$0xff] %vm785, %v1045
        %1069 = vst.msk [vmem:[#allocation2 + $0x29] sm:$0xff] %vm785, %v1046
        %1070 = vst.msk [vmem:[#allocation2 + $0x33] sm:$0xff] %vm785, %v1047
        %1071 = vst.msk [vmem:[#allocation2 + $0x3d] sm:$0xff] %vm785, %v1048
        %1072 = vst.msk [vmem:[#allocation2 + $0x47] sm:$0xff] %vm785, %v1049
        %1073 = vst.msk [vmem:[#allocation2 + $0x51] sm:$0xff] %vm785, %v1050
        %v1074 = vld [vmem:[#allocation2] ss:$2 sm:$0xff]
        %s1075 = scalar_lea.vmem [#allocation2], 16
        %v1076 = vld [vmem:[%s1075] ss:$2 sm:$0xff]
        %s1077 = scalar_lea.vmem [#allocation2], 32
        %v1078 = vld [vmem:[%s1077] ss:$2 sm:$0xff]
        %s1079 = scalar_lea.vmem [#allocation2], 48
        %v1080 = vld [vmem:[%s1079] ss:$2 sm:$0xff]
        %s1081 = scalar_lea.vmem [#allocation2], 64
        %v1082 = vld [vmem:[%s1081] ss:$2 sm:$0xff]
        %s1083 = scalar_lea.vmem [#allocation2], 1
        %v1084 = vld [vmem:[%s1083] ss:$2 sm:$0xff]
        %s1085 = scalar_lea.vmem [#allocation2], 17
        %v1086 = vld [vmem:[%s1085] ss:$2 sm:$0xff]
        %s1087 = scalar_lea.vmem [#allocation2], 33
        %v1088 = vld [vmem:[%s1087] ss:$2 sm:$0xff]
        %s1089 = scalar_lea.vmem [#allocation2], 49
        %v1090 = vld [vmem:[%s1089] ss:$2 sm:$0xff]
        %s1091 = scalar_lea.vmem [#allocation2], 65
        %v1092 = vld [vmem:[%s1091] ss:$2 sm:$0xff]
        %s1093 = scalar_lea.vmem [#allocation2], 10
        %v1094 = vld [vmem:[%s1093] ss:$2 sm:$0xff]
        %s1095 = scalar_lea.vmem [#allocation2], 26
        %v1096 = vld [vmem:[%s1095] ss:$2 sm:$0xff]
        %s1097 = scalar_lea.vmem [#allocation2], 42
        %v1098 = vld [vmem:[%s1097] ss:$2 sm:$0xff]
        %s1099 = scalar_lea.vmem [#allocation2], 58
        %v1100 = vld [vmem:[%s1099] ss:$2 sm:$0xff]
        %s1101 = scalar_lea.vmem [#allocation2], 74
        %v1102 = vld [vmem:[%s1101] ss:$2 sm:$0xff]
        %s1103 = scalar_lea.vmem [#allocation2], 11
        %v1104 = vld [vmem:[%s1103] ss:$2 sm:$0xff]
        %s1105 = scalar_lea.vmem [#allocation2], 27
        %v1106 = vld [vmem:[%s1105] ss:$2 sm:$0xff]
        %s1107 = scalar_lea.vmem [#allocation2], 43
        %v1108 = vld [vmem:[%s1107] ss:$2 sm:$0xff]
        %s1109 = scalar_lea.vmem [#allocation2], 59
        %v1110 = vld [vmem:[%s1109] ss:$2 sm:$0xff]
        %s1111 = scalar_lea.vmem [#allocation2], 75
        %v1112 = vld [vmem:[%s1111] ss:$2 sm:$0xff]
        %v1113 = vpack.c.bf16 %v1076, %v1074
        %v1114 = vpack.c.bf16 %v1080, %v1078
        %v1115 = vpack.c.bf16 %v1084, %v1082
        %v1116 = vpack.c.bf16 %v1088, %v1086
        %v1117 = vpack.c.bf16 %v1092, %v1090
        %v1118 = vpack.c.bf16 %v1096, %v1094
        %v1119 = vpack.c.bf16 %v1100, %v1098
        %v1120 = vpack.c.bf16 %v1104, %v1102
        %v1121 = vpack.c.bf16 %v1108, %v1106
        %v1122 = vpack.c.bf16 %v1112, %v1110
        %v1123 = vld [vmem:[%s3] sm:$0xf]
        %v1124 = vld [vmem:[%s3 + $0x4] sm:$0xf]
        %v1125 = vld [vmem:[%s3 + $0x8] sm:$0xf]
        %v1126 = vld [vmem:[%s3 + $0xc] sm:$0xf]
        %s1127 = scalar_lea.vmem [#allocation2], 2
        %v1128 = vld [vmem:[%s1127] ss:$2 sm:$0xff]
        %s1129 = scalar_lea.vmem [#allocation2], 18
        %v1130 = vld [vmem:[%s1129] ss:$2 sm:$0xff]
        %s1131 = scalar_lea.vmem [#allocation2], 34
        %v1132 = vld [vmem:[%s1131] ss:$2 sm:$0xff]
        %s1133 = scalar_lea.vmem [#allocation2], 50
        %v1134 = vld [vmem:[%s1133] ss:$2 sm:$0xff]
        %s1135 = scalar_lea.vmem [#allocation2], 66
        %v1136 = vld [vmem:[%s1135] ss:$2 sm:$0xff]
        %s1137 = scalar_lea.vmem [#allocation2], 12
        %v1138 = vld [vmem:[%s1137] ss:$2 sm:$0xff]
        %s1139 = scalar_lea.vmem [#allocation2], 28
        %v1140 = vld [vmem:[%s1139] ss:$2 sm:$0xff]
        %s1141 = scalar_lea.vmem [#allocation2], 44
        %v1142 = vld [vmem:[%s1141] ss:$2 sm:$0xff]
        %s1143 = scalar_lea.vmem [#allocation2], 60
        %v1144 = vld [vmem:[%s1143] ss:$2 sm:$0xff]
        %s1145 = scalar_lea.vmem [#allocation2], 76
        %v1146 = vld [vmem:[%s1145] ss:$2 sm:$0xff]
        %v1147 = vpack.c.bf16 %v1086, %v1084
        %v1148 = vpack.c.bf16 %v1090, %v1088
        %v1149 = vpack.c.bf16 %v1128, %v1092
        %v1150 = vpack.c.bf16 %v1132, %v1130
        %v1151 = vpack.c.bf16 %v1136, %v1134
        %v1152 = vpack.c.bf16 %v1106, %v1104
        %v1153 = vpack.c.bf16 %v1110, %v1108
        %v1154 = vpack.c.bf16 %v1138, %v1112
        %v1155 = vpack.c.bf16 %v1142, %v1140
        %v1156 = vpack.c.bf16 %v1146, %v1144
        %s1157 = scalar_lea.vmem %s3, 16
        %v1158 = vld [vmem:[%s1157] sm:$0xf]
        %v1159 = vld [vmem:[%s1157 + $0x4] sm:$0xf]
        %v1160 = vld [vmem:[%s1157 + $0x8] sm:$0xf]
        %v1161 = vld [vmem:[%s1157 + $0xc] sm:$0xf]
        %v1166 = vunpack.c.l.b16 %v1158
        %v1167 = vunpack.c.l.b16 %v1159
        %v1168 = vunpack.c.l.b16 %v1160
        %v1169 = vunpack.c.l.b16 %v1161
        %v1170 = vpack.c.b16 %v1167, %v1166
        %v1171 = vpack.c.b16 %v1169, %v1168
        %v1175 = vsel %vm785, %v1147, 0
        %v1178 = vsel %vm785, %v1148, 0
        %v1181 = vsel %vm785, %v1149, 0
        %v1184 = vsel %vm785, %v1150, 0
        %v1187 = vsel %vm785, %v1151, 0
        %v1190 = vsel %vm785, %v1152, 0
        %v1193 = vsel %vm785, %v1153, 0
        %v1196 = vsel %vm785, %v1154, 0
        %v1199 = vsel %vm785, %v1155, 0
        %v1202 = vsel %vm785, %v1156, 0
        %1204 = vmatprep.subr.bf16.mxu0 0
        %1205 = vmatpush1.bf16.msra.mxu0 %v1170
        %1206 = vmatprep.subr.bf16.mxu0 0
        %1207 = vmatpush1.bf16.msra.mxu0 %v1171
        %1208 = vmatprep.subr.bf16.mxu0 0
        %1209 = vmatpush1.bf16.msra.mxu0 0
        %1210 = vmatprep.subr.bf16.mxu0 0
        %1211 = vmatpush1.bf16.msra.mxu0 0
        %1212 = vmatprep.subr.bf16.mxu0 0
        %1213 = vmatpush1.bf16.msra.mxu0 0
        %1214 = vmatprep.subr.bf16.mxu0 0
        %1215 = vmatpush1.bf16.msra.mxu0 0
        %1216 = vmatprep.subr.bf16.mxu0 0
        %1217 = vmatpush1.bf16.msra.mxu0 0
        %1218 = vmatprep.subr.bf16.mxu0 0
        %1219 = vmatpush1.bf16.msra.mxu0 0
        %1220 = vmatprep.subr.bf16.mxu0 0
        %1221 = vmatpush1.bf16.msra.mxu0 0
        %1222 = vmatprep.subr.bf16.mxu0 0
        %1223 = vmatpush1.bf16.msra.mxu0 0
        %1224 = vmatprep.subr.bf16.mxu0 0
        %1225 = vmatpush1.bf16.msra.mxu0 0
        %1226 = vmatprep.subr.bf16.mxu0 0
        %1227 = vmatpush1.bf16.msra.mxu0 0
        %1228 = vmatprep.subr.bf16.mxu0 0
        %1229 = vmatpush1.bf16.msra.mxu0 0
        %1230 = vmatprep.subr.bf16.mxu0 0
        %1231 = vmatpush1.bf16.msra.mxu0 0
        %1232 = vmatprep.subr.bf16.mxu0 0
        %1233 = vmatpush1.bf16.msra.mxu0 0
        %1234 = vmatprep.subr.bf16.mxu0 0
        %1235 = vmatpush1.bf16.msra.mxu0 0
        %1236 = vmatprep.mubr.bf16.mxu0 0
        %1237 = vmatmul.mubr.bf16.gmra.mrb[0].mxu0 %v1175
        %v1238 = vpop.f32.mrb[0].mxu0
        %v1239 = vadd.f32 0.0, %v1238
        %v1240 = vpop.f32.mrb[0].mxu0
        %v1241 = vpop.f32.mrb[0].mxu0
        %v1242 = vadd.f32 0.0, %v1241
        %v1243 = vpop.f32.mrb[0].mxu0
        %1244 = vmatprep.mubr.bf16.mxu0 0
        %1245 = vmatmul.mubr.bf16.gmra.mrb[0].mxu0 %v1178
        %v1246 = vpop.f32.mrb[0].mxu0
        %v1247 = vadd.f32 0.0, %v1246
        %v1248 = vpop.f32.mrb[0].mxu0
        %v1249 = vpop.f32.mrb[0].mxu0
        %v1250 = vadd.f32 0.0, %v1249
        %v1251 = vpop.f32.mrb[0].mxu0
        %1252 = vmatprep.mubr.bf16.mxu0 0
        %1253 = vmatmul.mubr.bf16.gmra.mrb[0].mxu0 %v1181
        %v1254 = vpop.f32.mrb[0].mxu0
        %v1255 = vadd.f32 0.0, %v1254
        %v1256 = vpop.f32.mrb[0].mxu0
        %v1257 = vpop.f32.mrb[0].mxu0
        %v1258 = vadd.f32 0.0, %v1257
        %v1259 = vpop.f32.mrb[0].mxu0
        %1260 = vmatprep.mubr.bf16.mxu0 0
        %1261 = vmatmul.mubr.bf16.gmra.mrb[0].mxu0 %v1184
        %v1262 = vpop.f32.mrb[0].mxu0
        %v1263 = vadd.f32 0.0, %v1262
        %v1264 = vpop.f32.mrb[0].mxu0
        %v1265 = vpop.f32.mrb[0].mxu0
        %v1266 = vadd.f32 0.0, %v1265
        %v1267 = vpop.f32.mrb[0].mxu0
        %1268 = vmatprep.mubr.bf16.mxu0 0
        %1269 = vmatmul.mubr.bf16.gmra.mrb[0].mxu0 %v1187
        %v1270 = vpop.f32.mrb[0].mxu0
        %v1271 = vadd.f32 0.0, %v1270
        %v1272 = vpop.f32.mrb[0].mxu0
        %v1273 = vpop.f32.mrb[0].mxu0
        %v1274 = vadd.f32 0.0, %v1273
        %v1275 = vpop.f32.mrb[0].mxu0
        %1276 = vmatprep.mubr.bf16.mxu0 0
        %1277 = vmatmul.mubr.bf16.gmra.mrb[0].mxu0 %v1190
        %v1278 = vpop.f32.mrb[0].mxu0
        %v1279 = vadd.f32 0.0, %v1278
        %v1280 = vpop.f32.mrb[0].mxu0
        %v1281 = vpop.f32.mrb[0].mxu0
        %v1282 = vadd.f32 0.0, %v1281
        %v1283 = vpop.f32.mrb[0].mxu0
        %1284 = vmatprep.mubr.bf16.mxu0 0
        %1285 = vmatmul.mubr.bf16.gmra.mrb[0].mxu0 %v1193
        %v1286 = vpop.f32.mrb[0].mxu0
        %v1287 = vadd.f32 0.0, %v1286
        %v1288 = vpop.f32.mrb[0].mxu0
        %v1289 = vpop.f32.mrb[0].mxu0
        %v1290 = vadd.f32 0.0, %v1289
        %v1291 = vpop.f32.mrb[0].mxu0
        %1292 = vmatprep.mubr.bf16.mxu0 0
        %1293 = vmatmul.mubr.bf16.gmra.mrb[0].mxu0 %v1196
        %v1294 = vpop.f32.mrb[0].mxu0
        %v1295 = vadd.f32 0.0, %v1294
        %v1296 = vpop.f32.mrb[0].mxu0
        %v1297 = vpop.f32.mrb[0].mxu0
        %v1298 = vadd.f32 0.0, %v1297
        %v1299 = vpop.f32.mrb[0].mxu0
        %1300 = vmatprep.mubr.bf16.mxu0 0
        %1301 = vmatmul.mubr.bf16.gmra.mrb[0].mxu0 %v1199
        %v1302 = vpop.f32.mrb[0].mxu0
        %v1303 = vadd.f32 0.0, %v1302
        %v1304 = vpop.f32.mrb[0].mxu0
        %v1305 = vpop.f32.mrb[0].mxu0
        %v1306 = vadd.f32 0.0, %v1305
        %v1307 = vpop.f32.mrb[0].mxu0
        %1308 = vmatprep.mubr.bf16.mxu0 0
        %1309 = vmatmul.mubr.bf16.gmra.mrb[0].mxu0 %v1202
        %v1310 = vpop.f32.mrb[0].mxu0
        %v1311 = vadd.f32 0.0, %v1310
        %v1312 = vpop.f32.mrb[0].mxu0
        %v1313 = vpop.f32.mrb[0].mxu0
        %v1314 = vadd.f32 0.0, %v1313
        %v1315 = vpop.f32.mrb[0].mxu0
        %1316 = vdwg.mxu0
        %v1321 = vunpack.c.l.b16 %v1123
        %v1322 = vunpack.c.l.b16 %v1124
        %v1323 = vunpack.c.l.b16 %v1125
        %v1324 = vunpack.c.l.b16 %v1126
        %v1325 = vpack.c.b16 %v1322, %v1321
        %v1326 = vpack.c.b16 %v1324, %v1323
        %v1330 = vsel %vm785, %v1113, 0
        %v1333 = vsel %vm785, %v1114, 0
        %v1336 = vsel %vm785, %v1115, 0
        %v1339 = vsel %vm785, %v1116, 0
        %v1342 = vsel %vm785, %v1117, 0
        %v1345 = vsel %vm785, %v1118, 0
        %v1348 = vsel %vm785, %v1119, 0
        %v1351 = vsel %vm785, %v1120, 0
        %v1354 = vsel %vm785, %v1121, 0
        %v1357 = vsel %vm785, %v1122, 0
        %1359 = vmatprep.subr.bf16.mxu0 0
        %1360 = vmatpush1.bf16.msra.mxu0 %v1325
        %1361 = vmatprep.subr.bf16.mxu0 0
        %1362 = vmatpush1.bf16.msra.mxu0 %v1326
        %1363 = vmatprep.subr.bf16.mxu0 0
        %1364 = vmatpush1.bf16.msra.mxu0 0
        %1365 = vmatprep.subr.bf16.mxu0 0
        %1366 = vmatpush1.bf16.msra.mxu0 0
        %1367 = vmatprep.subr.bf16.mxu0 0
        %1368 = vmatpush1.bf16.msra.mxu0 0
        %1369 = vmatprep.subr.bf16.mxu0 0
        %1370 = vmatpush1.bf16.msra.mxu0 0
        %1371 = vmatprep.subr.bf16.mxu0 0
        %1372 = vmatpush1.bf16.msra.mxu0 0
        %1373 = vmatprep.subr.bf16.mxu0 0
        %1374 = vmatpush1.bf16.msra.mxu0 0
        %1375 = vmatprep.subr.bf16.mxu0 0
        %1376 = vmatpush1.bf16.msra.mxu0 0
        %1377 = vmatprep.subr.bf16.mxu0 0
        %1378 = vmatpush1.bf16.msra.mxu0 0
        %1379 = vmatprep.subr.bf16.mxu0 0
        %1380 = vmatpush1.bf16.msra.mxu0 0
        %1381 = vmatprep.subr.bf16.mxu0 0
        %1382 = vmatpush1.bf16.msra.mxu0 0
        %1383 = vmatprep.subr.bf16.mxu0 0
        %1384 = vmatpush1.bf16.msra.mxu0 0
        %1385 = vmatprep.subr.bf16.mxu0 0
        %1386 = vmatpush1.bf16.msra.mxu0 0
        %1387 = vmatprep.subr.bf16.mxu0 0
        %1388 = vmatpush1.bf16.msra.mxu0 0
        %1389 = vmatprep.subr.bf16.mxu0 0
        %1390 = vmatpush1.bf16.msra.mxu0 0
        %1391 = vmatprep.mubr.bf16.mxu0 0
        %1392 = vmatmul.mubr.bf16.gmra.mrb[0].mxu0 %v1330
        %v1393 = vpop.f32.mrb[0].mxu0
        %v1394 = vadd.f32 %v1239, %v1393
        %v1395 = vpop.f32.mrb[0].mxu0
        %v1396 = vpop.f32.mrb[0].mxu0
        %v1397 = vadd.f32 %v1242, %v1396
        %v1398 = vpop.f32.mrb[0].mxu0
        %1399 = vmatprep.mubr.bf16.mxu0 0
        %1400 = vmatmul.mubr.bf16.gmra.mrb[0].mxu0 %v1333
        %v1401 = vpop.f32.mrb[0].mxu0
        %v1402 = vadd.f32 %v1247, %v1401
        %v1403 = vpop.f32.mrb[0].mxu0
        %v1404 = vpop.f32.mrb[0].mxu0
        %v1405 = vadd.f32 %v1250, %v1404
        %v1406 = vpop.f32.mrb[0].mxu0
        %1407 = vmatprep.mubr.bf16.mxu0 0
        %1408 = vmatmul.mubr.bf16.gmra.mrb[0].mxu0 %v1336
        %v1409 = vpop.f32.mrb[0].mxu0
        %v1410 = vadd.f32 %v1255, %v1409
        %v1411 = vpop.f32.mrb[0].mxu0
        %v1412 = vpop.f32.mrb[0].mxu0
        %v1413 = vadd.f32 %v1258, %v1412
        %v1414 = vpop.f32.mrb[0].mxu0
        %1415 = vmatprep.mubr.bf16.mxu0 0
        %1416 = vmatmul.mubr.bf16.gmra.mrb[0].mxu0 %v1339
        %v1417 = vpop.f32.mrb[0].mxu0
        %v1418 = vadd.f32 %v1263, %v1417
        %v1419 = vpop.f32.mrb[0].mxu0
        %v1420 = vpop.f32.mrb[0].mxu0
        %v1421 = vadd.f32 %v1266, %v1420
        %v1422 = vpop.f32.mrb[0].mxu0
        %1423 = vmatprep.mubr.bf16.mxu0 0
        %1424 = vmatmul.mubr.bf16.gmra.mrb[0].mxu0 %v1342
        %v1425 = vpop.f32.mrb[0].mxu0
        %v1426 = vadd.f32 %v1271, %v1425
        %v1427 = vpop.f32.mrb[0].mxu0
        %v1428 = vpop.f32.mrb[0].mxu0
        %v1429 = vadd.f32 %v1274, %v1428
        %v1430 = vpop.f32.mrb[0].mxu0
        %1431 = vmatprep.mubr.bf16.mxu0 0
        %1432 = vmatmul.mubr.bf16.gmra.mrb[0].mxu0 %v1345
        %v1433 = vpop.f32.mrb[0].mxu0
        %v1434 = vadd.f32 %v1279, %v1433
        %v1435 = vpop.f32.mrb[0].mxu0
        %v1436 = vpop.f32.mrb[0].mxu0
        %v1437 = vadd.f32 %v1282, %v1436
        %v1438 = vpop.f32.mrb[0].mxu0
        %1439 = vmatprep.mubr.bf16.mxu0 0
        %1440 = vmatmul.mubr.bf16.gmra.mrb[0].mxu0 %v1348
        %v1441 = vpop.f32.mrb[0].mxu0
        %v1442 = vadd.f32 %v1287, %v1441
        %v1443 = vpop.f32.mrb[0].mxu0
        %v1444 = vpop.f32.mrb[0].mxu0
        %v1445 = vadd.f32 %v1290, %v1444
        %v1446 = vpop.f32.mrb[0].mxu0
        %1447 = vmatprep.mubr.bf16.mxu0 0
        %1448 = vmatmul.mubr.bf16.gmra.mrb[0].mxu0 %v1351
        %v1449 = vpop.f32.mrb[0].mxu0
        %v1450 = vadd.f32 %v1295, %v1449
        %v1451 = vpop.f32.mrb[0].mxu0
        %v1452 = vpop.f32.mrb[0].mxu0
        %v1453 = vadd.f32 %v1298, %v1452
        %v1454 = vpop.f32.mrb[0].mxu0
        %1455 = vmatprep.mubr.bf16.mxu0 0
        %1456 = vmatmul.mubr.bf16.gmra.mrb[0].mxu0 %v1354
        %v1457 = vpop.f32.mrb[0].mxu0
        %v1458 = vadd.f32 %v1303, %v1457
        %v1459 = vpop.f32.mrb[0].mxu0
        %v1460 = vpop.f32.mrb[0].mxu0
        %v1461 = vadd.f32 %v1306, %v1460
        %v1462 = vpop.f32.mrb[0].mxu0
        %1463 = vmatprep.mubr.bf16.mxu0 0
        %1464 = vmatmul.mubr.bf16.gmra.mrb[0].mxu0 %v1357
        %v1465 = vpop.f32.mrb[0].mxu0
        %v1466 = vadd.f32 %v1311, %v1465
        %v1467 = vpop.f32.mrb[0].mxu0
        %v1468 = vpop.f32.mrb[0].mxu0
        %v1469 = vadd.f32 %v1314, %v1468
        %v1470 = vpop.f32.mrb[0].mxu0
        %1471 = vdwg.mxu0
        %s1472 = scalar_lea.vmem [#allocation2], 3
        %v1473 = vld [vmem:[%s1472] ss:$2 sm:$0xff]
        %s1474 = scalar_lea.vmem [#allocation2], 19
        %v1475 = vld [vmem:[%s1474] ss:$2 sm:$0xff]
        %s1476 = scalar_lea.vmem [#allocation2], 35
        %v1477 = vld [vmem:[%s1476] ss:$2 sm:$0xff]
        %s1478 = scalar_lea.vmem [#allocation2], 51
        %v1479 = vld [vmem:[%s1478] ss:$2 sm:$0xff]
        %s1480 = scalar_lea.vmem [#allocation2], 67
        %v1481 = vld [vmem:[%s1480] ss:$2 sm:$0xff]
        %s1482 = scalar_lea.vmem [#allocation2], 13
        %v1483 = vld [vmem:[%s1482] ss:$2 sm:$0xff]
        %s1484 = scalar_lea.vmem [#allocation2], 29
        %v1485 = vld [vmem:[%s1484] ss:$2 sm:$0xff]
        %s1486 = scalar_lea.vmem [#allocation2], 45
        %v1487 = vld [vmem:[%s1486] ss:$2 sm:$0xff]
        %s1488 = scalar_lea.vmem [#allocation2], 61
        %v1489 = vld [vmem:[%s1488] ss:$2 sm:$0xff]
        %s1490 = scalar_lea.vmem [#allocation2], 77
        %v1491 = vld [vmem:[%s1490] ss:$2 sm:$0xff]
        %v1492 = vpack.c.bf16 %v1130, %v1128
        %v1493 = vpack.c.bf16 %v1134, %v1132
        %v1494 = vpack.c.bf16 %v1473, %v1136
        %v1495 = vpack.c.bf16 %v1477, %v1475
        %v1496 = vpack.c.bf16 %v1481, %v1479
        %v1497 = vpack.c.bf16 %v1140, %v1138
        %v1498 = vpack.c.bf16 %v1144, %v1142
        %v1499 = vpack.c.bf16 %v1483, %v1146
        %v1500 = vpack.c.bf16 %v1487, %v1485
        %v1501 = vpack.c.bf16 %v1491, %v1489
        %s1502 = scalar_lea.vmem %s3, 32
        %v1503 = vld [vmem:[%s1502] sm:$0xf]
        %v1504 = vld [vmem:[%s1502 + $0x4] sm:$0xf]
        %v1505 = vld [vmem:[%s1502 + $0x8] sm:$0xf]
        %v1506 = vld [vmem:[%s1502 + $0xc] sm:$0xf]
        %v1511 = vunpack.c.l.b16 %v1503
        %v1512 = vunpack.c.l.b16 %v1504
        %v1513 = vunpack.c.l.b16 %v1505
        %v1514 = vunpack.c.l.b16 %v1506
        %v1515 = vpack.c.b16 %v1512, %v1511
        %v1516 = vpack.c.b16 %v1514, %v1513
        %v1520 = vsel %vm785, %v1492, 0
        %v1523 = vsel %vm785, %v1493, 0
        %v1526 = vsel %vm785, %v1494, 0
        %v1529 = vsel %vm785, %v1495, 0
        %v1532 = vsel %vm785, %v1496, 0
        %v1535 = vsel %vm785, %v1497, 0
        %v1538 = vsel %vm785, %v1498, 0
        %v1541 = vsel %vm785, %v1499, 0
        %v1544 = vsel %vm785, %v1500, 0
        %v1547 = vsel %vm785, %v1501, 0
        %1549 = vmatprep.subr.bf16.mxu0 0
        %1550 = vmatpush1.bf16.msra.mxu0 %v1515
        %1551 = vmatprep.subr.bf16.mxu0 0
        %1552 = vmatpush1.bf16.msra.mxu0 %v1516
        %1553 = vmatprep.subr.bf16.mxu0 0
        %1554 = vmatpush1.bf16.msra.mxu0 0
        %1555 = vmatprep.subr.bf16.mxu0 0
        %1556 = vmatpush1.bf16.msra.mxu0 0
        %1557 = vmatprep.subr.bf16.mxu0 0
        %1558 = vmatpush1.bf16.msra.mxu0 0
        %1559 = vmatprep.subr.bf16.mxu0 0
        %1560 = vmatpush1.bf16.msra.mxu0 0
        %1561 = vmatprep.subr.bf16.mxu0 0
        %1562 = vmatpush1.bf16.msra.mxu0 0
        %1563 = vmatprep.subr.bf16.mxu0 0
        %1564 = vmatpush1.bf16.msra.mxu0 0
        %1565 = vmatprep.subr.bf16.mxu0 0
        %1566 = vmatpush1.bf16.msra.mxu0 0
        %1567 = vmatprep.subr.bf16.mxu0 0
        %1568 = vmatpush1.bf16.msra.mxu0 0
        %1569 = vmatprep.subr.bf16.mxu0 0
        %1570 = vmatpush1.bf16.msra.mxu0 0
        %1571 = vmatprep.subr.bf16.mxu0 0
        %1572 = vmatpush1.bf16.msra.mxu0 0
        %1573 = vmatprep.subr.bf16.mxu0 0
        %1574 = vmatpush1.bf16.msra.mxu0 0
        %1575 = vmatprep.subr.bf16.mxu0 0
        %1576 = vmatpush1.bf16.msra.mxu0 0
        %1577 = vmatprep.subr.bf16.mxu0 0
        %1578 = vmatpush1.bf16.msra.mxu0 0
        %1579 = vmatprep.subr.bf16.mxu0 0
        %1580 = vmatpush1.bf16.msra.mxu0 0
        %1581 = vmatprep.mubr.bf16.mxu0 0
        %1582 = vmatmul.mubr.bf16.gmra.mrb[0].mxu0 %v1520
        %v1583 = vpop.f32.mrb[0].mxu0
        %v1584 = vadd.f32 0.0, %v1583
        %v1585 = vpop.f32.mrb[0].mxu0
        %v1586 = vpop.f32.mrb[0].mxu0
        %v1587 = vadd.f32 0.0, %v1586
        %v1588 = vpop.f32.mrb[0].mxu0
        %1589 = vmatprep.mubr.bf16.mxu0 0
        %1590 = vmatmul.mubr.bf16.gmra.mrb[0].mxu0 %v1523
        %v1591 = vpop.f32.mrb[0].mxu0
        %v1592 = vadd.f32 0.0, %v1591
        %v1593 = vpop.f32.mrb[0].mxu0
        %v1594 = vpop.f32.mrb[0].mxu0
        %v1595 = vadd.f32 0.0, %v1594
        %v1596 = vpop.f32.mrb[0].mxu0
        %1597 = vmatprep.mubr.bf16.mxu0 0
        %1598 = vmatmul.mubr.bf16.gmra.mrb[0].mxu0 %v1526
        %v1599 = vpop.f32.mrb[0].mxu0
        %v1600 = vadd.f32 0.0, %v1599
        %v1601 = vpop.f32.mrb[0].mxu0
        %v1602 = vpop.f32.mrb[0].mxu0
        %v1603 = vadd.f32 0.0, %v1602
        %v1604 = vpop.f32.mrb[0].mxu0
        %1605 = vmatprep.mubr.bf16.mxu0 0
        %1606 = vmatmul.mubr.bf16.gmra.mrb[0].mxu0 %v1529
        %v1607 = vpop.f32.mrb[0].mxu0
        %v1608 = vadd.f32 0.0, %v1607
        %v1609 = vpop.f32.mrb[0].mxu0
        %v1610 = vpop.f32.mrb[0].mxu0
        %v1611 = vadd.f32 0.0, %v1610
        %v1612 = vpop.f32.mrb[0].mxu0
        %1613 = vmatprep.mubr.bf16.mxu0 0
        %1614 = vmatmul.mubr.bf16.gmra.mrb[0].mxu0 %v1532
        %v1615 = vpop.f32.mrb[0].mxu0
        %v1616 = vadd.f32 0.0, %v1615
        %v1617 = vpop.f32.mrb[0].mxu0
        %v1618 = vpop.f32.mrb[0].mxu0
        %v1619 = vadd.f32 0.0, %v1618
        %v1620 = vpop.f32.mrb[0].mxu0
        %1621 = vmatprep.mubr.bf16.mxu0 0
        %1622 = vmatmul.mubr.bf16.gmra.mrb[0].mxu0 %v1535
        %v1623 = vpop.f32.mrb[0].mxu0
        %v1624 = vadd.f32 0.0, %v1623
        %v1625 = vpop.f32.mrb[0].mxu0
        %v1626 = vpop.f32.mrb[0].mxu0
        %v1627 = vadd.f32 0.0, %v1626
        %v1628 = vpop.f32.mrb[0].mxu0
        %1629 = vmatprep.mubr.bf16.mxu0 0
        %1630 = vmatmul.mubr.bf16.gmra.mrb[0].mxu0 %v1538
        %v1631 = vpop.f32.mrb[0].mxu0
        %v1632 = vadd.f32 0.0, %v1631
        %v1633 = vpop.f32.mrb[0].mxu0
        %v1634 = vpop.f32.mrb[0].mxu0
        %v1635 = vadd.f32 0.0, %v1634
        %v1636 = vpop.f32.mrb[0].mxu0
        %1637 = vmatprep.mubr.bf16.mxu0 0
        %1638 = vmatmul.mubr.bf16.gmra.mrb[0].mxu0 %v1541
        %v1639 = vpop.f32.mrb[0].mxu0
        %v1640 = vadd.f32 0.0, %v1639
        %v1641 = vpop.f32.mrb[0].mxu0
        %v1642 = vpop.f32.mrb[0].mxu0
        %v1643 = vadd.f32 0.0, %v1642
        %v1644 = vpop.f32.mrb[0].mxu0
        %1645 = vmatprep.mubr.bf16.mxu0 0
        %1646 = vmatmul.mubr.bf16.gmra.mrb[0].mxu0 %v1544
        %v1647 = vpop.f32.mrb[0].mxu0
        %v1648 = vadd.f32 0.0, %v1647
        %v1649 = vpop.f32.mrb[0].mxu0
        %v1650 = vpop.f32.mrb[0].mxu0
        %v1651 = vadd.f32 0.0, %v1650
        %v1652 = vpop.f32.mrb[0].mxu0
        %1653 = vmatprep.mubr.bf16.mxu0 0
        %1654 = vmatmul.mubr.bf16.gmra.mrb[0].mxu0 %v1547
        %v1655 = vpop.f32.mrb[0].mxu0
        %v1656 = vadd.f32 0.0, %v1655
        %v1657 = vpop.f32.mrb[0].mxu0
        %v1658 = vpop.f32.mrb[0].mxu0
        %v1659 = vadd.f32 0.0, %v1658
        %v1660 = vpop.f32.mrb[0].mxu0
        %1661 = vdwg.mxu0
        %v1662 = vadd.f32 %v1394, %v1584
        %v1663 = vadd.f32 %v1397, %v1587
        %v1664 = vadd.f32 %v1402, %v1592
        %v1665 = vadd.f32 %v1405, %v1595
        %v1666 = vadd.f32 %v1410, %v1600
        %v1667 = vadd.f32 %v1413, %v1603
        %v1668 = vadd.f32 %v1418, %v1608
        %v1669 = vadd.f32 %v1421, %v1611
        %v1670 = vadd.f32 %v1426, %v1616
        %v1671 = vadd.f32 %v1429, %v1619
        %v1672 = vadd.f32 %v1434, %v1624
        %v1673 = vadd.f32 %v1437, %v1627
        %v1674 = vadd.f32 %v1442, %v1632
        %v1675 = vadd.f32 %v1445, %v1635
        %v1676 = vadd.f32 %v1450, %v1640
        %v1677 = vadd.f32 %v1453, %v1643
        %v1678 = vadd.f32 %v1458, %v1648
        %v1679 = vadd.f32 %v1461, %v1651
        %v1680 = vadd.f32 %v1466, %v1656
        %v1681 = vadd.f32 %v1469, %v1659
        %s1682 = scalar_lea.vmem [#allocation2], 20
        %v1683 = vld [vmem:[%s1682] ss:$2 sm:$0xff]
        %s1684 = scalar_lea.vmem [#allocation2], 36
        %v1685 = vld [vmem:[%s1684] ss:$2 sm:$0xff]
        %s1686 = scalar_lea.vmem [#allocation2], 52
        %v1687 = vld [vmem:[%s1686] ss:$2 sm:$0xff]
        %s1688 = scalar_lea.vmem [#allocation2], 68
        %v1689 = vld [vmem:[%s1688] ss:$2 sm:$0xff]
        %s1690 = scalar_lea.vmem [#allocation2], 84
        %v1691 = vld [vmem:[%s1690] ss:$2 sm:$0xff]
        %s1692 = scalar_lea.vmem [#allocation2], 21
        %v1693 = vld [vmem:[%s1692] ss:$2 sm:$0xff]
        %s1694 = scalar_lea.vmem [#allocation2], 37
        %v1695 = vld [vmem:[%s1694] ss:$2 sm:$0xff]
        %s1696 = scalar_lea.vmem [#allocation2], 53
        %v1697 = vld [vmem:[%s1696] ss:$2 sm:$0xff]
        %s1698 = scalar_lea.vmem [#allocation2], 69
        %v1699 = vld [vmem:[%s1698] ss:$2 sm:$0xff]
        %s1700 = scalar_lea.vmem [#allocation2], 85
        %v1701 = vld [vmem:[%s1700] ss:$2 sm:$0xff]
        %v1702 = vpack.c.bf16 %v1685, %v1683
        %v1703 = vpack.c.bf16 %v1689, %v1687
        %v1704 = vpack.c.bf16 %v1693, %v1691
        %v1705 = vpack.c.bf16 %v1697, %v1695
        %v1706 = vpack.c.bf16 %v1701, %v1699
        %s1707 = scalar_lea.vmem %s3, 48
        %v1708 = vld [vmem:[%s1707] sm:$0xf]
        %v1709 = vld [vmem:[%s1707 + $0x4] sm:$0xf]
        %v1710 = vld [vmem:[%s1707 + $0x8] sm:$0xf]
        %v1711 = vld [vmem:[%s1707 + $0xc] sm:$0xf]
        %v1716 = vunpack.c.l.b16 %v1708
        %v1717 = vunpack.c.l.b16 %v1709
        %v1718 = vunpack.c.l.b16 %v1710
        %v1719 = vunpack.c.l.b16 %v1711
        %v1720 = vpack.c.b16 %v1717, %v1716
        %v1721 = vpack.c.b16 %v1719, %v1718
        %v1725 = vsel %vm785, %v1702, 0
        %v1728 = vsel %vm785, %v1703, 0
        %v1731 = vsel %vm785, %v1704, 0
        %v1734 = vsel %vm785, %v1705, 0
        %v1737 = vsel %vm785, %v1706, 0
        %1739 = vmatprep.subr.bf16.mxu0 0
        %1740 = vmatpush1.bf16.msra.mxu0 %v1720
        %1741 = vmatprep.subr.bf16.mxu0 0
        %1742 = vmatpush1.bf16.msra.mxu0 %v1721
        %1743 = vmatprep.subr.bf16.mxu0 0
        %1744 = vmatpush1.bf16.msra.mxu0 0
        %1745 = vmatprep.subr.bf16.mxu0 0
        %1746 = vmatpush1.bf16.msra.mxu0 0
        %1747 = vmatprep.subr.bf16.mxu0 0
        %1748 = vmatpush1.bf16.msra.mxu0 0
        %1749 = vmatprep.subr.bf16.mxu0 0
        %1750 = vmatpush1.bf16.msra.mxu0 0
        %1751 = vmatprep.subr.bf16.mxu0 0
        %1752 = vmatpush1.bf16.msra.mxu0 0
        %1753 = vmatprep.subr.bf16.mxu0 0
        %1754 = vmatpush1.bf16.msra.mxu0 0
        %1755 = vmatprep.subr.bf16.mxu0 0
        %1756 = vmatpush1.bf16.msra.mxu0 0
        %1757 = vmatprep.subr.bf16.mxu0 0
        %1758 = vmatpush1.bf16.msra.mxu0 0
        %1759 = vmatprep.subr.bf16.mxu0 0
        %1760 = vmatpush1.bf16.msra.mxu0 0
        %1761 = vmatprep.subr.bf16.mxu0 0
        %1762 = vmatpush1.bf16.msra.mxu0 0
        %1763 = vmatprep.subr.bf16.mxu0 0
        %1764 = vmatpush1.bf16.msra.mxu0 0
        %1765 = vmatprep.subr.bf16.mxu0 0
        %1766 = vmatpush1.bf16.msra.mxu0 0
        %1767 = vmatprep.subr.bf16.mxu0 0
        %1768 = vmatpush1.bf16.msra.mxu0 0
        %1769 = vmatprep.subr.bf16.mxu0 0
        %1770 = vmatpush1.bf16.msra.mxu0 0
        %1771 = vmatprep.mubr.bf16.mxu0 0
        %1772 = vmatmul.mubr.bf16.gmra.mrb[0].mxu0 %v1345
        %v1773 = vpop.f32.mrb[0].mxu0
        %v1774 = vadd.f32 0.0, %v1773
        %v1775 = vpop.f32.mrb[0].mxu0
        %v1776 = vpop.f32.mrb[0].mxu0
        %v1777 = vadd.f32 0.0, %v1776
        %v1778 = vpop.f32.mrb[0].mxu0
        %1779 = vmatprep.mubr.bf16.mxu0 0
        %1780 = vmatmul.mubr.bf16.gmra.mrb[0].mxu0 %v1348
        %v1781 = vpop.f32.mrb[0].mxu0
        %v1782 = vadd.f32 0.0, %v1781
        %v1783 = vpop.f32.mrb[0].mxu0
        %v1784 = vpop.f32.mrb[0].mxu0
        %v1785 = vadd.f32 0.0, %v1784
        %v1786 = vpop.f32.mrb[0].mxu0
        %1787 = vmatprep.mubr.bf16.mxu0 0
        %1788 = vmatmul.mubr.bf16.gmra.mrb[0].mxu0 %v1351
        %v1789 = vpop.f32.mrb[0].mxu0
        %v1790 = vadd.f32 0.0, %v1789
        %v1791 = vpop.f32.mrb[0].mxu0
        %v1792 = vpop.f32.mrb[0].mxu0
        %v1793 = vadd.f32 0.0, %v1792
        %v1794 = vpop.f32.mrb[0].mxu0
        %1795 = vmatprep.mubr.bf16.mxu0 0
        %1796 = vmatmul.mubr.bf16.gmra.mrb[0].mxu0 %v1354
        %v1797 = vpop.f32.mrb[0].mxu0
        %v1798 = vadd.f32 0.0, %v1797
        %v1799 = vpop.f32.mrb[0].mxu0
        %v1800 = vpop.f32.mrb[0].mxu0
        %v1801 = vadd.f32 0.0, %v1800
        %v1802 = vpop.f32.mrb[0].mxu0
        %1803 = vmatprep.mubr.bf16.mxu0 0
        %1804 = vmatmul.mubr.bf16.gmra.mrb[0].mxu0 %v1357
        %v1805 = vpop.f32.mrb[0].mxu0
        %v1806 = vadd.f32 0.0, %v1805
        %v1807 = vpop.f32.mrb[0].mxu0
        %v1808 = vpop.f32.mrb[0].mxu0
        %v1809 = vadd.f32 0.0, %v1808
        %v1810 = vpop.f32.mrb[0].mxu0
        %1811 = vmatprep.mubr.bf16.mxu0 0
        %1812 = vmatmul.mubr.bf16.gmra.mrb[0].mxu0 %v1725
        %v1813 = vpop.f32.mrb[0].mxu0
        %v1814 = vadd.f32 0.0, %v1813
        %v1815 = vpop.f32.mrb[0].mxu0
        %v1816 = vpop.f32.mrb[0].mxu0
        %v1817 = vadd.f32 0.0, %v1816
        %v1818 = vpop.f32.mrb[0].mxu0
        %1819 = vmatprep.mubr.bf16.mxu0 0
        %1820 = vmatmul.mubr.bf16.gmra.mrb[0].mxu0 %v1728
        %v1821 = vpop.f32.mrb[0].mxu0
        %v1822 = vadd.f32 0.0, %v1821
        %v1823 = vpop.f32.mrb[0].mxu0
        %v1824 = vpop.f32.mrb[0].mxu0
        %v1825 = vadd.f32 0.0, %v1824
        %v1826 = vpop.f32.mrb[0].mxu0
        %1827 = vmatprep.mubr.bf16.mxu0 0
        %1828 = vmatmul.mubr.bf16.gmra.mrb[0].mxu0 %v1731
        %v1829 = vpop.f32.mrb[0].mxu0
        %v1830 = vadd.f32 0.0, %v1829
        %v1831 = vpop.f32.mrb[0].mxu0
        %v1832 = vpop.f32.mrb[0].mxu0
        %v1833 = vadd.f32 0.0, %v1832
        %v1834 = vpop.f32.mrb[0].mxu0
        %1835 = vmatprep.mubr.bf16.mxu0 0
        %1836 = vmatmul.mubr.bf16.gmra.mrb[0].mxu0 %v1734
        %v1837 = vpop.f32.mrb[0].mxu0
        %v1838 = vadd.f32 0.0, %v1837
        %v1839 = vpop.f32.mrb[0].mxu0
        %v1840 = vpop.f32.mrb[0].mxu0
        %v1841 = vadd.f32 0.0, %v1840
        %v1842 = vpop.f32.mrb[0].mxu0
        %1843 = vmatprep.mubr.bf16.mxu0 0
        %1844 = vmatmul.mubr.bf16.gmra.mrb[0].mxu0 %v1737
        %v1845 = vpop.f32.mrb[0].mxu0
        %v1846 = vadd.f32 0.0, %v1845
        %v1847 = vpop.f32.mrb[0].mxu0
        %v1848 = vpop.f32.mrb[0].mxu0
        %v1849 = vadd.f32 0.0, %v1848
        %v1850 = vpop.f32.mrb[0].mxu0
        %1851 = vdwg.mxu0
        %v1852 = vadd.f32 %v1662, %v1774
        %v1853 = vadd.f32 %v1663, %v1777
        %v1854 = vadd.f32 %v1664, %v1782
        %v1855 = vadd.f32 %v1665, %v1785
        %v1856 = vadd.f32 %v1666, %v1790
        %v1857 = vadd.f32 %v1667, %v1793
        %v1858 = vadd.f32 %v1668, %v1798
        %v1859 = vadd.f32 %v1669, %v1801
        %v1860 = vadd.f32 %v1670, %v1806
        %v1861 = vadd.f32 %v1671, %v1809
        %v1862 = vadd.f32 %v1672, %v1814
        %v1863 = vadd.f32 %v1673, %v1817
        %v1864 = vadd.f32 %v1674, %v1822
        %v1865 = vadd.f32 %v1675, %v1825
        %v1866 = vadd.f32 %v1676, %v1830
        %v1867 = vadd.f32 %v1677, %v1833
        %v1868 = vadd.f32 %v1678, %v1838
        %v1869 = vadd.f32 %v1679, %v1841
        %v1870 = vadd.f32 %v1680, %v1846
        %v1871 = vadd.f32 %v1681, %v1849
        %s1872 = scalar_lea.vmem [#allocation2], 22
        %v1873 = vld [vmem:[%s1872] ss:$2 sm:$0xff]
        %s1874 = scalar_lea.vmem [#allocation2], 38
        %v1875 = vld [vmem:[%s1874] ss:$2 sm:$0xff]
        %s1876 = scalar_lea.vmem [#allocation2], 54
        %v1877 = vld [vmem:[%s1876] ss:$2 sm:$0xff]
        %s1878 = scalar_lea.vmem [#allocation2], 70
        %v1879 = vld [vmem:[%s1878] ss:$2 sm:$0xff]
        %s1880 = scalar_lea.vmem [#allocation2], 86
        %v1881 = vld [vmem:[%s1880] ss:$2 sm:$0xff]
        %v1882 = vpack.c.bf16 %v1695, %v1693
        %v1883 = vpack.c.bf16 %v1699, %v1697
        %v1884 = vpack.c.bf16 %v1873, %v1701
        %v1885 = vpack.c.bf16 %v1877, %v1875
        %v1886 = vpack.c.bf16 %v1881, %v1879
        %s1887 = scalar_lea.vmem %s3, 64
        %v1888 = vld [vmem:[%s1887] sm:$0xf]
        %v1889 = vld [vmem:[%s1887 + $0x4] sm:$0xf]
        %v1890 = vld [vmem:[%s1887 + $0x8] sm:$0xf]
        %v1891 = vld [vmem:[%s1887 + $0xc] sm:$0xf]
        %v1896 = vunpack.c.l.b16 %v1888
        %v1897 = vunpack.c.l.b16 %v1889
        %v1898 = vunpack.c.l.b16 %v1890
        %v1899 = vunpack.c.l.b16 %v1891
        %v1900 = vpack.c.b16 %v1897, %v1896
        %v1901 = vpack.c.b16 %v1899, %v1898
        %v1905 = vsel %vm785, %v1882, 0
        %v1908 = vsel %vm785, %v1883, 0
        %v1911 = vsel %vm785, %v1884, 0
        %v1914 = vsel %vm785, %v1885, 0
        %v1917 = vsel %vm785, %v1886, 0
        %1919 = vmatprep.subr.bf16.mxu0 0
        %1920 = vmatpush1.bf16.msra.mxu0 %v1900
        %1921 = vmatprep.subr.bf16.mxu0 0
        %1922 = vmatpush1.bf16.msra.mxu0 %v1901
        %1923 = vmatprep.subr.bf16.mxu0 0
        %1924 = vmatpush1.bf16.msra.mxu0 0
        %1925 = vmatprep.subr.bf16.mxu0 0
        %1926 = vmatpush1.bf16.msra.mxu0 0
        %1927 = vmatprep.subr.bf16.mxu0 0
        %1928 = vmatpush1.bf16.msra.mxu0 0
        %1929 = vmatprep.subr.bf16.mxu0 0
        %1930 = vmatpush1.bf16.msra.mxu0 0
        %1931 = vmatprep.subr.bf16.mxu0 0
        %1932 = vmatpush1.bf16.msra.mxu0 0
        %1933 = vmatprep.subr.bf16.mxu0 0
        %1934 = vmatpush1.bf16.msra.mxu0 0
        %1935 = vmatprep.subr.bf16.mxu0 0
        %1936 = vmatpush1.bf16.msra.mxu0 0
        %1937 = vmatprep.subr.bf16.mxu0 0
        %1938 = vmatpush1.bf16.msra.mxu0 0
        %1939 = vmatprep.subr.bf16.mxu0 0
        %1940 = vmatpush1.bf16.msra.mxu0 0
        %1941 = vmatprep.subr.bf16.mxu0 0
        %1942 = vmatpush1.bf16.msra.mxu0 0
        %1943 = vmatprep.subr.bf16.mxu0 0
        %1944 = vmatpush1.bf16.msra.mxu0 0
        %1945 = vmatprep.subr.bf16.mxu0 0
        %1946 = vmatpush1.bf16.msra.mxu0 0
        %1947 = vmatprep.subr.bf16.mxu0 0
        %1948 = vmatpush1.bf16.msra.mxu0 0
        %1949 = vmatprep.subr.bf16.mxu0 0
        %1950 = vmatpush1.bf16.msra.mxu0 0
        %1951 = vmatprep.mubr.bf16.mxu0 0
        %1952 = vmatmul.mubr.bf16.gmra.mrb[0].mxu0 %v1190
        %v1953 = vpop.f32.mrb[0].mxu0
        %v1954 = vadd.f32 0.0, %v1953
        %v1955 = vpop.f32.mrb[0].mxu0
        %v1956 = vpop.f32.mrb[0].mxu0
        %v1957 = vadd.f32 0.0, %v1956
        %v1958 = vpop.f32.mrb[0].mxu0
        %1959 = vmatprep.mubr.bf16.mxu0 0
        %1960 = vmatmul.mubr.bf16.gmra.mrb[0].mxu0 %v1193
        %v1961 = vpop.f32.mrb[0].mxu0
        %v1962 = vadd.f32 0.0, %v1961
        %v1963 = vpop.f32.mrb[0].mxu0
        %v1964 = vpop.f32.mrb[0].mxu0
        %v1965 = vadd.f32 0.0, %v1964
        %v1966 = vpop.f32.mrb[0].mxu0
        %1967 = vmatprep.mubr.bf16.mxu0 0
        %1968 = vmatmul.mubr.bf16.gmra.mrb[0].mxu0 %v1196
        %v1969 = vpop.f32.mrb[0].mxu0
        %v1970 = vadd.f32 0.0, %v1969
        %v1971 = vpop.f32.mrb[0].mxu0
        %v1972 = vpop.f32.mrb[0].mxu0
        %v1973 = vadd.f32 0.0, %v1972
        %v1974 = vpop.f32.mrb[0].mxu0
        %1975 = vmatprep.mubr.bf16.mxu0 0
        %1976 = vmatmul.mubr.bf16.gmra.mrb[0].mxu0 %v1199
        %v1977 = vpop.f32.mrb[0].mxu0
        %v1978 = vadd.f32 0.0, %v1977
        %v1979 = vpop.f32.mrb[0].mxu0
        %v1980 = vpop.f32.mrb[0].mxu0
        %v1981 = vadd.f32 0.0, %v1980
        %v1982 = vpop.f32.mrb[0].mxu0
        %1983 = vmatprep.mubr.bf16.mxu0 0
        %1984 = vmatmul.mubr.bf16.gmra.mrb[0].mxu0 %v1202
        %v1985 = vpop.f32.mrb[0].mxu0
        %v1986 = vadd.f32 0.0, %v1985
        %v1987 = vpop.f32.mrb[0].mxu0
        %v1988 = vpop.f32.mrb[0].mxu0
        %v1989 = vadd.f32 0.0, %v1988
        %v1990 = vpop.f32.mrb[0].mxu0
        %1991 = vmatprep.mubr.bf16.mxu0 0
        %1992 = vmatmul.mubr.bf16.gmra.mrb[0].mxu0 %v1905
        %v1993 = vpop.f32.mrb[0].mxu0
        %v1994 = vadd.f32 0.0, %v1993
        %v1995 = vpop.f32.mrb[0].mxu0
        %v1996 = vpop.f32.mrb[0].mxu0
        %v1997 = vadd.f32 0.0, %v1996
        %v1998 = vpop.f32.mrb[0].mxu0
        %1999 = vmatprep.mubr.bf16.mxu0 0
        %2000 = vmatmul.mubr.bf16.gmra.mrb[0].mxu0 %v1908
        %v2001 = vpop.f32.mrb[0].mxu0
        %v2002 = vadd.f32 0.0, %v2001
        %v2003 = vpop.f32.mrb[0].mxu0
        %v2004 = vpop.f32.mrb[0].mxu0
        %v2005 = vadd.f32 0.0, %v2004
        %v2006 = vpop.f32.mrb[0].mxu0
        %2007 = vmatprep.mubr.bf16.mxu0 0
        %2008 = vmatmul.mubr.bf16.gmra.mrb[0].mxu0 %v1911
        %v2009 = vpop.f32.mrb[0].mxu0
        %v2010 = vadd.f32 0.0, %v2009
        %v2011 = vpop.f32.mrb[0].mxu0
        %v2012 = vpop.f32.mrb[0].mxu0
        %v2013 = vadd.f32 0.0, %v2012
        %v2014 = vpop.f32.mrb[0].mxu0
        %2015 = vmatprep.mubr.bf16.mxu0 0
        %2016 = vmatmul.mubr.bf16.gmra.mrb[0].mxu0 %v1914
        %v2017 = vpop.f32.mrb[0].mxu0
        %v2018 = vadd.f32 0.0, %v2017
        %v2019 = vpop.f32.mrb[0].mxu0
        %v2020 = vpop.f32.mrb[0].mxu0
        %v2021 = vadd.f32 0.0, %v2020
        %v2022 = vpop.f32.mrb[0].mxu0
        %2023 = vmatprep.mubr.bf16.mxu0 0
        %2024 = vmatmul.mubr.bf16.gmra.mrb[0].mxu0 %v1917
        %v2025 = vpop.f32.mrb[0].mxu0
        %v2026 = vadd.f32 0.0, %v2025
        %v2027 = vpop.f32.mrb[0].mxu0
        %v2028 = vpop.f32.mrb[0].mxu0
        %v2029 = vadd.f32 0.0, %v2028
        %v2030 = vpop.f32.mrb[0].mxu0
        %2031 = vdwg.mxu0
        %v2032 = vadd.f32 %v1852, %v1954
        %v2033 = vadd.f32 %v1853, %v1957
        %v2034 = vadd.f32 %v1854, %v1962
        %v2035 = vadd.f32 %v1855, %v1965
        %v2036 = vadd.f32 %v1856, %v1970
        %v2037 = vadd.f32 %v1857, %v1973
        %v2038 = vadd.f32 %v1858, %v1978
        %v2039 = vadd.f32 %v1859, %v1981
        %v2040 = vadd.f32 %v1860, %v1986
        %v2041 = vadd.f32 %v1861, %v1989
        %v2042 = vadd.f32 %v1862, %v1994
        %v2043 = vadd.f32 %v1863, %v1997
        %v2044 = vadd.f32 %v1864, %v2002
        %v2045 = vadd.f32 %v1865, %v2005
        %v2046 = vadd.f32 %v1866, %v2010
        %v2047 = vadd.f32 %v1867, %v2013
        %v2048 = vadd.f32 %v1868, %v2018
        %v2049 = vadd.f32 %v1869, %v2021
        %v2050 = vadd.f32 %v1870, %v2026
        %v2051 = vadd.f32 %v1871, %v2029
        %s2052 = scalar_lea.vmem [#allocation2], 23
        %v2053 = vld [vmem:[%s2052] ss:$2 sm:$0xff]
        %s2054 = scalar_lea.vmem [#allocation2], 39
        %v2055 = vld [vmem:[%s2054] ss:$2 sm:$0xff]
        %s2056 = scalar_lea.vmem [#allocation2], 55
        %v2057 = vld [vmem:[%s2056] ss:$2 sm:$0xff]
        %s2058 = scalar_lea.vmem [#allocation2], 71
        %v2059 = vld [vmem:[%s2058] ss:$2 sm:$0xff]
        %s2060 = scalar_lea.vmem [#allocation2], 87
        %v2061 = vld [vmem:[%s2060] ss:$2 sm:$0xff]
        %v2062 = vpack.c.bf16 %v1875, %v1873
        %v2063 = vpack.c.bf16 %v1879, %v1877
        %v2064 = vpack.c.bf16 %v2053, %v1881
        %v2065 = vpack.c.bf16 %v2057, %v2055
        %v2066 = vpack.c.bf16 %v2061, %v2059
        %s2067 = scalar_lea.vmem %s3, 80
        %v2068 = vld [vmem:[%s2067] sm:$0xf]
        %v2069 = vld [vmem:[%s2067 + $0x4] sm:$0xf]
        %v2070 = vld [vmem:[%s2067 + $0x8] sm:$0xf]
        %v2071 = vld [vmem:[%s2067 + $0xc] sm:$0xf]
        %v2076 = vunpack.c.l.b16 %v2068
        %v2077 = vunpack.c.l.b16 %v2069
        %v2078 = vunpack.c.l.b16 %v2070
        %v2079 = vunpack.c.l.b16 %v2071
        %v2080 = vpack.c.b16 %v2077, %v2076
        %v2081 = vpack.c.b16 %v2079, %v2078
        %v2085 = vsel %vm785, %v2062, 0
        %v2088 = vsel %vm785, %v2063, 0
        %v2091 = vsel %vm785, %v2064, 0
        %v2094 = vsel %vm785, %v2065, 0
        %v2097 = vsel %vm785, %v2066, 0
        %2099 = vmatprep.subr.bf16.mxu0 0
        %2100 = vmatpush1.bf16.msra.mxu0 %v2080
        %2101 = vmatprep.subr.bf16.mxu0 0
        %2102 = vmatpush1.bf16.msra.mxu0 %v2081
        %2103 = vmatprep.subr.bf16.mxu0 0
        %2104 = vmatpush1.bf16.msra.mxu0 0
        %2105 = vmatprep.subr.bf16.mxu0 0
        %2106 = vmatpush1.bf16.msra.mxu0 0
        %2107 = vmatprep.subr.bf16.mxu0 0
        %2108 = vmatpush1.bf16.msra.mxu0 0
        %2109 = vmatprep.subr.bf16.mxu0 0
        %2110 = vmatpush1.bf16.msra.mxu0 0
        %2111 = vmatprep.subr.bf16.mxu0 0
        %2112 = vmatpush1.bf16.msra.mxu0 0
        %2113 = vmatprep.subr.bf16.mxu0 0
        %2114 = vmatpush1.bf16.msra.mxu0 0
        %2115 = vmatprep.subr.bf16.mxu0 0
        %2116 = vmatpush1.bf16.msra.mxu0 0
        %2117 = vmatprep.subr.bf16.mxu0 0
        %2118 = vmatpush1.bf16.msra.mxu0 0
        %2119 = vmatprep.subr.bf16.mxu0 0
        %2120 = vmatpush1.bf16.msra.mxu0 0
        %2121 = vmatprep.subr.bf16.mxu0 0
        %2122 = vmatpush1.bf16.msra.mxu0 0
        %2123 = vmatprep.subr.bf16.mxu0 0
        %2124 = vmatpush1.bf16.msra.mxu0 0
        %2125 = vmatprep.subr.bf16.mxu0 0
        %2126 = vmatpush1.bf16.msra.mxu0 0
        %2127 = vmatprep.subr.bf16.mxu0 0
        %2128 = vmatpush1.bf16.msra.mxu0 0
        %2129 = vmatprep.subr.bf16.mxu0 0
        %2130 = vmatpush1.bf16.msra.mxu0 0
        %2131 = vmatprep.mubr.bf16.mxu0 0
        %2132 = vmatmul.mubr.bf16.gmra.mrb[0].mxu0 %v1535
        %v2133 = vpop.f32.mrb[0].mxu0
        %v2134 = vadd.f32 0.0, %v2133
        %v2135 = vpop.f32.mrb[0].mxu0
        %v2136 = vpop.f32.mrb[0].mxu0
        %v2137 = vadd.f32 0.0, %v2136
        %v2138 = vpop.f32.mrb[0].mxu0
        %2139 = vmatprep.mubr.bf16.mxu0 0
        %2140 = vmatmul.mubr.bf16.gmra.mrb[0].mxu0 %v1538
        %v2141 = vpop.f32.mrb[0].mxu0
        %v2142 = vadd.f32 0.0, %v2141
        %v2143 = vpop.f32.mrb[0].mxu0
        %v2144 = vpop.f32.mrb[0].mxu0
        %v2145 = vadd.f32 0.0, %v2144
        %v2146 = vpop.f32.mrb[0].mxu0
        %2147 = vmatprep.mubr.bf16.mxu0 0
        %2148 = vmatmul.mubr.bf16.gmra.mrb[0].mxu0 %v1541
        %v2149 = vpop.f32.mrb[0].mxu0
        %v2150 = vadd.f32 0.0, %v2149
        %v2151 = vpop.f32.mrb[0].mxu0
        %v2152 = vpop.f32.mrb[0].mxu0
        %v2153 = vadd.f32 0.0, %v2152
        %v2154 = vpop.f32.mrb[0].mxu0
        %2155 = vmatprep.mubr.bf16.mxu0 0
        %2156 = vmatmul.mubr.bf16.gmra.mrb[0].mxu0 %v1544
        %v2157 = vpop.f32.mrb[0].mxu0
        %v2158 = vadd.f32 0.0, %v2157
        %v2159 = vpop.f32.mrb[0].mxu0
        %v2160 = vpop.f32.mrb[0].mxu0
        %v2161 = vadd.f32 0.0, %v2160
        %v2162 = vpop.f32.mrb[0].mxu0
        %2163 = vmatprep.mubr.bf16.mxu0 0
        %2164 = vmatmul.mubr.bf16.gmra.mrb[0].mxu0 %v1547
        %v2165 = vpop.f32.mrb[0].mxu0
        %v2166 = vadd.f32 0.0, %v2165
        %v2167 = vpop.f32.mrb[0].mxu0
        %v2168 = vpop.f32.mrb[0].mxu0
        %v2169 = vadd.f32 0.0, %v2168
        %v2170 = vpop.f32.mrb[0].mxu0
        %2171 = vmatprep.mubr.bf16.mxu0 0
        %2172 = vmatmul.mubr.bf16.gmra.mrb[0].mxu0 %v2085
        %v2173 = vpop.f32.mrb[0].mxu0
        %v2174 = vadd.f32 0.0, %v2173
        %v2175 = vpop.f32.mrb[0].mxu0
        %v2176 = vpop.f32.mrb[0].mxu0
        %v2177 = vadd.f32 0.0, %v2176
        %v2178 = vpop.f32.mrb[0].mxu0
        %2179 = vmatprep.mubr.bf16.mxu0 0
        %2180 = vmatmul.mubr.bf16.gmra.mrb[0].mxu0 %v2088
        %v2181 = vpop.f32.mrb[0].mxu0
        %v2182 = vadd.f32 0.0, %v2181
        %v2183 = vpop.f32.mrb[0].mxu0
        %v2184 = vpop.f32.mrb[0].mxu0
        %v2185 = vadd.f32 0.0, %v2184
        %v2186 = vpop.f32.mrb[0].mxu0
        %2187 = vmatprep.mubr.bf16.mxu0 0
        %2188 = vmatmul.mubr.bf16.gmra.mrb[0].mxu0 %v2091
        %v2189 = vpop.f32.mrb[0].mxu0
        %v2190 = vadd.f32 0.0, %v2189
        %v2191 = vpop.f32.mrb[0].mxu0
        %v2192 = vpop.f32.mrb[0].mxu0
        %v2193 = vadd.f32 0.0, %v2192
        %v2194 = vpop.f32.mrb[0].mxu0
        %2195 = vmatprep.mubr.bf16.mxu0 0
        %2196 = vmatmul.mubr.bf16.gmra.mrb[0].mxu0 %v2094
        %v2197 = vpop.f32.mrb[0].mxu0
        %v2198 = vadd.f32 0.0, %v2197
        %v2199 = vpop.f32.mrb[0].mxu0
        %v2200 = vpop.f32.mrb[0].mxu0
        %v2201 = vadd.f32 0.0, %v2200
        %v2202 = vpop.f32.mrb[0].mxu0
        %2203 = vmatprep.mubr.bf16.mxu0 0
        %2204 = vmatmul.mubr.bf16.gmra.mrb[0].mxu0 %v2097
        %v2205 = vpop.f32.mrb[0].mxu0
        %v2206 = vadd.f32 0.0, %v2205
        %v2207 = vpop.f32.mrb[0].mxu0
        %v2208 = vpop.f32.mrb[0].mxu0
        %v2209 = vadd.f32 0.0, %v2208
        %v2210 = vpop.f32.mrb[0].mxu0
        %2211 = vdwg.mxu0
        %v2212 = vadd.f32 %v2032, %v2134
        %v2213 = vadd.f32 %v2033, %v2137
        %v2214 = vadd.f32 %v2034, %v2142
        %v2215 = vadd.f32 %v2035, %v2145
        %v2216 = vadd.f32 %v2036, %v2150
        %v2217 = vadd.f32 %v2037, %v2153
        %v2218 = vadd.f32 %v2038, %v2158
        %v2219 = vadd.f32 %v2039, %v2161
        %v2220 = vadd.f32 %v2040, %v2166
        %v2221 = vadd.f32 %v2041, %v2169
        %v2222 = vadd.f32 %v2042, %v2174
        %v2223 = vadd.f32 %v2043, %v2177
        %v2224 = vadd.f32 %v2044, %v2182
        %v2225 = vadd.f32 %v2045, %v2185
        %v2226 = vadd.f32 %v2046, %v2190
        %v2227 = vadd.f32 %v2047, %v2193
        %v2228 = vadd.f32 %v2048, %v2198
        %v2229 = vadd.f32 %v2049, %v2201
        %v2230 = vadd.f32 %v2050, %v2206
        %v2231 = vadd.f32 %v2051, %v2209
        %s2232 = scalar_lea.vmem [#allocation2], 30
        %v2233 = vld [vmem:[%s2232] ss:$2 sm:$0xff]
        %s2234 = scalar_lea.vmem [#allocation2], 46
        %v2235 = vld [vmem:[%s2234] ss:$2 sm:$0xff]
        %s2236 = scalar_lea.vmem [#allocation2], 62
        %v2237 = vld [vmem:[%s2236] ss:$2 sm:$0xff]
        %s2238 = scalar_lea.vmem [#allocation2], 78
        %v2239 = vld [vmem:[%s2238] ss:$2 sm:$0xff]
        %s2240 = scalar_lea.vmem [#allocation2], 94
        %v2241 = vld [vmem:[%s2240] ss:$2 sm:$0xff]
        %s2242 = scalar_lea.vmem [#allocation2], 31
        %v2243 = vld [vmem:[%s2242] ss:$2 sm:$0xff]
        %s2244 = scalar_lea.vmem [#allocation2], 47
        %v2245 = vld [vmem:[%s2244] ss:$2 sm:$0xff]
        %s2246 = scalar_lea.vmem [#allocation2], 63
        %v2247 = vld [vmem:[%s2246] ss:$2 sm:$0xff]
        %s2248 = scalar_lea.vmem [#allocation2], 79
        %v2249 = vld [vmem:[%s2248] ss:$2 sm:$0xff]
        %s2250 = scalar_lea.vmem [#allocation2], 95
        %v2251 = vld [vmem:[%s2250] ss:$2 sm:$0xff]
        %v2252 = vpack.c.bf16 %v2235, %v2233
        %v2253 = vpack.c.bf16 %v2239, %v2237
        %v2254 = vpack.c.bf16 %v2243, %v2241
        %v2255 = vpack.c.bf16 %v2247, %v2245
        %v2256 = vpack.c.bf16 %v2251, %v2249
        %s2257 = scalar_lea.vmem %s3, 96
        %v2258 = vld [vmem:[%s2257] sm:$0xf]
        %v2259 = vld [vmem:[%s2257 + $0x4] sm:$0xf]
        %v2260 = vld [vmem:[%s2257 + $0x8] sm:$0xf]
        %v2261 = vld [vmem:[%s2257 + $0xc] sm:$0xf]
        %v2266 = vunpack.c.l.b16 %v2258
        %v2267 = vunpack.c.l.b16 %v2259
        %v2268 = vunpack.c.l.b16 %v2260
        %v2269 = vunpack.c.l.b16 %v2261
        %v2270 = vpack.c.b16 %v2267, %v2266
        %v2271 = vpack.c.b16 %v2269, %v2268
        %v2275 = vsel %vm785, %v2252, 0
        %v2278 = vsel %vm785, %v2253, 0
        %v2281 = vsel %vm785, %v2254, 0
        %v2284 = vsel %vm785, %v2255, 0
        %v2287 = vsel %vm785, %v2256, 0
        %2289 = vmatprep.subr.bf16.mxu0 0
        %2290 = vmatpush1.bf16.msra.mxu0 %v2270
        %2291 = vmatprep.subr.bf16.mxu0 0
        %2292 = vmatpush1.bf16.msra.mxu0 %v2271
        %2293 = vmatprep.subr.bf16.mxu0 0
        %2294 = vmatpush1.bf16.msra.mxu0 0
        %2295 = vmatprep.subr.bf16.mxu0 0
        %2296 = vmatpush1.bf16.msra.mxu0 0
        %2297 = vmatprep.subr.bf16.mxu0 0
        %2298 = vmatpush1.bf16.msra.mxu0 0
        %2299 = vmatprep.subr.bf16.mxu0 0
        %2300 = vmatpush1.bf16.msra.mxu0 0
        %2301 = vmatprep.subr.bf16.mxu0 0
        %2302 = vmatpush1.bf16.msra.mxu0 0
        %2303 = vmatprep.subr.bf16.mxu0 0
        %2304 = vmatpush1.bf16.msra.mxu0 0
        %2305 = vmatprep.subr.bf16.mxu0 0
        %2306 = vmatpush1.bf16.msra.mxu0 0
        %2307 = vmatprep.subr.bf16.mxu0 0
        %2308 = vmatpush1.bf16.msra.mxu0 0
        %2309 = vmatprep.subr.bf16.mxu0 0
        %2310 = vmatpush1.bf16.msra.mxu0 0
        %2311 = vmatprep.subr.bf16.mxu0 0
        %2312 = vmatpush1.bf16.msra.mxu0 0
        %2313 = vmatprep.subr.bf16.mxu0 0
        %2314 = vmatpush1.bf16.msra.mxu0 0
        %2315 = vmatprep.subr.bf16.mxu0 0
        %2316 = vmatpush1.bf16.msra.mxu0 0
        %2317 = vmatprep.subr.bf16.mxu0 0
        %2318 = vmatpush1.bf16.msra.mxu0 0
        %2319 = vmatprep.subr.bf16.mxu0 0
        %2320 = vmatpush1.bf16.msra.mxu0 0
        %2321 = vmatprep.mubr.bf16.mxu0 0
        %2322 = vmatmul.mubr.bf16.gmra.mrb[0].mxu0 %v1725
        %v2323 = vpop.f32.mrb[0].mxu0
        %v2324 = vadd.f32 0.0, %v2323
        %v2325 = vpop.f32.mrb[0].mxu0
        %v2326 = vpop.f32.mrb[0].mxu0
        %v2327 = vadd.f32 0.0, %v2326
        %v2328 = vpop.f32.mrb[0].mxu0
        %2329 = vmatprep.mubr.bf16.mxu0 0
        %2330 = vmatmul.mubr.bf16.gmra.mrb[0].mxu0 %v1728
        %v2331 = vpop.f32.mrb[0].mxu0
        %v2332 = vadd.f32 0.0, %v2331
        %v2333 = vpop.f32.mrb[0].mxu0
        %v2334 = vpop.f32.mrb[0].mxu0
        %v2335 = vadd.f32 0.0, %v2334
        %v2336 = vpop.f32.mrb[0].mxu0
        %2337 = vmatprep.mubr.bf16.mxu0 0
        %2338 = vmatmul.mubr.bf16.gmra.mrb[0].mxu0 %v1731
        %v2339 = vpop.f32.mrb[0].mxu0
        %v2340 = vadd.f32 0.0, %v2339
        %v2341 = vpop.f32.mrb[0].mxu0
        %v2342 = vpop.f32.mrb[0].mxu0
        %v2343 = vadd.f32 0.0, %v2342
        %v2344 = vpop.f32.mrb[0].mxu0
        %2345 = vmatprep.mubr.bf16.mxu0 0
        %2346 = vmatmul.mubr.bf16.gmra.mrb[0].mxu0 %v1734
        %v2347 = vpop.f32.mrb[0].mxu0
        %v2348 = vadd.f32 0.0, %v2347
        %v2349 = vpop.f32.mrb[0].mxu0
        %v2350 = vpop.f32.mrb[0].mxu0
        %v2351 = vadd.f32 0.0, %v2350
        %v2352 = vpop.f32.mrb[0].mxu0
        %2353 = vmatprep.mubr.bf16.mxu0 0
        %2354 = vmatmul.mubr.bf16.gmra.mrb[0].mxu0 %v1737
        %v2355 = vpop.f32.mrb[0].mxu0
        %v2356 = vadd.f32 0.0, %v2355
        %v2357 = vpop.f32.mrb[0].mxu0
        %v2358 = vpop.f32.mrb[0].mxu0
        %v2359 = vadd.f32 0.0, %v2358
        %v2360 = vpop.f32.mrb[0].mxu0
        %2361 = vmatprep.mubr.bf16.mxu0 0
        %2362 = vmatmul.mubr.bf16.gmra.mrb[0].mxu0 %v2275
        %v2363 = vpop.f32.mrb[0].mxu0
        %v2364 = vadd.f32 0.0, %v2363
        %v2365 = vpop.f32.mrb[0].mxu0
        %v2366 = vpop.f32.mrb[0].mxu0
        %v2367 = vadd.f32 0.0, %v2366
        %v2368 = vpop.f32.mrb[0].mxu0
        %2369 = vmatprep.mubr.bf16.mxu0 0
        %2370 = vmatmul.mubr.bf16.gmra.mrb[0].mxu0 %v2278
        %v2371 = vpop.f32.mrb[0].mxu0
        %v2372 = vadd.f32 0.0, %v2371
        %v2373 = vpop.f32.mrb[0].mxu0
        %v2374 = vpop.f32.mrb[0].mxu0
        %v2375 = vadd.f32 0.0, %v2374
        %v2376 = vpop.f32.mrb[0].mxu0
        %2377 = vmatprep.mubr.bf16.mxu0 0
        %2378 = vmatmul.mubr.bf16.gmra.mrb[0].mxu0 %v2281
        %v2379 = vpop.f32.mrb[0].mxu0
        %v2380 = vadd.f32 0.0, %v2379
        %v2381 = vpop.f32.mrb[0].mxu0
        %v2382 = vpop.f32.mrb[0].mxu0
        %v2383 = vadd.f32 0.0, %v2382
        %v2384 = vpop.f32.mrb[0].mxu0
        %2385 = vmatprep.mubr.bf16.mxu0 0
        %2386 = vmatmul.mubr.bf16.gmra.mrb[0].mxu0 %v2284
        %v2387 = vpop.f32.mrb[0].mxu0
        %v2388 = vadd.f32 0.0, %v2387
        %v2389 = vpop.f32.mrb[0].mxu0
        %v2390 = vpop.f32.mrb[0].mxu0
        %v2391 = vadd.f32 0.0, %v2390
        %v2392 = vpop.f32.mrb[0].mxu0
        %2393 = vmatprep.mubr.bf16.mxu0 0
        %2394 = vmatmul.mubr.bf16.gmra.mrb[0].mxu0 %v2287
        %v2395 = vpop.f32.mrb[0].mxu0
        %v2396 = vadd.f32 0.0, %v2395
        %v2397 = vpop.f32.mrb[0].mxu0
        %v2398 = vpop.f32.mrb[0].mxu0
        %v2399 = vadd.f32 0.0, %v2398
        %v2400 = vpop.f32.mrb[0].mxu0
        %2401 = vdwg.mxu0
        %v2402 = vadd.f32 %v2212, %v2324
        %v2403 = vadd.f32 %v2213, %v2327
        %v2404 = vadd.f32 %v2214, %v2332
        %v2405 = vadd.f32 %v2215, %v2335
        %v2406 = vadd.f32 %v2216, %v2340
        %v2407 = vadd.f32 %v2217, %v2343
        %v2408 = vadd.f32 %v2218, %v2348
        %v2409 = vadd.f32 %v2219, %v2351
        %v2410 = vadd.f32 %v2220, %v2356
        %v2411 = vadd.f32 %v2221, %v2359
        %v2412 = vadd.f32 %v2222, %v2364
        %v2413 = vadd.f32 %v2223, %v2367
        %v2414 = vadd.f32 %v2224, %v2372
        %v2415 = vadd.f32 %v2225, %v2375
        %v2416 = vadd.f32 %v2226, %v2380
        %v2417 = vadd.f32 %v2227, %v2383
        %v2418 = vadd.f32 %v2228, %v2388
        %v2419 = vadd.f32 %v2229, %v2391
        %v2420 = vadd.f32 %v2230, %v2396
        %v2421 = vadd.f32 %v2231, %v2399
        %v2422 = vld [vmem:[%s1077] ss:$2 sm:$0xff]
        %v2423 = vld [vmem:[%s1079] ss:$2 sm:$0xff]
        %v2424 = vld [vmem:[%s1081] ss:$2 sm:$0xff]
        %s2425 = scalar_lea.vmem [#allocation2], 80
        %v2426 = vld [vmem:[%s2425] ss:$2 sm:$0xff]
        %s2427 = scalar_lea.vmem [#allocation2], 96
        %v2428 = vld [vmem:[%s2427] ss:$2 sm:$0xff]
        %v2429 = vpack.c.bf16 %v2245, %v2243
        %v2430 = vpack.c.bf16 %v2249, %v2247
        %v2431 = vpack.c.bf16 %v2422, %v2251
        %v2432 = vpack.c.bf16 %v2424, %v2423
        %v2433 = vpack.c.bf16 %v2428, %v2426
        %s2434 = scalar_lea.vmem %s3, 112
        %v2435 = vld [vmem:[%s2434] sm:$0xf]
        %v2436 = vld [vmem:[%s2434 + $0x4] sm:$0xf]
        %v2437 = vld [vmem:[%s2434 + $0x8] sm:$0xf]
        %v2438 = vld [vmem:[%s2434 + $0xc] sm:$0xf]
        %v2443 = vunpack.c.l.b16 %v2435
        %v2444 = vunpack.c.l.b16 %v2436
        %v2445 = vunpack.c.l.b16 %v2437
        %v2446 = vunpack.c.l.b16 %v2438
        %v2447 = vpack.c.b16 %v2444, %v2443
        %v2448 = vpack.c.b16 %v2446, %v2445
        %v2452 = vsel %vm785, %v2429, 0
        %v2455 = vsel %vm785, %v2430, 0
        %v2458 = vsel %vm785, %v2431, 0
        %v2461 = vsel %vm785, %v2432, 0
        %v2464 = vsel %vm785, %v2433, 0
        %2466 = vmatprep.subr.bf16.mxu0 0
        %2467 = vmatpush1.bf16.msra.mxu0 %v2447
        %2468 = vmatprep.subr.bf16.mxu0 0
        %2469 = vmatpush1.bf16.msra.mxu0 %v2448
        %2470 = vmatprep.subr.bf16.mxu0 0
        %2471 = vmatpush1.bf16.msra.mxu0 0
        %2472 = vmatprep.subr.bf16.mxu0 0
        %2473 = vmatpush1.bf16.msra.mxu0 0
        %2474 = vmatprep.subr.bf16.mxu0 0
        %2475 = vmatpush1.bf16.msra.mxu0 0
        %2476 = vmatprep.subr.bf16.mxu0 0
        %2477 = vmatpush1.bf16.msra.mxu0 0
        %2478 = vmatprep.subr.bf16.mxu0 0
        %2479 = vmatpush1.bf16.msra.mxu0 0
        %2480 = vmatprep.subr.bf16.mxu0 0
        %2481 = vmatpush1.bf16.msra.mxu0 0
        %2482 = vmatprep.subr.bf16.mxu0 0
        %2483 = vmatpush1.bf16.msra.mxu0 0
        %2484 = vmatprep.subr.bf16.mxu0 0
        %2485 = vmatpush1.bf16.msra.mxu0 0
        %2486 = vmatprep.subr.bf16.mxu0 0
        %2487 = vmatpush1.bf16.msra.mxu0 0
        %2488 = vmatprep.subr.bf16.mxu0 0
        %2489 = vmatpush1.bf16.msra.mxu0 0
        %2490 = vmatprep.subr.bf16.mxu0 0
        %2491 = vmatpush1.bf16.msra.mxu0 0
        %2492 = vmatprep.subr.bf16.mxu0 0
        %2493 = vmatpush1.bf16.msra.mxu0 0
        %2494 = vmatprep.subr.bf16.mxu0 0
        %2495 = vmatpush1.bf16.msra.mxu0 0
        %2496 = vmatprep.subr.bf16.mxu0 0
        %2497 = vmatpush1.bf16.msra.mxu0 0
        %2498 = vmatprep.mubr.bf16.mxu0 0
        %2499 = vmatmul.mubr.bf16.gmra.mrb[0].mxu0 %v1905
        %v2500 = vpop.f32.mrb[0].mxu0
        %v2501 = vadd.f32 0.0, %v2500
        %v2502 = vpop.f32.mrb[0].mxu0
        %v2503 = vpop.f32.mrb[0].mxu0
        %v2504 = vadd.f32 0.0, %v2503
        %v2505 = vpop.f32.mrb[0].mxu0
        %2506 = vmatprep.mubr.bf16.mxu0 0
        %2507 = vmatmul.mubr.bf16.gmra.mrb[0].mxu0 %v1908
        %v2508 = vpop.f32.mrb[0].mxu0
        %v2509 = vadd.f32 0.0, %v2508
        %v2510 = vpop.f32.mrb[0].mxu0
        %v2511 = vpop.f32.mrb[0].mxu0
        %v2512 = vadd.f32 0.0, %v2511
        %v2513 = vpop.f32.mrb[0].mxu0
        %2514 = vmatprep.mubr.bf16.mxu0 0
        %2515 = vmatmul.mubr.bf16.gmra.mrb[0].mxu0 %v1911
        %v2516 = vpop.f32.mrb[0].mxu0
        %v2517 = vadd.f32 0.0, %v2516
        %v2518 = vpop.f32.mrb[0].mxu0
        %v2519 = vpop.f32.mrb[0].mxu0
        %v2520 = vadd.f32 0.0, %v2519
        %v2521 = vpop.f32.mrb[0].mxu0
        %2522 = vmatprep.mubr.bf16.mxu0 0
        %2523 = vmatmul.mubr.bf16.gmra.mrb[0].mxu0 %v1914
        %v2524 = vpop.f32.mrb[0].mxu0
        %v2525 = vadd.f32 0.0, %v2524
        %v2526 = vpop.f32.mrb[0].mxu0
        %v2527 = vpop.f32.mrb[0].mxu0
        %v2528 = vadd.f32 0.0, %v2527
        %v2529 = vpop.f32.mrb[0].mxu0
        %2530 = vmatprep.mubr.bf16.mxu0 0
        %2531 = vmatmul.mubr.bf16.gmra.mrb[0].mxu0 %v1917
        %v2532 = vpop.f32.mrb[0].mxu0
        %v2533 = vadd.f32 0.0, %v2532
        %v2534 = vpop.f32.mrb[0].mxu0
        %v2535 = vpop.f32.mrb[0].mxu0
        %v2536 = vadd.f32 0.0, %v2535
        %v2537 = vpop.f32.mrb[0].mxu0
        %2538 = vmatprep.mubr.bf16.mxu0 0
        %2539 = vmatmul.mubr.bf16.gmra.mrb[0].mxu0 %v2452
        %v2540 = vpop.f32.mrb[0].mxu0
        %v2541 = vadd.f32 0.0, %v2540
        %v2542 = vpop.f32.mrb[0].mxu0
        %v2543 = vpop.f32.mrb[0].mxu0
        %v2544 = vadd.f32 0.0, %v2543
        %v2545 = vpop.f32.mrb[0].mxu0
        %2546 = vmatprep.mubr.bf16.mxu0 0
        %2547 = vmatmul.mubr.bf16.gmra.mrb[0].mxu0 %v2455
        %v2548 = vpop.f32.mrb[0].mxu0
        %v2549 = vadd.f32 0.0, %v2548
        %v2550 = vpop.f32.mrb[0].mxu0
        %v2551 = vpop.f32.mrb[0].mxu0
        %v2552 = vadd.f32 0.0, %v2551
        %v2553 = vpop.f32.mrb[0].mxu0
        %2554 = vmatprep.mubr.bf16.mxu0 0
        %2555 = vmatmul.mubr.bf16.gmra.mrb[0].mxu0 %v2458
        %v2556 = vpop.f32.mrb[0].mxu0
        %v2557 = vadd.f32 0.0, %v2556
        %v2558 = vpop.f32.mrb[0].mxu0
        %v2559 = vpop.f32.mrb[0].mxu0
        %v2560 = vadd.f32 0.0, %v2559
        %v2561 = vpop.f32.mrb[0].mxu0
        %2562 = vmatprep.mubr.bf16.mxu0 0
        %2563 = vmatmul.mubr.bf16.gmra.mrb[0].mxu0 %v2461
        %v2564 = vpop.f32.mrb[0].mxu0
        %v2565 = vadd.f32 0.0, %v2564
        %v2566 = vpop.f32.mrb[0].mxu0
        %v2567 = vpop.f32.mrb[0].mxu0
        %v2568 = vadd.f32 0.0, %v2567
        %v2569 = vpop.f32.mrb[0].mxu0
        %2570 = vmatprep.mubr.bf16.mxu0 0
        %2571 = vmatmul.mubr.bf16.gmra.mrb[0].mxu0 %v2464
        %v2572 = vpop.f32.mrb[0].mxu0
        %v2573 = vadd.f32 0.0, %v2572
        %v2574 = vpop.f32.mrb[0].mxu0
        %v2575 = vpop.f32.mrb[0].mxu0
        %v2576 = vadd.f32 0.0, %v2575
        %v2577 = vpop.f32.mrb[0].mxu0
        %2578 = vdwg.mxu0
        %v2579 = vadd.f32 %v2402, %v2501
        %v2580 = vadd.f32 %v2403, %v2504
        %v2581 = vadd.f32 %v2404, %v2509
        %v2582 = vadd.f32 %v2405, %v2512
        %v2583 = vadd.f32 %v2406, %v2517
        %v2584 = vadd.f32 %v2407, %v2520
        %v2585 = vadd.f32 %v2408, %v2525
        %v2586 = vadd.f32 %v2409, %v2528
        %v2587 = vadd.f32 %v2410, %v2533
        %v2588 = vadd.f32 %v2411, %v2536
        %v2589 = vadd.f32 %v2412, %v2541
        %v2590 = vadd.f32 %v2413, %v2544
        %v2591 = vadd.f32 %v2414, %v2549
        %v2592 = vadd.f32 %v2415, %v2552
        %v2593 = vadd.f32 %v2416, %v2557
        %v2594 = vadd.f32 %v2417, %v2560
        %v2595 = vadd.f32 %v2418, %v2565
        %v2596 = vadd.f32 %v2419, %v2568
        %v2597 = vadd.f32 %v2420, %v2573
        %v2598 = vadd.f32 %v2421, %v2576
        %v2599 = vld [vmem:[%s1087] ss:$2 sm:$0xff]
        %v2600 = vld [vmem:[%s1089] ss:$2 sm:$0xff]
        %v2601 = vld [vmem:[%s1091] ss:$2 sm:$0xff]
        %s2602 = scalar_lea.vmem [#allocation2], 81
        %v2603 = vld [vmem:[%s2602] ss:$2 sm:$0xff]
        %s2604 = scalar_lea.vmem [#allocation2], 97
        %v2605 = vld [vmem:[%s2604] ss:$2 sm:$0xff]
        %v2606 = vpack.c.bf16 %v2423, %v2422
        %v2607 = vpack.c.bf16 %v2426, %v2424
        %v2608 = vpack.c.bf16 %v2599, %v2428
        %v2609 = vpack.c.bf16 %v2601, %v2600
        %v2610 = vpack.c.bf16 %v2605, %v2603
        %s2611 = scalar_lea.vmem %s3, 128
        %v2612 = vld [vmem:[%s2611] sm:$0xf]
        %v2613 = vld [vmem:[%s2611 + $0x4] sm:$0xf]
        %v2614 = vld [vmem:[%s2611 + $0x8] sm:$0xf]
        %v2615 = vld [vmem:[%s2611 + $0xc] sm:$0xf]
        %v2620 = vunpack.c.l.b16 %v2612
        %v2621 = vunpack.c.l.b16 %v2613
        %v2622 = vunpack.c.l.b16 %v2614
        %v2623 = vunpack.c.l.b16 %v2615
        %v2624 = vpack.c.b16 %v2621, %v2620
        %v2625 = vpack.c.b16 %v2623, %v2622
        %v2629 = vsel %vm785, %v2606, 0
        %v2632 = vsel %vm785, %v2607, 0
        %v2635 = vsel %vm785, %v2608, 0
        %v2638 = vsel %vm785, %v2609, 0
        %v2641 = vsel %vm785, %v2610, 0
        %2643 = vmatprep.subr.bf16.mxu0 0
        %2644 = vmatpush1.bf16.msra.mxu0 %v2624
        %2645 = vmatprep.subr.bf16.mxu0 0
        %2646 = vmatpush1.bf16.msra.mxu0 %v2625
        %2647 = vmatprep.subr.bf16.mxu0 0
        %2648 = vmatpush1.bf16.msra.mxu0 0
        %2649 = vmatprep.subr.bf16.mxu0 0
        %2650 = vmatpush1.bf16.msra.mxu0 0
        %2651 = vmatprep.subr.bf16.mxu0 0
        %2652 = vmatpush1.bf16.msra.mxu0 0
        %2653 = vmatprep.subr.bf16.mxu0 0
        %2654 = vmatpush1.bf16.msra.mxu0 0
        %2655 = vmatprep.subr.bf16.mxu0 0
        %2656 = vmatpush1.bf16.msra.mxu0 0
        %2657 = vmatprep.subr.bf16.mxu0 0
        %2658 = vmatpush1.bf16.msra.mxu0 0
        %2659 = vmatprep.subr.bf16.mxu0 0
        %2660 = vmatpush1.bf16.msra.mxu0 0
        %2661 = vmatprep.subr.bf16.mxu0 0
        %2662 = vmatpush1.bf16.msra.mxu0 0
        %2663 = vmatprep.subr.bf16.mxu0 0
        %2664 = vmatpush1.bf16.msra.mxu0 0
        %2665 = vmatprep.subr.bf16.mxu0 0
        %2666 = vmatpush1.bf16.msra.mxu0 0
        %2667 = vmatprep.subr.bf16.mxu0 0
        %2668 = vmatpush1.bf16.msra.mxu0 0
        %2669 = vmatprep.subr.bf16.mxu0 0
        %2670 = vmatpush1.bf16.msra.mxu0 0
        %2671 = vmatprep.subr.bf16.mxu0 0
        %2672 = vmatpush1.bf16.msra.mxu0 0
        %2673 = vmatprep.subr.bf16.mxu0 0
        %2674 = vmatpush1.bf16.msra.mxu0 0
        %2675 = vmatprep.mubr.bf16.mxu0 0
        %2676 = vmatmul.mubr.bf16.gmra.mrb[0].mxu0 %v2085
        %v2677 = vpop.f32.mrb[0].mxu0
        %v2678 = vadd.f32 0.0, %v2677
        %v2679 = vpop.f32.mrb[0].mxu0
        %v2680 = vpop.f32.mrb[0].mxu0
        %v2681 = vadd.f32 0.0, %v2680
        %v2682 = vpop.f32.mrb[0].mxu0
        %2683 = vmatprep.mubr.bf16.mxu0 0
        %2684 = vmatmul.mubr.bf16.gmra.mrb[0].mxu0 %v2088
        %v2685 = vpop.f32.mrb[0].mxu0
        %v2686 = vadd.f32 0.0, %v2685
        %v2687 = vpop.f32.mrb[0].mxu0
        %v2688 = vpop.f32.mrb[0].mxu0
        %v2689 = vadd.f32 0.0, %v2688
        %v2690 = vpop.f32.mrb[0].mxu0
        %2691 = vmatprep.mubr.bf16.mxu0 0
        %2692 = vmatmul.mubr.bf16.gmra.mrb[0].mxu0 %v2091
        %v2693 = vpop.f32.mrb[0].mxu0
        %v2694 = vadd.f32 0.0, %v2693
        %v2695 = vpop.f32.mrb[0].mxu0
        %v2696 = vpop.f32.mrb[0].mxu0
        %v2697 = vadd.f32 0.0, %v2696
        %v2698 = vpop.f32.mrb[0].mxu0
        %2699 = vmatprep.mubr.bf16.mxu0 0
        %2700 = vmatmul.mubr.bf16.gmra.mrb[0].mxu0 %v2094
        %v2701 = vpop.f32.mrb[0].mxu0
        %v2702 = vadd.f32 0.0, %v2701
        %v2703 = vpop.f32.mrb[0].mxu0
        %v2704 = vpop.f32.mrb[0].mxu0
        %v2705 = vadd.f32 0.0, %v2704
        %v2706 = vpop.f32.mrb[0].mxu0
        %2707 = vmatprep.mubr.bf16.mxu0 0
        %2708 = vmatmul.mubr.bf16.gmra.mrb[0].mxu0 %v2097
        %v2709 = vpop.f32.mrb[0].mxu0
        %v2710 = vadd.f32 0.0, %v2709
        %v2711 = vpop.f32.mrb[0].mxu0
        %v2712 = vpop.f32.mrb[0].mxu0
        %v2713 = vadd.f32 0.0, %v2712
        %v2714 = vpop.f32.mrb[0].mxu0
        %2715 = vmatprep.mubr.bf16.mxu0 0
        %2716 = vmatmul.mubr.bf16.gmra.mrb[0].mxu0 %v2629
        %v2717 = vpop.f32.mrb[0].mxu0
        %v2718 = vadd.f32 0.0, %v2717
        %v2719 = vpop.f32.mrb[0].mxu0
        %v2720 = vpop.f32.mrb[0].mxu0
        %v2721 = vadd.f32 0.0, %v2720
        %v2722 = vpop.f32.mrb[0].mxu0
        %2723 = vmatprep.mubr.bf16.mxu0 0
        %2724 = vmatmul.mubr.bf16.gmra.mrb[0].mxu0 %v2632
        %v2725 = vpop.f32.mrb[0].mxu0
        %v2726 = vadd.f32 0.0, %v2725
        %v2727 = vpop.f32.mrb[0].mxu0
        %v2728 = vpop.f32.mrb[0].mxu0
        %v2729 = vadd.f32 0.0, %v2728
        %v2730 = vpop.f32.mrb[0].mxu0
        %2731 = vmatprep.mubr.bf16.mxu0 0
        %2732 = vmatmul.mubr.bf16.gmra.mrb[0].mxu0 %v2635
        %v2733 = vpop.f32.mrb[0].mxu0
        %v2734 = vadd.f32 0.0, %v2733
        %v2735 = vpop.f32.mrb[0].mxu0
        %v2736 = vpop.f32.mrb[0].mxu0
        %v2737 = vadd.f32 0.0, %v2736
        %v2738 = vpop.f32.mrb[0].mxu0
        %2739 = vmatprep.mubr.bf16.mxu0 0
        %2740 = vmatmul.mubr.bf16.gmra.mrb[0].mxu0 %v2638
        %v2741 = vpop.f32.mrb[0].mxu0
        %v2742 = vadd.f32 0.0, %v2741
        %v2743 = vpop.f32.mrb[0].mxu0
        %v2744 = vpop.f32.mrb[0].mxu0
        %v2745 = vadd.f32 0.0, %v2744
        %v2746 = vpop.f32.mrb[0].mxu0
        %2747 = vmatprep.mubr.bf16.mxu0 0
        %2748 = vmatmul.mubr.bf16.gmra.mrb[0].mxu0 %v2641
        %v2749 = vpop.f32.mrb[0].mxu0
        %v2750 = vadd.f32 0.0, %v2749
        %v2751 = vpop.f32.mrb[0].mxu0
        %v2752 = vpop.f32.mrb[0].mxu0
        %v2753 = vadd.f32 0.0, %v2752
        %v2754 = vpop.f32.mrb[0].mxu0
        %2755 = vdwg.mxu0
        %v2756 = vadd.f32 %v2579, %v2678
        %v2757 = vadd.f32 %v2580, %v2681
        %v2758 = vadd.f32 %v2581, %v2686
        %v2759 = vadd.f32 %v2582, %v2689
        %v2760 = vadd.f32 %v2583, %v2694
        %v2761 = vadd.f32 %v2584, %v2697
        %v2762 = vadd.f32 %v2585, %v2702
        %v2763 = vadd.f32 %v2586, %v2705
        %v2764 = vadd.f32 %v2587, %v2710
        %v2765 = vadd.f32 %v2588, %v2713
        %v2766 = vadd.f32 %v2589, %v2718
        %v2767 = vadd.f32 %v2590, %v2721
        %v2768 = vadd.f32 %v2591, %v2726
        %v2769 = vadd.f32 %v2592, %v2729
        %v2770 = vadd.f32 %v2593, %v2734
        %v2771 = vadd.f32 %v2594, %v2737
        %v2772 = vadd.f32 %v2595, %v2742
        %v2773 = vadd.f32 %v2596, %v2745
        %v2774 = vadd.f32 %v2597, %v2750
        %v2775 = vadd.f32 %v2598, %v2753
        %v2776 = vmax.f32 %v2756, 0.0
        %v2777 = vmax.f32 %v2757, 0.0
        %v2778 = vmax.f32 %v2758, 0.0
        %v2779 = vmax.f32 %v2759, 0.0
        %v2780 = vmax.f32 %v2760, 0.0
        %v2781 = vmax.f32 %v2761, 0.0
        %v2782 = vmax.f32 %v2762, 0.0
        %v2783 = vmax.f32 %v2763, 0.0
        %v2784 = vmax.f32 %v2764, 0.0
        %v2785 = vmax.f32 %v2765, 0.0
        %v2786 = vmax.f32 %v2766, 0.0
        %v2787 = vmax.f32 %v2767, 0.0
        %v2788 = vmax.f32 %v2768, 0.0
        %v2789 = vmax.f32 %v2769, 0.0
        %v2790 = vmax.f32 %v2770, 0.0
        %v2791 = vmax.f32 %v2771, 0.0
        %v2792 = vmax.f32 %v2772, 0.0
        %v2793 = vmax.f32 %v2773, 0.0
        %v2794 = vmax.f32 %v2774, 0.0
        %v2795 = vmax.f32 %v2775, 0.0
        %v2796 = vmax.f32 %v2776, %v2781
        %v2797 = vmax.f32 %v2777, %v2782
        %v2798 = vmax.f32 %v2778, %v2783
        %v2799 = vmax.f32 %v2779, %v2784
        %v2800 = vmax.f32 %v2780, %v2785
        %v2801 = vmax.f32 %v2786, %v2791
        %v2802 = vmax.f32 %v2787, %v2792
        %v2803 = vmax.f32 %v2788, %v2793
        %v2804 = vmax.f32 %v2789, %v2794
        %v2805 = vmax.f32 %v2790, %v2795
        %v2806 = vmax.f32 %v2796, %v2801
        %v2807 = vmax.f32 %v2797, %v2802
        %v2808 = vmax.f32 %v2798, %v2803
        %v2809 = vmax.f32 %v2799, %v2804
        %v2810 = vmax.f32 %v2800, %v2805
        %2811 = vst.msk [vmem:[#allocation4] sm:$0xff] %vm785, %v2806
        %2812 = vst.msk [vmem:[#allocation4 + $0x8] sm:$0xff] %vm785, %v2807
        %2813 = vst.msk [vmem:[#allocation4 + $0x10] sm:$0xff] %vm785, %v2808
        %2814 = vst.msk [vmem:[#allocation4 + $0x18] sm:$0xff] %vm785, %v2809
        %2815 = vst.msk [vmem:[#allocation4 + $0x20] sm:$0xff] %vm785, %v2810
        %v2816 = vld [vmem:[#allocation4] sm:$0xf]
        %vm2817 = vcmask 257024
        %2818 = vst.msk [vmem:[#allocation3] sm:$0xf] %vm2817, %v2816
        %v2819 = vld [vmem:[#allocation4 + $0xa] sm:$0xf]
        %2820 = vst.msk [vmem:[#allocation3 + $0x4] sm:$0xf] %vm2817, %v2819
        %v2821 = vld [vmem:[#allocation4 + $0x14] sm:$0xf]
        %2822 = vst.msk [vmem:[#allocation3 + $0x8] sm:$0xf] %vm2817, %v2821
        %v2823 = vld [vmem:[#allocation4 + $0x1e] sm:$0xf]
        %2824 = vst.msk [vmem:[#allocation3 + $0xc] sm:$0xf] %vm2817, %v2823
        %v2825 = vld [vmem:[#allocation3] sm:$0xff]
        %v2826 = vld [vmem:[#allocation3 + $0x8] sm:$0xff]
        %v2827 = vld [vmem:[%s1] sm:$0xff]
        %v2828 = vld [vmem:[%s1 + $0x8] sm:$0xff]
        %v2829 = vadd.f32 %v2825, %v2827
        %v2830 = vadd.f32 %v2826, %v2828
        %v2831 = vld [vmem:[%s4] sm:$0x1]
        %v2832 = vld [vmem:[%s5] sm:$0x1]
        %v2833 = vsel %vm785, %v2829, 0.0
        %2834 = vadd.xlane.f32.xlu0 %v2833
        %v2835 = vpop.xlane.xlu0 %2834
        %v2836 = vsel %vm785, %v2830, 0.0
        %2837 = vadd.xlane.f32.xlu0 %v2836
        %v2838 = vpop.xlane.xlu0 %2837
        %v2839 = vrcp.pop 32.0
        %v2840 = vmul.f32 %v2835, %v2839
        %v2841 = vmul.f32 %v2838, %v2839
        %v2842 = vsub.f32 %v2829, %v2840
        %v2843 = vsub.f32 %v2830, %v2841
        %v2844 = vmul.f32 %v2842, %v2842
        %v2845 = vmul.f32 %v2843, %v2843
        %v2846 = vsel %vm785, %v2844, 0.0
        %2847 = vadd.xlane.f32.xlu0 %v2846
        %v2848 = vpop.xlane.xlu0 %2847
        %v2849 = vsel %vm785, %v2845, 0.0
        %2850 = vadd.xlane.f32.xlu0 %v2849
        %v2851 = vpop.xlane.xlu0 %2850
        %v2852 = vmul.f32 %v2848, %v2839
        %v2853 = vmul.f32 %v2851, %v2839
        %v2854 = vadd.f32 %v2852, 1e-05
        %v2855 = vadd.f32 %v2853, 1e-05
        %v2856 = vrsqrt.pop %v2854
        %v2857 = vrsqrt.pop %v2855
        %v2858 = vmul.f32 %v2842, %v2856
        %v2859 = vmul.f32 %v2843, %v2857
        %v2861 = vlaneseq
        %v2862 = vshrl.u32 %v2861, 7
        %v2863 = vsub.s32 0, %v2862
        %v2864 = vrot.slane %v2831, %v2863
        %v2866 = vmul.f32 %v2858, %v2864
        %v2867 = vmul.f32 %v2859, %v2864
        %v2869 = vlaneseq
        %v2870 = vshrl.u32 %v2869, 7
        %v2871 = vsub.s32 0, %v2870
        %v2872 = vrot.slane %v2832, %v2871
        %v2874 = vadd.f32 %v2866, %v2872
        %v2875 = vadd.f32 %v2867, %v2872
        %v2876 = vpack.c.bf16 %v2875, %v2874
        %v2877 = vld [vmem:[%s10] sm:$0x1]
        %v2878 = vld [vmem:[%s6] sm:$0xf]
        %v2879 = vld [vmem:[%s6 + $0x4] sm:$0xf]
        %v2880 = vld [vmem:[%s6 + $0x8] sm:$0xf]
        %v2881 = vld [vmem:[%s6 + $0xc] sm:$0xf]
        %v2886 = vunpack.c.l.b16 %v2878
        %v2887 = vunpack.c.l.b16 %v2879
        %v2888 = vunpack.c.l.b16 %v2880
        %v2889 = vunpack.c.l.b16 %v2881
        %v2890 = vpack.c.b16 %v2887, %v2886
        %v2891 = vpack.c.b16 %v2889, %v2888
        %v2895 = vsel %vm785, %v2876, 0
        %2897 = vmatprep.subr.bf16.mxu0 0
        %2898 = vmatpush1.bf16.msra.mxu0 %v2890
        %2899 = vmatprep.subr.bf16.mxu0 0
        %2900 = vmatpush1.bf16.msra.mxu0 %v2891
        %2901 = vmatprep.subr.bf16.mxu0 0
        %2902 = vmatpush1.bf16.msra.mxu0 0
        %2903 = vmatprep.subr.bf16.mxu0 0
        %2904 = vmatpush1.bf16.msra.mxu0 0
        %2905 = vmatprep.subr.bf16.mxu0 0
        %2906 = vmatpush1.bf16.msra.mxu0 0
        %2907 = vmatprep.subr.bf16.mxu0 0
        %2908 = vmatpush1.bf16.msra.mxu0 0
        %2909 = vmatprep.subr.bf16.mxu0 0
        %2910 = vmatpush1.bf16.msra.mxu0 0
        %2911 = vmatprep.subr.bf16.mxu0 0
        %2912 = vmatpush1.bf16.msra.mxu0 0
        %2913 = vmatprep.subr.bf16.mxu0 0
        %2914 = vmatpush1.bf16.msra.mxu0 0
        %2915 = vmatprep.subr.bf16.mxu0 0
        %2916 = vmatpush1.bf16.msra.mxu0 0
        %2917 = vmatprep.subr.bf16.mxu0 0
        %2918 = vmatpush1.bf16.msra.mxu0 0
        %2919 = vmatprep.subr.bf16.mxu0 0
        %2920 = vmatpush1.bf16.msra.mxu0 0
        %2921 = vmatprep.subr.bf16.mxu0 0
        %2922 = vmatpush1.bf16.msra.mxu0 0
        %2923 = vmatprep.subr.bf16.mxu0 0
        %2924 = vmatpush1.bf16.msra.mxu0 0
        %2925 = vmatprep.subr.bf16.mxu0 0
        %2926 = vmatpush1.bf16.msra.mxu0 0
        %2927 = vmatprep.subr.bf16.mxu0 0
        %2928 = vmatpush1.bf16.msra.mxu0 0
        %2929 = vmatprep.mubr.bf16.mxu0 0
        %2930 = vmatmul.mubr.bf16.gmra.mrb[0].mxu0 %v2895
        %v2931 = vpop.f32.mrb[0].mxu0
        %v2932 = vadd.f32 0.0, %v2931
        %v2933 = vpop.f32.mrb[0].mxu0
        %v2934 = vpop.f32.mrb[0].mxu0
        %v2935 = vadd.f32 0.0, %v2934
        %v2936 = vpop.f32.mrb[0].mxu0
        %2937 = vdwg.mxu0
        %v2938 = vld [vmem:[%s7] sm:$0xf]
        %v2939 = vld [vmem:[%s7 + $0x4] sm:$0xf]
        %v2940 = vld [vmem:[%s7 + $0x8] sm:$0xf]
        %v2941 = vld [vmem:[%s7 + $0xc] sm:$0xf]
        %v2946 = vunpack.c.l.b16 %v2938
        %v2947 = vunpack.c.l.b16 %v2939
        %v2948 = vunpack.c.l.b16 %v2940
        %v2949 = vunpack.c.l.b16 %v2941
        %v2950 = vpack.c.b16 %v2947, %v2946
        %v2951 = vpack.c.b16 %v2949, %v2948
        %2954 = vmatprep.subr.bf16.mxu0 0
        %2955 = vmatpush1.bf16.msra.mxu0 %v2950
        %2956 = vmatprep.subr.bf16.mxu0 0
        %2957 = vmatpush1.bf16.msra.mxu0 %v2951
        %2958 = vmatprep.subr.bf16.mxu0 0
        %2959 = vmatpush1.bf16.msra.mxu0 0
        %2960 = vmatprep.subr.bf16.mxu0 0
        %2961 = vmatpush1.bf16.msra.mxu0 0
        %2962 = vmatprep.subr.bf16.mxu0 0
        %2963 = vmatpush1.bf16.msra.mxu0 0
        %2964 = vmatprep.subr.bf16.mxu0 0
        %2965 = vmatpush1.bf16.msra.mxu0 0
        %2966 = vmatprep.subr.bf16.mxu0 0
        %2967 = vmatpush1.bf16.msra.mxu0 0
        %2968 = vmatprep.subr.bf16.mxu0 0
        %2969 = vmatpush1.bf16.msra.mxu0 0
        %2970 = vmatprep.subr.bf16.mxu0 0
        %2971 = vmatpush1.bf16.msra.mxu0 0
        %2972 = vmatprep.subr.bf16.mxu0 0
        %2973 = vmatpush1.bf16.msra.mxu0 0
        %2974 = vmatprep.subr.bf16.mxu0 0
        %2975 = vmatpush1.bf16.msra.mxu0 0
        %2976 = vmatprep.subr.bf16.mxu0 0
        %2977 = vmatpush1.bf16.msra.mxu0 0
        %2978 = vmatprep.subr.bf16.mxu0 0
        %2979 = vmatpush1.bf16.msra.mxu0 0
        %2980 = vmatprep.subr.bf16.mxu0 0
        %2981 = vmatpush1.bf16.msra.mxu0 0
        %2982 = vmatprep.subr.bf16.mxu0 0
        %2983 = vmatpush1.bf16.msra.mxu0 0
        %2984 = vmatprep.subr.bf16.mxu0 0
        %2985 = vmatpush1.bf16.msra.mxu0 0
        %2986 = vmatprep.mubr.bf16.mxu0 0
        %2987 = vmatmul.mubr.bf16.gmra.mrb[0].mxu0 %v2895
        %v2988 = vpop.f32.mrb[0].mxu0
        %v2989 = vadd.f32 0.0, %v2988
        %v2990 = vpop.f32.mrb[0].mxu0
        %v2991 = vpop.f32.mrb[0].mxu0
        %v2992 = vadd.f32 0.0, %v2991
        %v2993 = vpop.f32.mrb[0].mxu0
        %2994 = vdwg.mxu0
        %v2995 = vld [vmem:[%s8] sm:$0xf]
        %v2996 = vld [vmem:[%s8 + $0x4] sm:$0xf]
        %v2997 = vld [vmem:[%s8 + $0x8] sm:$0xf]
        %v2998 = vld [vmem:[%s8 + $0xc] sm:$0xf]
        %v3003 = vunpack.c.l.b16 %v2995
        %v3004 = vunpack.c.l.b16 %v2996
        %v3005 = vunpack.c.l.b16 %v2997
        %v3006 = vunpack.c.l.b16 %v2998
        %v3007 = vpack.c.b16 %v3004, %v3003
        %v3008 = vpack.c.b16 %v3006, %v3005
        %3011 = vmatprep.subr.bf16.mxu0 0
        %3012 = vmatpush1.bf16.msra.mxu0 %v3007
        %3013 = vmatprep.subr.bf16.mxu0 0
        %3014 = vmatpush1.bf16.msra.mxu0 %v3008
        %3015 = vmatprep.subr.bf16.mxu0 0
        %3016 = vmatpush1.bf16.msra.mxu0 0
        %3017 = vmatprep.subr.bf16.mxu0 0
        %3018 = vmatpush1.bf16.msra.mxu0 0
        %3019 = vmatprep.subr.bf16.mxu0 0
        %3020 = vmatpush1.bf16.msra.mxu0 0
        %3021 = vmatprep.subr.bf16.mxu0 0
        %3022 = vmatpush1.bf16.msra.mxu0 0
        %3023 = vmatprep.subr.bf16.mxu0 0
        %3024 = vmatpush1.bf16.msra.mxu0 0
        %3025 = vmatprep.subr.bf16.mxu0 0
        %3026 = vmatpush1.bf16.msra.mxu0 0
        %3027 = vmatprep.subr.bf16.mxu0 0
        %3028 = vmatpush1.bf16.msra.mxu0 0
        %3029 = vmatprep.subr.bf16.mxu0 0
        %3030 = vmatpush1.bf16.msra.mxu0 0
        %3031 = vmatprep.subr.bf16.mxu0 0
        %3032 = vmatpush1.bf16.msra.mxu0 0
        %3033 = vmatprep.subr.bf16.mxu0 0
        %3034 = vmatpush1.bf16.msra.mxu0 0
        %3035 = vmatprep.subr.bf16.mxu0 0
        %3036 = vmatpush1.bf16.msra.mxu0 0
        %3037 = vmatprep.subr.bf16.mxu0 0
        %3038 = vmatpush1.bf16.msra.mxu0 0
        %3039 = vmatprep.subr.bf16.mxu0 0
        %3040 = vmatpush1.bf16.msra.mxu0 0
        %3041 = vmatprep.subr.bf16.mxu0 0
        %3042 = vmatpush1.bf16.msra.mxu0 0
        %3043 = vmatprep.mubr.bf16.mxu0 0
        %3044 = vmatmul.mubr.bf16.gmra.mrb[0].mxu0 %v2895
        %v3045 = vpop.f32.mrb[0].mxu0
        %v3046 = vadd.f32 0.0, %v3045
        %v3047 = vpop.f32.mrb[0].mxu0
        %v3048 = vpop.f32.mrb[0].mxu0
        %v3049 = vadd.f32 0.0, %v3048
        %v3050 = vpop.f32.mrb[0].mxu0
        %3051 = vdwg.mxu0
        %v3052 = vpack.c.bf16 %v2935, %v2932
        %v3053 = vpack.c.bf16 %v2992, %v2989
        %vm3054 = vcmask 130048
        %v3056 = vsel %vm3054, %v3052, 0
        %v3059 = vsel %vm3054, %v3053, 0
        %3061 = vmatprep.subr.bf16.mxu0 0
        %3062 = vmatpush1.bf16.xpose.msra.mxu0 %v3059
        %3063 = vmatprep.subr.bf16.mxu0 0
        %3064 = vmatpush1.bf16.xpose.msra.mxu0 0
        %3065 = vmatprep.subr.bf16.mxu0 0
        %3066 = vmatpush1.bf16.xpose.msra.mxu0 0
        %3067 = vmatprep.subr.bf16.mxu0 0
        %3068 = vmatpush1.bf16.xpose.msra.mxu0 0
        %3069 = vmatprep.subr.bf16.mxu0 0
        %3070 = vmatpush1.bf16.xpose.msra.mxu0 0
        %3071 = vmatprep.subr.bf16.mxu0 0
        %3072 = vmatpush1.bf16.xpose.msra.mxu0 0
        %3073 = vmatprep.subr.bf16.mxu0 0
        %3074 = vmatpush1.bf16.xpose.msra.mxu0 0
        %3075 = vmatprep.subr.bf16.mxu0 0
        %3076 = vmatpush1.bf16.xpose.msra.mxu0 0
        %3077 = vmatprep.subr.bf16.mxu0 0
        %3078 = vmatpush1.bf16.xpose.msra.mxu0 0
        %3079 = vmatprep.subr.bf16.mxu0 0
        %3080 = vmatpush1.bf16.xpose.msra.mxu0 0
        %3081 = vmatprep.subr.bf16.mxu0 0
        %3082 = vmatpush1.bf16.xpose.msra.mxu0 0
        %3083 = vmatprep.subr.bf16.mxu0 0
        %3084 = vmatpush1.bf16.xpose.msra.mxu0 0
        %3085 = vmatprep.subr.bf16.mxu0 0
        %3086 = vmatpush1.bf16.xpose.msra.mxu0 0
        %3087 = vmatprep.subr.bf16.mxu0 0
        %3088 = vmatpush1.bf16.xpose.msra.mxu0 0
        %3089 = vmatprep.subr.bf16.mxu0 0
        %3090 = vmatpush1.bf16.xpose.msra.mxu0 0
        %3091 = vmatprep.subr.bf16.mxu0 0
        %3092 = vmatpush1.bf16.xpose.msra.mxu0 0
        %3093 = vmatprep.mubr.bf16.mxu0 0
        %3094 = vmatmul.mubr.bf16.gmra.mrb[0].mxu0 %v3056
        %v3095 = vpop.f32.mrb[0].mxu0
        %v3096 = vadd.f32 0.0, %v3095
        %v3097 = vpop.f32.mrb[0].mxu0
        %v3098 = vpop.f32.mrb[0].mxu0
        %v3099 = vadd.f32 0.0, %v3098
        %v3100 = vpop.f32.mrb[0].mxu0
        %3101 = vdwg.mxu0
        %v3102 = vmul.f32 %v3096, 0.25
        %v3103 = vmul.f32 %v3099, 0.25
        %v3104 = vsel %vm3054, %v3102, -inf
        %3105 = vmax.xlane.f32.xlu0 %v3104
        %v3106 = vpop.xlane.xlu0 %3105
        %v3107 = vsel %vm3054, %v3103, -inf
        %3108 = vmax.xlane.f32.xlu0 %v3107
        %v3109 = vpop.xlane.xlu0 %3108
        %v3110 = vsub.f32 %v3102, %v3106
        %v3111 = vsub.f32 %v3103, %v3109
        %v3112 = vmul.f32 %v3110, 1.442695
        %v3113 = vpow.pop %v3112
        %v3114 = vmul.f32 %v3111, 1.442695
        %v3115 = vpow.pop %v3114
        %v3116 = vsel %vm3054, %v3113, 0.0
        %3117 = vadd.xlane.f32.xlu0 %v3116
        %v3118 = vpop.xlane.xlu0 %3117
        %v3119 = vsel %vm3054, %v3115, 0.0
        %3120 = vadd.xlane.f32.xlu0 %v3119
        %v3121 = vpop.xlane.xlu0 %3120
        %v3122 = vrcp.pop %v3118
        %v3123 = vrcp.pop %v3121
        %v3124 = vmul.f32 %v3113, %v3122
        %v3125 = vmul.f32 %v3115, %v3123
        %v3126 = vpack.c.bf16 %v3125, %v3124
        %v3127 = vpack.c.bf16 %v3049, %v3046
        %v3129 = vsel %vm3054, %v3126, 0
        %3131 = vmatprep.subr.bf16.mxu0 0
        %3132 = vmatpush1.bf16.msra.mxu0 %v3127
        %3133 = vmatprep.subr.bf16.mxu0 0
        %3134 = vmatpush1.bf16.msra.mxu0 0
        %3135 = vmatprep.subr.bf16.mxu0 0
        %3136 = vmatpush1.bf16.msra.mxu0 0
        %3137 = vmatprep.subr.bf16.mxu0 0
        %3138 = vmatpush1.bf16.msra.mxu0 0
        %3139 = vmatprep.subr.bf16.mxu0 0
        %3140 = vmatpush1.bf16.msra.mxu0 0
        %3141 = vmatprep.subr.bf16.mxu0 0
        %3142 = vmatpush1.bf16.msra.mxu0 0
        %3143 = vmatprep.subr.bf16.mxu0 0
        %3144 = vmatpush1.bf16.msra.mxu0 0
        %3145 = vmatprep.subr.bf16.mxu0 0
        %3146 = vmatpush1.bf16.msra.mxu0 0
        %3147 = vmatprep.subr.bf16.mxu0 0
        %3148 = vmatpush1.bf16.msra.mxu0 0
        %3149 = vmatprep.subr.bf16.mxu0 0
        %3150 = vmatpush1.bf16.msra.mxu0 0
        %3151 = vmatprep.subr.bf16.mxu0 0
        %3152 = vmatpush1.bf16.msra.mxu0 0
        %3153 = vmatprep.subr.bf16.mxu0 0
        %3154 = vmatpush1.bf16.msra.mxu0 0
        %3155 = vmatprep.subr.bf16.mxu0 0
        %3156 = vmatpush1.bf16.msra.mxu0 0
        %3157 = vmatprep.subr.bf16.mxu0 0
        %3158 = vmatpush1.bf16.msra.mxu0 0
        %3159 = vmatprep.subr.bf16.mxu0 0
        %3160 = vmatpush1.bf16.msra.mxu0 0
        %3161 = vmatprep.subr.bf16.mxu0 0
        %3162 = vmatpush1.bf16.msra.mxu0 0
        %3163 = vmatprep.mubr.bf16.mxu0 0
        %3164 = vmatmul.mubr.bf16.gmra.mrb[0].mxu0 %v3129
        %v3165 = vpop.f32.mrb[0].mxu0
        %v3166 = vadd.f32 0.0, %v3165
        %v3167 = vpop.f32.mrb[0].mxu0
        %v3168 = vpop.f32.mrb[0].mxu0
        %v3169 = vadd.f32 0.0, %v3168
        %v3170 = vpop.f32.mrb[0].mxu0
        %3171 = vdwg.mxu0
        %v3172 = vpack.c.bf16 %v3169, %v3166
        %v3173 = vld [vmem:[%s9] sm:$0xf]
        %v3174 = vld [vmem:[%s9 + $0x4] sm:$0xf]
        %v3177 = vunpack.c.l.b16 %v3173
        %v3178 = vunpack.c.l.b16 %v3174
        %v3179 = vpack.c.b16 %v3178, %v3177
        %v3182 = vsel %vm3054, %v3172, 0
        %3184 = vmatprep.subr.bf16.mxu0 0
        %3185 = vmatpush1.bf16.msra.mxu0 %v3179
        %3186 = vmatprep.subr.bf16.mxu0 0
        %3187 = vmatpush1.bf16.msra.mxu0 0
        %3188 = vmatprep.subr.bf16.mxu0 0
        %3189 = vmatpush1.bf16.msra.mxu0 0
        %3190 = vmatprep.subr.bf16.mxu0 0
        %3191 = vmatpush1.bf16.msra.mxu0 0
        %3192 = vmatprep.subr.bf16.mxu0 0
        %3193 = vmatpush1.bf16.msra.mxu0 0
        %3194 = vmatprep.subr.bf16.mxu0 0
        %3195 = vmatpush1.bf16.msra.mxu0 0
        %3196 = vmatprep.subr.bf16.mxu0 0
        %3197 = vmatpush1.bf16.msra.mxu0 0
        %3198 = vmatprep.subr.bf16.mxu0 0
        %3199 = vmatpush1.bf16.msra.mxu0 0
        %3200 = vmatprep.subr.bf16.mxu0 0
        %3201 = vmatpush1.bf16.msra.mxu0 0
        %3202 = vmatprep.subr.bf16.mxu0 0
        %3203 = vmatpush1.bf16.msra.mxu0 0
        %3204 = vmatprep.subr.bf16.mxu0 0
        %3205 = vmatpush1.bf16.msra.mxu0 0
        %3206 = vmatprep.subr.bf16.mxu0 0
        %3207 = vmatpush1.bf16.msra.mxu0 0
        %3208 = vmatprep.subr.bf16.mxu0 0
        %3209 = vmatpush1.bf16.msra.mxu0 0
        %3210 = vmatprep.subr.bf16.mxu0 0
        %3211 = vmatpush1.bf16.msra.mxu0 0
        %3212 = vmatprep.subr.bf16.mxu0 0
        %3213 = vmatpush1.bf16.msra.mxu0 0
        %3214 = vmatprep.subr.bf16.mxu0 0
        %3215 = vmatpush1.bf16.msra.mxu0 0
        %3216 = vmatprep.mubr.bf16.mxu0 0
        %3217 = vmatmul.mubr.bf16.gmra.mrb[0].mxu0 %v3182
        %v3218 = vpop.f32.mrb[0].mxu0
        %v3219 = vadd.f32 0.0, %v3218
        %v3220 = vpop.f32.mrb[0].mxu0
        %v3221 = vpop.f32.mrb[0].mxu0
        %v3222 = vadd.f32 0.0, %v3221
        %v3223 = vpop.f32.mrb[0].mxu0
        %3224 = vdwg.mxu0
        %v3226 = vlaneseq
        %v3227 = vshrl.u32 %v3226, 7
        %v3228 = vsub.s32 0, %v3227
        %v3229 = vrot.slane %v2877, %v3228
        %v3231 = vadd.f32 %v3229, %v3219
        %v3232 = vadd.f32 %v3229, %v3222
        %s3233 = scalar_lea.vmem %s6, 16
        %v3234 = vld [vmem:[%s3233] sm:$0xf]
        %v3235 = vld [vmem:[%s3233 + $0x4] sm:$0xf]
        %v3236 = vld [vmem:[%s3233 + $0x8] sm:$0xf]
        %v3237 = vld [vmem:[%s3233 + $0xc] sm:$0xf]
        %v3242 = vunpack.c.l.b16 %v3234
        %v3243 = vunpack.c.l.b16 %v3235
        %v3244 = vunpack.c.l.b16 %v3236
        %v3245 = vunpack.c.l.b16 %v3237
        %v3246 = vpack.c.b16 %v3243, %v3242
        %v3247 = vpack.c.b16 %v3245, %v3244
        %3250 = vmatprep.subr.bf16.mxu0 0
        %3251 = vmatpush1.bf16.msra.mxu0 %v3246
        %3252 = vmatprep.subr.bf16.mxu0 0
        %3253 = vmatpush1.bf16.msra.mxu0 %v3247
        %3254 = vmatprep.subr.bf16.mxu0 0
        %3255 = vmatpush1.bf16.msra.mxu0 0
        %3256 = vmatprep.subr.bf16.mxu0 0
        %3257 = vmatpush1.bf16.msra.mxu0 0
        %3258 = vmatprep.subr.bf16.mxu0 0
        %3259 = vmatpush1.bf16.msra.mxu0 0
        %3260 = vmatprep.subr.bf16.mxu0 0
        %3261 = vmatpush1.bf16.msra.mxu0 0
        %3262 = vmatprep.subr.bf16.mxu0 0
        %3263 = vmatpush1.bf16.msra.mxu0 0
        %3264 = vmatprep.subr.bf16.mxu0 0
        %3265 = vmatpush1.bf16.msra.mxu0 0
        %3266 = vmatprep.subr.bf16.mxu0 0
        %3267 = vmatpush1.bf16.msra.mxu0 0
        %3268 = vmatprep.subr.bf16.mxu0 0
        %3269 = vmatpush1.bf16.msra.mxu0 0
        %3270 = vmatprep.subr.bf16.mxu0 0
        %3271 = vmatpush1.bf16.msra.mxu0 0
        %3272 = vmatprep.subr.bf16.mxu0 0
        %3273 = vmatpush1.bf16.msra.mxu0 0
        %3274 = vmatprep.subr.bf16.mxu0 0
        %3275 = vmatpush1.bf16.msra.mxu0 0
        %3276 = vmatprep.subr.bf16.mxu0 0
        %3277 = vmatpush1.bf16.msra.mxu0 0
        %3278 = vmatprep.subr.bf16.mxu0 0
        %3279 = vmatpush1.bf16.msra.mxu0 0
        %3280 = vmatprep.subr.bf16.mxu0 0
        %3281 = vmatpush1.bf16.msra.mxu0 0
        %3282 = vmatprep.mubr.bf16.mxu0 0
        %3283 = vmatmul.mubr.bf16.gmra.mrb[0].mxu0 %v2895
        %v3284 = vpop.f32.mrb[0].mxu0
        %v3285 = vadd.f32 0.0, %v3284
        %v3286 = vpop.f32.mrb[0].mxu0
        %v3287 = vpop.f32.mrb[0].mxu0
        %v3288 = vadd.f32 0.0, %v3287
        %v3289 = vpop.f32.mrb[0].mxu0
        %3290 = vdwg.mxu0
        %s3291 = scalar_lea.vmem %s7, 16
        %v3292 = vld [vmem:[%s3291] sm:$0xf]
        %v3293 = vld [vmem:[%s3291 + $0x4] sm:$0xf]
        %v3294 = vld [vmem:[%s3291 + $0x8] sm:$0xf]
        %v3295 = vld [vmem:[%s3291 + $0xc] sm:$0xf]
        %v3300 = vunpack.c.l.b16 %v3292
        %v3301 = vunpack.c.l.b16 %v3293
        %v3302 = vunpack.c.l.b16 %v3294
        %v3303 = vunpack.c.l.b16 %v3295
        %v3304 = vpack.c.b16 %v3301, %v3300
        %v3305 = vpack.c.b16 %v3303, %v3302
        %3308 = vmatprep.subr.bf16.mxu0 0
        %3309 = vmatpush1.bf16.msra.mxu0 %v3304
        %3310 = vmatprep.subr.bf16.mxu0 0
        %3311 = vmatpush1.bf16.msra.mxu0 %v3305
        %3312 = vmatprep.subr.bf16.mxu0 0
        %3313 = vmatpush1.bf16.msra.mxu0 0
        %3314 = vmatprep.subr.bf16.mxu0 0
        %3315 = vmatpush1.bf16.msra.mxu0 0
        %3316 = vmatprep.subr.bf16.mxu0 0
        %3317 = vmatpush1.bf16.msra.mxu0 0
        %3318 = vmatprep.subr.bf16.mxu0 0
        %3319 = vmatpush1.bf16.msra.mxu0 0
        %3320 = vmatprep.subr.bf16.mxu0 0
        %3321 = vmatpush1.bf16.msra.mxu0 0
        %3322 = vmatprep.subr.bf16.mxu0 0
        %3323 = vmatpush1.bf16.msra.mxu0 0
        %3324 = vmatprep.subr.bf16.mxu0 0
        %3325 = vmatpush1.bf16.msra.mxu0 0
        %3326 = vmatprep.subr.bf16.mxu0 0
        %3327 = vmatpush1.bf16.msra.mxu0 0
        %3328 = vmatprep.subr.bf16.mxu0 0
        %3329 = vmatpush1.bf16.msra.mxu0 0
        %3330 = vmatprep.subr.bf16.mxu0 0
        %3331 = vmatpush1.bf16.msra.mxu0 0
        %3332 = vmatprep.subr.bf16.mxu0 0
        %3333 = vmatpush1.bf16.msra.mxu0 0
        %3334 = vmatprep.subr.bf16.mxu0 0
        %3335 = vmatpush1.bf16.msra.mxu0 0
        %3336 = vmatprep.subr.bf16.mxu0 0
        %3337 = vmatpush1.bf16.msra.mxu0 0
        %3338 = vmatprep.subr.bf16.mxu0 0
        %3339 = vmatpush1.bf16.msra.mxu0 0
        %3340 = vmatprep.mubr.bf16.mxu0 0
        %3341 = vmatmul.mubr.bf16.gmra.mrb[0].mxu0 %v2895
        %v3342 = vpop.f32.mrb[0].mxu0
        %v3343 = vadd.f32 0.0, %v3342
        %v3344 = vpop.f32.mrb[0].mxu0
        %v3345 = vpop.f32.mrb[0].mxu0
        %v3346 = vadd.f32 0.0, %v3345
        %v3347 = vpop.f32.mrb[0].mxu0
        %3348 = vdwg.mxu0
        %s3349 = scalar_lea.vmem %s8, 16
        %v3350 = vld [vmem:[%s3349] sm:$0xf]
        %v3351 = vld [vmem:[%s3349 + $0x4] sm:$0xf]
        %v3352 = vld [vmem:[%s3349 + $0x8] sm:$0xf]
        %v3353 = vld [vmem:[%s3349 + $0xc] sm:$0xf]
        %v3358 = vunpack.c.l.b16 %v3350
        %v3359 = vunpack.c.l.b16 %v3351
        %v3360 = vunpack.c.l.b16 %v3352
        %v3361 = vunpack.c.l.b16 %v3353
        %v3362 = vpack.c.b16 %v3359, %v3358
        %v3363 = vpack.c.b16 %v3361, %v3360
        %3366 = vmatprep.subr.bf16.mxu0 0
        %3367 = vmatpush1.bf16.msra.mxu0 %v3362
        %3368 = vmatprep.subr.bf16.mxu0 0
        %3369 = vmatpush1.bf16.msra.mxu0 %v3363
        %3370 = vmatprep.subr.bf16.mxu0 0
        %3371 = vmatpush1.bf16.msra.mxu0 0
        %3372 = vmatprep.subr.bf16.mxu0 0
        %3373 = vmatpush1.bf16.msra.mxu0 0
        %3374 = vmatprep.subr.bf16.mxu0 0
        %3375 = vmatpush1.bf16.msra.mxu0 0
        %3376 = vmatprep.subr.bf16.mxu0 0
        %3377 = vmatpush1.bf16.msra.mxu0 0
        %3378 = vmatprep.subr.bf16.mxu0 0
        %3379 = vmatpush1.bf16.msra.mxu0 0
        %3380 = vmatprep.subr.bf16.mxu0 0
        %3381 = vmatpush1.bf16.msra.mxu0 0
        %3382 = vmatprep.subr.bf16.mxu0 0
        %3383 = vmatpush1.bf16.msra.mxu0 0
        %3384 = vmatprep.subr.bf16.mxu0 0
        %3385 = vmatpush1.bf16.msra.mxu0 0
        %3386 = vmatprep.subr.bf16.mxu0 0
        %3387 = vmatpush1.bf16.msra.mxu0 0
        %3388 = vmatprep.subr.bf16.mxu0 0
        %3389 = vmatpush1.bf16.msra.mxu0 0
        %3390 = vmatprep.subr.bf16.mxu0 0
        %3391 = vmatpush1.bf16.msra.mxu0 0
        %3392 = vmatprep.subr.bf16.mxu0 0
        %3393 = vmatpush1.bf16.msra.mxu0 0
        %3394 = vmatprep.subr.bf16.mxu0 0
        %3395 = vmatpush1.bf16.msra.mxu0 0
        %3396 = vmatprep.subr.bf16.mxu0 0
        %3397 = vmatpush1.bf16.msra.mxu0 0
        %3398 = vmatprep.mubr.bf16.mxu0 0
        %3399 = vmatmul.mubr.bf16.gmra.mrb[0].mxu0 %v2895
        %v3400 = vpop.f32.mrb[0].mxu0
        %v3401 = vadd.f32 0.0, %v3400
        %v3402 = vpop.f32.mrb[0].mxu0
        %v3403 = vpop.f32.mrb[0].mxu0
        %v3404 = vadd.f32 0.0, %v3403
        %v3405 = vpop.f32.mrb[0].mxu0
        %3406 = vdwg.mxu0
        %v3407 = vpack.c.bf16 %v3288, %v3285
        %v3408 = vpack.c.bf16 %v3346, %v3343
        %v3410 = vsel %vm3054, %v3407, 0
        %v3413 = vsel %vm3054, %v3408, 0
        %3415 = vmatprep.subr.bf16.mxu0 0
        %3416 = vmatpush1.bf16.xpose.msra.mxu0 %v3413
        %3417 = vmatprep.subr.bf16.mxu0 0
        %3418 = vmatpush1.bf16.xpose.msra.mxu0 0
        %3419 = vmatprep.subr.bf16.mxu0 0
        %3420 = vmatpush1.bf16.xpose.msra.mxu0 0
        %3421 = vmatprep.subr.bf16.mxu0 0
        %3422 = vmatpush1.bf16.xpose.msra.mxu0 0
        %3423 = vmatprep.subr.bf16.mxu0 0
        %3424 = vmatpush1.bf16.xpose.msra.mxu0 0
        %3425 = vmatprep.subr.bf16.mxu0 0
        %3426 = vmatpush1.bf16.xpose.msra.mxu0 0
        %3427 = vmatprep.subr.bf16.mxu0 0
        %3428 = vmatpush1.bf16.xpose.msra.mxu0 0
        %3429 = vmatprep.subr.bf16.mxu0 0
        %3430 = vmatpush1.bf16.xpose.msra.mxu0 0
        %3431 = vmatprep.subr.bf16.mxu0 0
        %3432 = vmatpush1.bf16.xpose.msra.mxu0 0
        %3433 = vmatprep.subr.bf16.mxu0 0
        %3434 = vmatpush1.bf16.xpose.msra.mxu0 0
        %3435 = vmatprep.subr.bf16.mxu0 0
        %3436 = vmatpush1.bf16.xpose.msra.mxu0 0
        %3437 = vmatprep.subr.bf16.mxu0 0
        %3438 = vmatpush1.bf16.xpose.msra.mxu0 0
        %3439 = vmatprep.subr.bf16.mxu0 0
        %3440 = vmatpush1.bf16.xpose.msra.mxu0 0
        %3441 = vmatprep.subr.bf16.mxu0 0
        %3442 = vmatpush1.bf16.xpose.msra.mxu0 0
        %3443 = vmatprep.subr.bf16.mxu0 0
        %3444 = vmatpush1.bf16.xpose.msra.mxu0 0
        %3445 = vmatprep.subr.bf16.mxu0 0
        %3446 = vmatpush1.bf16.xpose.msra.mxu0 0
        %3447 = vmatprep.mubr.bf16.mxu0 0
        %3448 = vmatmul.mubr.bf16.gmra.mrb[0].mxu0 %v3410
        %v3449 = vpop.f32.mrb[0].mxu0
        %v3450 = vadd.f32 0.0, %v3449
        %v3451 = vpop.f32.mrb[0].mxu0
        %v3452 = vpop.f32.mrb[0].mxu0
        %v3453 = vadd.f32 0.0, %v3452
        %v3454 = vpop.f32.mrb[0].mxu0
        %3455 = vdwg.mxu0
        %v3456 = vmul.f32 %v3450, 0.25
        %v3457 = vmul.f32 %v3453, 0.25
        %v3458 = vsel %vm3054, %v3456, -inf
        %3459 = vmax.xlane.f32.xlu0 %v3458
        %v3460 = vpop.xlane.xlu0 %3459
        %v3461 = vsel %vm3054, %v3457, -inf
        %3462 = vmax.xlane.f32.xlu0 %v3461
        %v3463 = vpop.xlane.xlu0 %3462
        %v3464 = vsub.f32 %v3456, %v3460
        %v3465 = vsub.f32 %v3457, %v3463
        %v3466 = vmul.f32 %v3464, 1.442695
        %v3467 = vpow.pop %v3466
        %v3468 = vmul.f32 %v3465, 1.442695
        %v3469 = vpow.pop %v3468
        %v3470 = vsel %vm3054, %v3467, 0.0
        %3471 = vadd.xlane.f32.xlu0 %v3470
        %v3472 = vpop.xlane.xlu0 %3471
        %v3473 = vsel %vm3054, %v3469, 0.0
        %3474 = vadd.xlane.f32.xlu0 %v3473
        %v3475 = vpop.xlane.xlu0 %3474
        %v3476 = vrcp.pop %v3472
        %v3477 = vrcp.pop %v3475
        %v3478 = vmul.f32 %v3467, %v3476
        %v3479 = vmul.f32 %v3469, %v3477
        %v3480 = vpack.c.bf16 %v3479, %v3478
        %v3481 = vpack.c.bf16 %v3404, %v3401
        %v3483 = vsel %vm3054, %v3480, 0
        %3485 = vmatprep.subr.bf16.mxu0 0
        %3486 = vmatpush1.bf16.msra.mxu0 %v3481
        %3487 = vmatprep.subr.bf16.mxu0 0
        %3488 = vmatpush1.bf16.msra.mxu0 0
        %3489 = vmatprep.subr.bf16.mxu0 0
        %3490 = vmatpush1.bf16.msra.mxu0 0
        %3491 = vmatprep.subr.bf16.mxu0 0
        %3492 = vmatpush1.bf16.msra.mxu0 0
        %3493 = vmatprep.subr.bf16.mxu0 0
        %3494 = vmatpush1.bf16.msra.mxu0 0
        %3495 = vmatprep.subr.bf16.mxu0 0
        %3496 = vmatpush1.bf16.msra.mxu0 0
        %3497 = vmatprep.subr.bf16.mxu0 0
        %3498 = vmatpush1.bf16.msra.mxu0 0
        %3499 = vmatprep.subr.bf16.mxu0 0
        %3500 = vmatpush1.bf16.msra.mxu0 0
        %3501 = vmatprep.subr.bf16.mxu0 0
        %3502 = vmatpush1.bf16.msra.mxu0 0
        %3503 = vmatprep.subr.bf16.mxu0 0
        %3504 = vmatpush1.bf16.msra.mxu0 0
        %3505 = vmatprep.subr.bf16.mxu0 0
        %3506 = vmatpush1.bf16.msra.mxu0 0
        %3507 = vmatprep.subr.bf16.mxu0 0
        %3508 = vmatpush1.bf16.msra.mxu0 0
        %3509 = vmatprep.subr.bf16.mxu0 0
        %3510 = vmatpush1.bf16.msra.mxu0 0
        %3511 = vmatprep.subr.bf16.mxu0 0
        %3512 = vmatpush1.bf16.msra.mxu0 0
        %3513 = vmatprep.subr.bf16.mxu0 0
        %3514 = vmatpush1.bf16.msra.mxu0 0
        %3515 = vmatprep.subr.bf16.mxu0 0
        %3516 = vmatpush1.bf16.msra.mxu0 0
        %3517 = vmatprep.mubr.bf16.mxu0 0
        %3518 = vmatmul.mubr.bf16.gmra.mrb[0].mxu0 %v3483
        %v3519 = vpop.f32.mrb[0].mxu0
        %v3520 = vadd.f32 0.0, %v3519
        %v3521 = vpop.f32.mrb[0].mxu0
        %v3522 = vpop.f32.mrb[0].mxu0
        %v3523 = vadd.f32 0.0, %v3522
        %v3524 = vpop.f32.mrb[0].mxu0
        %3525 = vdwg.mxu0
        %v3526 = vpack.c.bf16 %v3523, %v3520
        %s3527 = scalar_lea.vmem %s9, 8
        %v3528 = vld [vmem:[%s3527] sm:$0xf]
        %v3529 = vld [vmem:[%s3527 + $0x4] sm:$0xf]
        %v3532 = vunpack.c.l.b16 %v3528
        %v3533 = vunpack.c.l.b16 %v3529
        %v3534 = vpack.c.b16 %v3533, %v3532
        %v3537 = vsel %vm3054, %v3526, 0
        %3539 = vmatprep.subr.bf16.mxu0 0
        %3540 = vmatpush1.bf16.msra.mxu0 %v3534
        %3541 = vmatprep.subr.bf16.mxu0 0
        %3542 = vmatpush1.bf16.msra.mxu0 0
        %3543 = vmatprep.subr.bf16.mxu0 0
        %3544 = vmatpush1.bf16.msra.mxu0 0
        %3545 = vmatprep.subr.bf16.mxu0 0
        %3546 = vmatpush1.bf16.msra.mxu0 0
        %3547 = vmatprep.subr.bf16.mxu0 0
        %3548 = vmatpush1.bf16.msra.mxu0 0
        %3549 = vmatprep.subr.bf16.mxu0 0
        %3550 = vmatpush1.bf16.msra.mxu0 0
        %3551 = vmatprep.subr.bf16.mxu0 0
        %3552 = vmatpush1.bf16.msra.mxu0 0
        %3553 = vmatprep.subr.bf16.mxu0 0
        %3554 = vmatpush1.bf16.msra.mxu0 0
        %3555 = vmatprep.subr.bf16.mxu0 0
        %3556 = vmatpush1.bf16.msra.mxu0 0
        %3557 = vmatprep.subr.bf16.mxu0 0
        %3558 = vmatpush1.bf16.msra.mxu0 0
        %3559 = vmatprep.subr.bf16.mxu0 0
        %3560 = vmatpush1.bf16.msra.mxu0 0
        %3561 = vmatprep.subr.bf16.mxu0 0
        %3562 = vmatpush1.bf16.msra.mxu0 0
        %3563 = vmatprep.subr.bf16.mxu0 0
        %3564 = vmatpush1.bf16.msra.mxu0 0
        %3565 = vmatprep.subr.bf16.mxu0 0
        %3566 = vmatpush1.bf16.msra.mxu0 0
        %3567 = vmatprep.subr.bf16.mxu0 0
        %3568 = vmatpush1.bf16.msra.mxu0 0
        %3569 = vmatprep.subr.bf16.mxu0 0
        %3570 = vmatpush1.bf16.msra.mxu0 0
        %3571 = vmatprep.mubr.bf16.mxu0 0
        %3572 = vmatmul.mubr.bf16.gmra.mrb[0].mxu0 %v3537
        %v3573 = vpop.f32.mrb[0].mxu0
        %v3574 = vadd.f32 0.0, %v3573
        %v3575 = vpop.f32.mrb[0].mxu0
        %v3576 = vpop.f32.mrb[0].mxu0
        %v3577 = vadd.f32 0.0, %v3576
        %v3578 = vpop.f32.mrb[0].mxu0
        %3579 = vdwg.mxu0
        %v3580 = vadd.f32 %v3231, %v3574
        %v3581 = vadd.f32 %v3232, %v3577
        %v3582 = vadd.f32 %v2829, %v3580
        %v3583 = vadd.f32 %v2830, %v3581
        %v3584 = vld [vmem:[%s11] sm:$0x1]
        %v3585 = vld [vmem:[%s12] sm:$0x1]
        %v3586 = vsel %vm785, %v3582, 0.0
        %3587 = vadd.xlane.f32.xlu0 %v3586
        %v3588 = vpop.xlane.xlu0 %3587
        %v3589 = vsel %vm785, %v3583, 0.0
        %3590 = vadd.xlane.f32.xlu0 %v3589
        %v3591 = vpop.xlane.xlu0 %3590
        %v3592 = vmul.f32 %v3588, %v2839
        %v3593 = vmul.f32 %v3591, %v2839
        %v3594 = vsub.f32 %v3582, %v3592
        %v3595 = vsub.f32 %v3583, %v3593
        %v3596 = vmul.f32 %v3594, %v3594
        %v3597 = vmul.f32 %v3595, %v3595
        %v3598 = vsel %vm785, %v3596, 0.0
        %3599 = vadd.xlane.f32.xlu0 %v3598
        %v3600 = vpop.xlane.xlu0 %3599
        %v3601 = vsel %vm785, %v3597, 0.0
        %3602 = vadd.xlane.f32.xlu0 %v3601
        %v3603 = vpop.xlane.xlu0 %3602
        %v3604 = vmul.f32 %v3600, %v2839
        %v3605 = vmul.f32 %v3603, %v2839
        %v3606 = vadd.f32 %v3604, 1e-05
        %v3607 = vadd.f32 %v3605, 1e-05
        %v3608 = vrsqrt.pop %v3606
        %v3609 = vrsqrt.pop %v3607
        %v3610 = vmul.f32 %v3594, %v3608
        %v3611 = vmul.f32 %v3595, %v3609
        %v3613 = vlaneseq
        %v3614 = vshrl.u32 %v3613, 7
        %v3615 = vsub.s32 0, %v3614
        %v3616 = vrot.slane %v3584, %v3615
        %v3618 = vmul.f32 %v3610, %v3616
        %v3619 = vmul.f32 %v3611, %v3616
        %v3621 = vlaneseq
        %v3622 = vshrl.u32 %v3621, 7
        %v3623 = vsub.s32 0, %v3622
        %v3624 = vrot.slane %v3585, %v3623
        %v3626 = vadd.f32 %v3618, %v3624
        %v3627 = vadd.f32 %v3619, %v3624
        %v3628 = vpack.c.bf16 %v3627, %v3626
        %v3629 = vld [vmem:[%s13] sm:$0xf]
        %v3630 = vld [vmem:[%s13 + $0x4] sm:$0xf]
        %v3631 = vld [vmem:[%s13 + $0x8] sm:$0xf]
        %v3632 = vld [vmem:[%s13 + $0xc] sm:$0xf]
        %v3633 = vld [vmem:[%s14] sm:$0x1]
        %v3635 = vlaneseq
        %v3636 = vshrl.u32 %v3635, 7
        %v3637 = vsub.s32 0, %v3636
        %v3638 = vrot.slane %v3633, %v3637
        %v3644 = vunpack.c.l.b16 %v3629
        %v3645 = vunpack.c.l.b16 %v3630
        %v3646 = vunpack.c.l.b16 %v3631
        %v3647 = vunpack.c.l.b16 %v3632
        %v3648 = vpack.c.b16 %v3645, %v3644
        %v3649 = vpack.c.b16 %v3647, %v3646
        %v3653 = vsel %vm785, %v3628, 0
        %3655 = vmatprep.subr.bf16.mxu0 0
        %3656 = vmatpush1.bf16.msra.mxu0 %v3648
        %3657 = vmatprep.subr.bf16.mxu0 0
        %3658 = vmatpush1.bf16.msra.mxu0 %v3649
        %3659 = vmatprep.subr.bf16.mxu0 0
        %3660 = vmatpush1.bf16.msra.mxu0 0
        %3661 = vmatprep.subr.bf16.mxu0 0
        %3662 = vmatpush1.bf16.msra.mxu0 0
        %3663 = vmatprep.subr.bf16.mxu0 0
        %3664 = vmatpush1.bf16.msra.mxu0 0
        %3665 = vmatprep.subr.bf16.mxu0 0
        %3666 = vmatpush1.bf16.msra.mxu0 0
        %3667 = vmatprep.subr.bf16.mxu0 0
        %3668 = vmatpush1.bf16.msra.mxu0 0
        %3669 = vmatprep.subr.bf16.mxu0 0
        %3670 = vmatpush1.bf16.msra.mxu0 0
        %3671 = vmatprep.subr.bf16.mxu0 0
        %3672 = vmatpush1.bf16.msra.mxu0 0
        %3673 = vmatprep.subr.bf16.mxu0 0
        %3674 = vmatpush1.bf16.msra.mxu0 0
        %3675 = vmatprep.subr.bf16.mxu0 0
        %3676 = vmatpush1.bf16.msra.mxu0 0
        %3677 = vmatprep.subr.bf16.mxu0 0
        %3678 = vmatpush1.bf16.msra.mxu0 0
        %3679 = vmatprep.subr.bf16.mxu0 0
        %3680 = vmatpush1.bf16.msra.mxu0 0
        %3681 = vmatprep.subr.bf16.mxu0 0
        %3682 = vmatpush1.bf16.msra.mxu0 0
        %3683 = vmatprep.subr.bf16.mxu0 0
        %3684 = vmatpush1.bf16.msra.mxu0 0
        %3685 = vmatprep.subr.bf16.mxu0 0
        %3686 = vmatpush1.bf16.msra.mxu0 0
        %3687 = vmatprep.mubr.bf16.mxu0 0
        %3688 = vmatmul.mubr.bf16.gmra.mrb[0].mxu0 %v3653
        %v3689 = vpop.f32.mrb[0].mxu0
        %v3690 = vadd.f32 %v3638, %v3689
        %v3691 = vpop.f32.mrb[0].mxu0
        %v3692 = vpop.f32.mrb[0].mxu0
        %v3693 = vadd.f32 %v3638, %v3692
        %v3694 = vpop.f32.mrb[0].mxu0
        %3695 = vdwg.mxu0
        %v3696 = vmul.f32 %v3690, %v3690
        %v3697 = vmul.f32 %v3693, %v3693
        %v3698 = vmul.f32 %v3690, %v3696
        %v3699 = vmul.f32 %v3693, %v3697
        %v3700 = vmul.f32 %v3698, 0.044715
        %v3701 = vmul.f32 %v3699, 0.044715
        %v3702 = vadd.f32 %v3690, %v3700
        %v3703 = vadd.f32 %v3693, %v3701
        %v3704 = vmul.f32 %v3702, 0.7978846
        %v3705 = vmul.f32 %v3703, 0.7978846
        %v3706 = vtanh.pop %v3704
        %v3707 = vtanh.pop %v3705
        %v3708 = vadd.f32 %v3706, 1.0
        %v3709 = vadd.f32 %v3707, 1.0
        %v3710 = vmul.f32 %v3708, 0.5
        %v3711 = vmul.f32 %v3709, 0.5
        %v3712 = vmul.f32 %v3690, %v3710
        %v3713 = vmul.f32 %v3693, %v3711
        %v3714 = vpack.c.bf16 %v3713, %v3712
        %v3715 = vld [vmem:[%s15] sm:$0xf]
        %v3716 = vld [vmem:[%s15 + $0x4] sm:$0xf]
        %v3717 = vld [vmem:[%s15 + $0x8] sm:$0xf]
        %v3718 = vld [vmem:[%s15 + $0xc] sm:$0xf]
        %v3719 = vld [vmem:[%s15 + $0x10] sm:$0xf]
        %v3720 = vld [vmem:[%s15 + $0x14] sm:$0xf]
        %v3721 = vld [vmem:[%s15 + $0x18] sm:$0xf]
        %v3722 = vld [vmem:[%s15 + $0x1c] sm:$0xf]
        %v3723 = vld [vmem:[%s16] sm:$0x1]
        %v3725 = vlaneseq
        %v3726 = vshrl.u32 %v3725, 7
        %v3727 = vsub.s32 0, %v3726
        %v3728 = vrot.slane %v3723, %v3727
        %v3738 = vunpack.c.l.b16 %v3715
        %v3739 = vunpack.c.l.b16 %v3716
        %v3740 = vunpack.c.l.b16 %v3717
        %v3741 = vunpack.c.l.b16 %v3718
        %v3742 = vunpack.c.l.b16 %v3719
        %v3743 = vunpack.c.l.b16 %v3720
        %v3744 = vunpack.c.l.b16 %v3721
        %v3745 = vunpack.c.l.b16 %v3722
        %v3746 = vpack.c.b16 %v3739, %v3738
        %v3747 = vpack.c.b16 %v3741, %v3740
        %v3748 = vpack.c.b16 %v3743, %v3742
        %v3749 = vpack.c.b16 %v3745, %v3744
        %vm3754 = vcmask 523264
        %v3756 = vsel %vm3754, %v3714, 0
        %3758 = vmatprep.subr.bf16.mxu0 0
        %3759 = vmatpush1.bf16.msra.mxu0 %v3746
        %3760 = vmatprep.subr.bf16.mxu0 0
        %3761 = vmatpush1.bf16.msra.mxu0 %v3747
        %3762 = vmatprep.subr.bf16.mxu0 0
        %3763 = vmatpush1.bf16.msra.mxu0 %v3748
        %3764 = vmatprep.subr.bf16.mxu0 0
        %3765 = vmatpush1.bf16.msra.mxu0 %v3749
        %3766 = vmatprep.subr.bf16.mxu0 0
        %3767 = vmatpush1.bf16.msra.mxu0 0
        %3768 = vmatprep.subr.bf16.mxu0 0
        %3769 = vmatpush1.bf16.msra.mxu0 0
        %3770 = vmatprep.subr.bf16.mxu0 0
        %3771 = vmatpush1.bf16.msra.mxu0 0
        %3772 = vmatprep.subr.bf16.mxu0 0
        %3773 = vmatpush1.bf16.msra.mxu0 0
        %3774 = vmatprep.subr.bf16.mxu0 0
        %3775 = vmatpush1.bf16.msra.mxu0 0
        %3776 = vmatprep.subr.bf16.mxu0 0
        %3777 = vmatpush1.bf16.msra.mxu0 0
        %3778 = vmatprep.subr.bf16.mxu0 0
        %3779 = vmatpush1.bf16.msra.mxu0 0
        %3780 = vmatprep.subr.bf16.mxu0 0
        %3781 = vmatpush1.bf16.msra.mxu0 0
        %3782 = vmatprep.subr.bf16.mxu0 0
        %3783 = vmatpush1.bf16.msra.mxu0 0
        %3784 = vmatprep.subr.bf16.mxu0 0
        %3785 = vmatpush1.bf16.msra.mxu0 0
        %3786 = vmatprep.subr.bf16.mxu0 0
        %3787 = vmatpush1.bf16.msra.mxu0 0
        %3788 = vmatprep.subr.bf16.mxu0 0
        %3789 = vmatpush1.bf16.msra.mxu0 0
        %3790 = vmatprep.mubr.bf16.mxu0 0
        %3791 = vmatmul.mubr.bf16.gmra.mrb[0].mxu0 %v3756
        %v3792 = vpop.f32.mrb[0].mxu0
        %v3793 = vadd.f32 %v3728, %v3792
        %v3794 = vpop.f32.mrb[0].mxu0
        %v3795 = vpop.f32.mrb[0].mxu0
        %v3796 = vadd.f32 %v3728, %v3795
        %v3797 = vpop.f32.mrb[0].mxu0
        %3798 = vdwg.mxu0
        %v3799 = vadd.f32 %v3582, %v3793
        %v3800 = vadd.f32 %v3583, %v3796
        %s3801 = scalar_lea.vmem %s4, 1
        %v3802 = vld [vmem:[%s3801] sm:$0x1]
        %s3803 = scalar_lea.vmem %s5, 1
        %v3804 = vld [vmem:[%s3803] sm:$0x1]
        %v3805 = vsel %vm785, %v3799, 0.0
        %3806 = vadd.xlane.f32.xlu0 %v3805
        %v3807 = vpop.xlane.xlu0 %3806
        %v3808 = vsel %vm785, %v3800, 0.0
        %3809 = vadd.xlane.f32.xlu0 %v3808
        %v3810 = vpop.xlane.xlu0 %3809
        %v3811 = vmul.f32 %v3807, %v2839
        %v3812 = vmul.f32 %v3810, %v2839
        %v3813 = vsub.f32 %v3799, %v3811
        %v3814 = vsub.f32 %v3800, %v3812
        %v3815 = vmul.f32 %v3813, %v3813
        %v3816 = vmul.f32 %v3814, %v3814
        %v3817 = vsel %vm785, %v3815, 0.0
        %3818 = vadd.xlane.f32.xlu0 %v3817
        %v3819 = vpop.xlane.xlu0 %3818
        %v3820 = vsel %vm785, %v3816, 0.0
        %3821 = vadd.xlane.f32.xlu0 %v3820
        %v3822 = vpop.xlane.xlu0 %3821
        %v3823 = vmul.f32 %v3819, %v2839
        %v3824 = vmul.f32 %v3822, %v2839
        %v3825 = vadd.f32 %v3823, 1e-05
        %v3826 = vadd.f32 %v3824, 1e-05
        %v3827 = vrsqrt.pop %v3825
        %v3828 = vrsqrt.pop %v3826
        %v3829 = vmul.f32 %v3813, %v3827
        %v3830 = vmul.f32 %v3814, %v3828
        %v3832 = vlaneseq
        %v3833 = vshrl.u32 %v3832, 7
        %v3834 = vsub.s32 0, %v3833
        %v3835 = vrot.slane %v3802, %v3834
        %v3837 = vmul.f32 %v3829, %v3835
        %v3838 = vmul.f32 %v3830, %v3835
        %v3840 = vlaneseq
        %v3841 = vshrl.u32 %v3840, 7
        %v3842 = vsub.s32 0, %v3841
        %v3843 = vrot.slane %v3804, %v3842
        %v3845 = vadd.f32 %v3837, %v3843
        %v3846 = vadd.f32 %v3838, %v3843
        %v3847 = vpack.c.bf16 %v3846, %v3845
        %s3848 = scalar_lea.vmem %s10, 1
        %v3849 = vld [vmem:[%s3848] sm:$0x1]
        %s3850 = scalar_lea.vmem %s6, 32
        %v3851 = vld [vmem:[%s3850] sm:$0xf]
        %v3852 = vld [vmem:[%s3850 + $0x4] sm:$0xf]
        %v3853 = vld [vmem:[%s3850 + $0x8] sm:$0xf]
        %v3854 = vld [vmem:[%s3850 + $0xc] sm:$0xf]
        %v3859 = vunpack.c.l.b16 %v3851
        %v3860 = vunpack.c.l.b16 %v3852
        %v3861 = vunpack.c.l.b16 %v3853
        %v3862 = vunpack.c.l.b16 %v3854
        %v3863 = vpack.c.b16 %v3860, %v3859
        %v3864 = vpack.c.b16 %v3862, %v3861
        %v3868 = vsel %vm785, %v3847, 0
        %3870 = vmatprep.subr.bf16.mxu0 0
        %3871 = vmatpush1.bf16.msra.mxu0 %v3863
        %3872 = vmatprep.subr.bf16.mxu0 0
        %3873 = vmatpush1.bf16.msra.mxu0 %v3864
        %3874 = vmatprep.subr.bf16.mxu0 0
        %3875 = vmatpush1.bf16.msra.mxu0 0
        %3876 = vmatprep.subr.bf16.mxu0 0
        %3877 = vmatpush1.bf16.msra.mxu0 0
        %3878 = vmatprep.subr.bf16.mxu0 0
        %3879 = vmatpush1.bf16.msra.mxu0 0
        %3880 = vmatprep.subr.bf16.mxu0 0
        %3881 = vmatpush1.bf16.msra.mxu0 0
        %3882 = vmatprep.subr.bf16.mxu0 0
        %3883 = vmatpush1.bf16.msra.mxu0 0
        %3884 = vmatprep.subr.bf16.mxu0 0
        %3885 = vmatpush1.bf16.msra.mxu0 0
        %3886 = vmatprep.subr.bf16.mxu0 0
        %3887 = vmatpush1.bf16.msra.mxu0 0
        %3888 = vmatprep.subr.bf16.mxu0 0
        %3889 = vmatpush1.bf16.msra.mxu0 0
        %3890 = vmatprep.subr.bf16.mxu0 0
        %3891 = vmatpush1.bf16.msra.mxu0 0
        %3892 = vmatprep.subr.bf16.mxu0 0
        %3893 = vmatpush1.bf16.msra.mxu0 0
        %3894 = vmatprep.subr.bf16.mxu0 0
        %3895 = vmatpush1.bf16.msra.mxu0 0
        %3896 = vmatprep.subr.bf16.mxu0 0
        %3897 = vmatpush1.bf16.msra.mxu0 0
        %3898 = vmatprep.subr.bf16.mxu0 0
        %3899 = vmatpush1.bf16.msra.mxu0 0
        %3900 = vmatprep.subr.bf16.mxu0 0
        %3901 = vmatpush1.bf16.msra.mxu0 0
        %3902 = vmatprep.mubr.bf16.mxu0 0
        %3903 = vmatmul.mubr.bf16.gmra.mrb[0].mxu0 %v3868
        %v3904 = vpop.f32.mrb[0].mxu0
        %v3905 = vadd.f32 0.0, %v3904
        %v3906 = vpop.f32.mrb[0].mxu0
        %v3907 = vpop.f32.mrb[0].mxu0
        %v3908 = vadd.f32 0.0, %v3907
        %v3909 = vpop.f32.mrb[0].mxu0
        %3910 = vdwg.mxu0
        %s3911 = scalar_lea.vmem %s7, 32
        %v3912 = vld [vmem:[%s3911] sm:$0xf]
        %v3913 = vld [vmem:[%s3911 + $0x4] sm:$0xf]
        %v3914 = vld [vmem:[%s3911 + $0x8] sm:$0xf]
        %v3915 = vld [vmem:[%s3911 + $0xc] sm:$0xf]
        %v3920 = vunpack.c.l.b16 %v3912
        %v3921 = vunpack.c.l.b16 %v3913
        %v3922 = vunpack.c.l.b16 %v3914
        %v3923 = vunpack.c.l.b16 %v3915
        %v3924 = vpack.c.b16 %v3921, %v3920
        %v3925 = vpack.c.b16 %v3923, %v3922
        %3928 = vmatprep.subr.bf16.mxu0 0
        %3929 = vmatpush1.bf16.msra.mxu0 %v3924
        %3930 = vmatprep.subr.bf16.mxu0 0
        %3931 = vmatpush1.bf16.msra.mxu0 %v3925
        %3932 = vmatprep.subr.bf16.mxu0 0
        %3933 = vmatpush1.bf16.msra.mxu0 0
        %3934 = vmatprep.subr.bf16.mxu0 0
        %3935 = vmatpush1.bf16.msra.mxu0 0
        %3936 = vmatprep.subr.bf16.mxu0 0
        %3937 = vmatpush1.bf16.msra.mxu0 0
        %3938 = vmatprep.subr.bf16.mxu0 0
        %3939 = vmatpush1.bf16.msra.mxu0 0
        %3940 = vmatprep.subr.bf16.mxu0 0
        %3941 = vmatpush1.bf16.msra.mxu0 0
        %3942 = vmatprep.subr.bf16.mxu0 0
        %3943 = vmatpush1.bf16.msra.mxu0 0
        %3944 = vmatprep.subr.bf16.mxu0 0
        %3945 = vmatpush1.bf16.msra.mxu0 0
        %3946 = vmatprep.subr.bf16.mxu0 0
        %3947 = vmatpush1.bf16.msra.mxu0 0
        %3948 = vmatprep.subr.bf16.mxu0 0
        %3949 = vmatpush1.bf16.msra.mxu0 0
        %3950 = vmatprep.subr.bf16.mxu0 0
        %3951 = vmatpush1.bf16.msra.mxu0 0
        %3952 = vmatprep.subr.bf16.mxu0 0
        %3953 = vmatpush1.bf16.msra.mxu0 0
        %3954 = vmatprep.subr.bf16.mxu0 0
        %3955 = vmatpush1.bf16.msra.mxu0 0
        %3956 = vmatprep.subr.bf16.mxu0 0
        %3957 = vmatpush1.bf16.msra.mxu0 0
        %3958 = vmatprep.subr.bf16.mxu0 0
        %3959 = vmatpush1.bf16.msra.mxu0 0
        %3960 = vmatprep.mubr.bf16.mxu0 0
        %3961 = vmatmul.mubr.bf16.gmra.mrb[0].mxu0 %v3868
        %v3962 = vpop.f32.mrb[0].mxu0
        %v3963 = vadd.f32 0.0, %v3962
        %v3964 = vpop.f32.mrb[0].mxu0
        %v3965 = vpop.f32.mrb[0].mxu0
        %v3966 = vadd.f32 0.0, %v3965
        %v3967 = vpop.f32.mrb[0].mxu0
        %3968 = vdwg.mxu0
        %s3969 = scalar_lea.vmem %s8, 32
        %v3970 = vld [vmem:[%s3969] sm:$0xf]
        %v3971 = vld [vmem:[%s3969 + $0x4] sm:$0xf]
        %v3972 = vld [vmem:[%s3969 + $0x8] sm:$0xf]
        %v3973 = vld [vmem:[%s3969 + $0xc] sm:$0xf]
        %v3978 = vunpack.c.l.b16 %v3970
        %v3979 = vunpack.c.l.b16 %v3971
        %v3980 = vunpack.c.l.b16 %v3972
        %v3981 = vunpack.c.l.b16 %v3973
        %v3982 = vpack.c.b16 %v3979, %v3978
        %v3983 = vpack.c.b16 %v3981, %v3980
        %3986 = vmatprep.subr.bf16.mxu0 0
        %3987 = vmatpush1.bf16.msra.mxu0 %v3982
        %3988 = vmatprep.subr.bf16.mxu0 0
        %3989 = vmatpush1.bf16.msra.mxu0 %v3983
        %3990 = vmatprep.subr.bf16.mxu0 0
        %3991 = vmatpush1.bf16.msra.mxu0 0
        %3992 = vmatprep.subr.bf16.mxu0 0
        %3993 = vmatpush1.bf16.msra.mxu0 0
        %3994 = vmatprep.subr.bf16.mxu0 0
        %3995 = vmatpush1.bf16.msra.mxu0 0
        %3996 = vmatprep.subr.bf16.mxu0 0
        %3997 = vmatpush1.bf16.msra.mxu0 0
        %3998 = vmatprep.subr.bf16.mxu0 0
        %3999 = vmatpush1.bf16.msra.mxu0 0
        %4000 = vmatprep.subr.bf16.mxu0 0
        %4001 = vmatpush1.bf16.msra.mxu0 0
        %4002 = vmatprep.subr.bf16.mxu0 0
        %4003 = vmatpush1.bf16.msra.mxu0 0
        %4004 = vmatprep.subr.bf16.mxu0 0
        %4005 = vmatpush1.bf16.msra.mxu0 0
        %4006 = vmatprep.subr.bf16.mxu0 0
        %4007 = vmatpush1.bf16.msra.mxu0 0
        %4008 = vmatprep.subr.bf16.mxu0 0
        %4009 = vmatpush1.bf16.msra.mxu0 0
        %4010 = vmatprep.subr.bf16.mxu0 0
        %4011 = vmatpush1.bf16.msra.mxu0 0
        %4012 = vmatprep.subr.bf16.mxu0 0
        %4013 = vmatpush1.bf16.msra.mxu0 0
        %4014 = vmatprep.subr.bf16.mxu0 0
        %4015 = vmatpush1.bf16.msra.mxu0 0
        %4016 = vmatprep.subr.bf16.mxu0 0
        %4017 = vmatpush1.bf16.msra.mxu0 0
        %4018 = vmatprep.mubr.bf16.mxu0 0
        %4019 = vmatmul.mubr.bf16.gmra.mrb[0].mxu0 %v3868
        %v4020 = vpop.f32.mrb[0].mxu0
        %v4021 = vadd.f32 0.0, %v4020
        %v4022 = vpop.f32.mrb[0].mxu0
        %v4023 = vpop.f32.mrb[0].mxu0
        %v4024 = vadd.f32 0.0, %v4023
        %v4025 = vpop.f32.mrb[0].mxu0
        %4026 = vdwg.mxu0
        %v4027 = vpack.c.bf16 %v3908, %v3905
        %v4028 = vpack.c.bf16 %v3966, %v3963
        %v4030 = vsel %vm3054, %v4027, 0
        %v4033 = vsel %vm3054, %v4028, 0
        %4035 = vmatprep.subr.bf16.mxu0 0
        %4036 = vmatpush1.bf16.xpose.msra.mxu0 %v4033
        %4037 = vmatprep.subr.bf16.mxu0 0
        %4038 = vmatpush1.bf16.xpose.msra.mxu0 0
        %4039 = vmatprep.subr.bf16.mxu0 0
        %4040 = vmatpush1.bf16.xpose.msra.mxu0 0
        %4041 = vmatprep.subr.bf16.mxu0 0
        %4042 = vmatpush1.bf16.xpose.msra.mxu0 0
        %4043 = vmatprep.subr.bf16.mxu0 0
        %4044 = vmatpush1.bf16.xpose.msra.mxu0 0
        %4045 = vmatprep.subr.bf16.mxu0 0
        %4046 = vmatpush1.bf16.xpose.msra.mxu0 0
        %4047 = vmatprep.subr.bf16.mxu0 0
        %4048 = vmatpush1.bf16.xpose.msra.mxu0 0
        %4049 = vmatprep.subr.bf16.mxu0 0
        %4050 = vmatpush1.bf16.xpose.msra.mxu0 0
        %4051 = vmatprep.subr.bf16.mxu0 0
        %4052 = vmatpush1.bf16.xpose.msra.mxu0 0
        %4053 = vmatprep.subr.bf16.mxu0 0
        %4054 = vmatpush1.bf16.xpose.msra.mxu0 0
        %4055 = vmatprep.subr.bf16.mxu0 0
        %4056 = vmatpush1.bf16.xpose.msra.mxu0 0
        %4057 = vmatprep.subr.bf16.mxu0 0
        %4058 = vmatpush1.bf16.xpose.msra.mxu0 0
        %4059 = vmatprep.subr.bf16.mxu0 0
        %4060 = vmatpush1.bf16.xpose.msra.mxu0 0
        %4061 = vmatprep.subr.bf16.mxu0 0
        %4062 = vmatpush1.bf16.xpose.msra.mxu0 0
        %4063 = vmatprep.subr.bf16.mxu0 0
        %4064 = vmatpush1.bf16.xpose.msra.mxu0 0
        %4065 = vmatprep.subr.bf16.mxu0 0
        %4066 = vmatpush1.bf16.xpose.msra.mxu0 0
        %4067 = vmatprep.mubr.bf16.mxu0 0
        %4068 = vmatmul.mubr.bf16.gmra.mrb[0].mxu0 %v4030
        %v4069 = vpop.f32.mrb[0].mxu0
        %v4070 = vadd.f32 0.0, %v4069
        %v4071 = vpop.f32.mrb[0].mxu0
        %v4072 = vpop.f32.mrb[0].mxu0
        %v4073 = vadd.f32 0.0, %v4072
        %v4074 = vpop.f32.mrb[0].mxu0
        %4075 = vdwg.mxu0
        %v4076 = vmul.f32 %v4070, 0.25
        %v4077 = vmul.f32 %v4073, 0.25
        %v4078 = vsel %vm3054, %v4076, -inf
        %4079 = vmax.xlane.f32.xlu0 %v4078
        %v4080 = vpop.xlane.xlu0 %4079
        %v4081 = vsel %vm3054, %v4077, -inf
        %4082 = vmax.xlane.f32.xlu0 %v4081
        %v4083 = vpop.xlane.xlu0 %4082
        %v4084 = vsub.f32 %v4076, %v4080
        %v4085 = vsub.f32 %v4077, %v4083
        %v4086 = vmul.f32 %v4084, 1.442695
        %v4087 = vpow.pop %v4086
        %v4088 = vmul.f32 %v4085, 1.442695
        %v4089 = vpow.pop %v4088
        %v4090 = vsel %vm3054, %v4087, 0.0
        %4091 = vadd.xlane.f32.xlu0 %v4090
        %v4092 = vpop.xlane.xlu0 %4091
        %v4093 = vsel %vm3054, %v4089, 0.0
        %4094 = vadd.xlane.f32.xlu0 %v4093
        %v4095 = vpop.xlane.xlu0 %4094
        %v4096 = vrcp.pop %v4092
        %v4097 = vrcp.pop %v4095
        %v4098 = vmul.f32 %v4087, %v4096
        %v4099 = vmul.f32 %v4089, %v4097
        %v4100 = vpack.c.bf16 %v4099, %v4098
        %v4101 = vpack.c.bf16 %v4024, %v4021
        %v4103 = vsel %vm3054, %v4100, 0
        %4105 = vmatprep.subr.bf16.mxu0 0
        %4106 = vmatpush1.bf16.msra.mxu0 %v4101
        %4107 = vmatprep.subr.bf16.mxu0 0
        %4108 = vmatpush1.bf16.msra.mxu0 0
        %4109 = vmatprep.subr.bf16.mxu0 0
        %4110 = vmatpush1.bf16.msra.mxu0 0
        %4111 = vmatprep.subr.bf16.mxu0 0
        %4112 = vmatpush1.bf16.msra.mxu0 0
        %4113 = vmatprep.subr.bf16.mxu0 0
        %4114 = vmatpush1.bf16.msra.mxu0 0
        %4115 = vmatprep.subr.bf16.mxu0 0
        %4116 = vmatpush1.bf16.msra.mxu0 0
        %4117 = vmatprep.subr.bf16.mxu0 0
        %4118 = vmatpush1.bf16.msra.mxu0 0
        %4119 = vmatprep.subr.bf16.mxu0 0
        %4120 = vmatpush1.bf16.msra.mxu0 0
        %4121 = vmatprep.subr.bf16.mxu0 0
        %4122 = vmatpush1.bf16.msra.mxu0 0
        %4123 = vmatprep.subr.bf16.mxu0 0
        %4124 = vmatpush1.bf16.msra.mxu0 0
        %4125 = vmatprep.subr.bf16.mxu0 0
        %4126 = vmatpush1.bf16.msra.mxu0 0
        %4127 = vmatprep.subr.bf16.mxu0 0
        %4128 = vmatpush1.bf16.msra.mxu0 0
        %4129 = vmatprep.subr.bf16.mxu0 0
        %4130 = vmatpush1.bf16.msra.mxu0 0
        %4131 = vmatprep.subr.bf16.mxu0 0
        %4132 = vmatpush1.bf16.msra.mxu0 0
        %4133 = vmatprep.subr.bf16.mxu0 0
        %4134 = vmatpush1.bf16.msra.mxu0 0
        %4135 = vmatprep.subr.bf16.mxu0 0
        %4136 = vmatpush1.bf16.msra.mxu0 0
        %4137 = vmatprep.mubr.bf16.mxu0 0
        %4138 = vmatmul.mubr.bf16.gmra.mrb[0].mxu0 %v4103
        %v4139 = vpop.f32.mrb[0].mxu0
        %v4140 = vadd.f32 0.0, %v4139
        %v4141 = vpop.f32.mrb[0].mxu0
        %v4142 = vpop.f32.mrb[0].mxu0
        %v4143 = vadd.f32 0.0, %v4142
        %v4144 = vpop.f32.mrb[0].mxu0
        %4145 = vdwg.mxu0
        %v4146 = vpack.c.bf16 %v4143, %v4140
        %s4147 = scalar_lea.vmem %s9, 16
        %v4148 = vld [vmem:[%s4147] sm:$0xf]
        %v4149 = vld [vmem:[%s4147 + $0x4] sm:$0xf]
        %v4152 = vunpack.c.l.b16 %v4148
        %v4153 = vunpack.c.l.b16 %v4149
        %v4154 = vpack.c.b16 %v4153, %v4152
        %v4157 = vsel %vm3054, %v4146, 0
        %4159 = vmatprep.subr.bf16.mxu0 0
        %4160 = vmatpush1.bf16.msra.mxu0 %v4154
        %4161 = vmatprep.subr.bf16.mxu0 0
        %4162 = vmatpush1.bf16.msra.mxu0 0
        %4163 = vmatprep.subr.bf16.mxu0 0
        %4164 = vmatpush1.bf16.msra.mxu0 0
        %4165 = vmatprep.subr.bf16.mxu0 0
        %4166 = vmatpush1.bf16.msra.mxu0 0
        %4167 = vmatprep.subr.bf16.mxu0 0
        %4168 = vmatpush1.bf16.msra.mxu0 0
        %4169 = vmatprep.subr.bf16.mxu0 0
        %4170 = vmatpush1.bf16.msra.mxu0 0
        %4171 = vmatprep.subr.bf16.mxu0 0
        %4172 = vmatpush1.bf16.msra.mxu0 0
        %4173 = vmatprep.subr.bf16.mxu0 0
        %4174 = vmatpush1.bf16.msra.mxu0 0
        %4175 = vmatprep.subr.bf16.mxu0 0
        %4176 = vmatpush1.bf16.msra.mxu0 0
        %4177 = vmatprep.subr.bf16.mxu0 0
        %4178 = vmatpush1.bf16.msra.mxu0 0
        %4179 = vmatprep.subr.bf16.mxu0 0
        %4180 = vmatpush1.bf16.msra.mxu0 0
        %4181 = vmatprep.subr.bf16.mxu0 0
        %4182 = vmatpush1.bf16.msra.mxu0 0
        %4183 = vmatprep.subr.bf16.mxu0 0
        %4184 = vmatpush1.bf16.msra.mxu0 0
        %4185 = vmatprep.subr.bf16.mxu0 0
        %4186 = vmatpush1.bf16.msra.mxu0 0
        %4187 = vmatprep.subr.bf16.mxu0 0
        %4188 = vmatpush1.bf16.msra.mxu0 0
        %4189 = vmatprep.subr.bf16.mxu0 0
        %4190 = vmatpush1.bf16.msra.mxu0 0
        %4191 = vmatprep.mubr.bf16.mxu0 0
        %4192 = vmatmul.mubr.bf16.gmra.mrb[0].mxu0 %v4157
        %v4193 = vpop.f32.mrb[0].mxu0
        %v4194 = vadd.f32 0.0, %v4193
        %v4195 = vpop.f32.mrb[0].mxu0
        %v4196 = vpop.f32.mrb[0].mxu0
        %v4197 = vadd.f32 0.0, %v4196
        %v4198 = vpop.f32.mrb[0].mxu0
        %4199 = vdwg.mxu0
        %v4201 = vlaneseq
        %v4202 = vshrl.u32 %v4201, 7
        %v4203 = vsub.s32 0, %v4202
        %v4204 = vrot.slane %v3849, %v4203
        %v4206 = vadd.f32 %v4204, %v4194
        %v4207 = vadd.f32 %v4204, %v4197
        %s4208 = scalar_lea.vmem %s6, 48
        %v4209 = vld [vmem:[%s4208] sm:$0xf]
        %v4210 = vld [vmem:[%s4208 + $0x4] sm:$0xf]
        %v4211 = vld [vmem:[%s4208 + $0x8] sm:$0xf]
        %v4212 = vld [vmem:[%s4208 + $0xc] sm:$0xf]
        %v4217 = vunpack.c.l.b16 %v4209
        %v4218 = vunpack.c.l.b16 %v4210
        %v4219 = vunpack.c.l.b16 %v4211
        %v4220 = vunpack.c.l.b16 %v4212
        %v4221 = vpack.c.b16 %v4218, %v4217
        %v4222 = vpack.c.b16 %v4220, %v4219
        %4225 = vmatprep.subr.bf16.mxu0 0
        %4226 = vmatpush1.bf16.msra.mxu0 %v4221
        %4227 = vmatprep.subr.bf16.mxu0 0
        %4228 = vmatpush1.bf16.msra.mxu0 %v4222
        %4229 = vmatprep.subr.bf16.mxu0 0
        %4230 = vmatpush1.bf16.msra.mxu0 0
        %4231 = vmatprep.subr.bf16.mxu0 0
        %4232 = vmatpush1.bf16.msra.mxu0 0
        %4233 = vmatprep.subr.bf16.mxu0 0
        %4234 = vmatpush1.bf16.msra.mxu0 0
        %4235 = vmatprep.subr.bf16.mxu0 0
        %4236 = vmatpush1.bf16.msra.mxu0 0
        %4237 = vmatprep.subr.bf16.mxu0 0
        %4238 = vmatpush1.bf16.msra.mxu0 0
        %4239 = vmatprep.subr.bf16.mxu0 0
        %4240 = vmatpush1.bf16.msra.mxu0 0
        %4241 = vmatprep.subr.bf16.mxu0 0
        %4242 = vmatpush1.bf16.msra.mxu0 0
        %4243 = vmatprep.subr.bf16.mxu0 0
        %4244 = vmatpush1.bf16.msra.mxu0 0
        %4245 = vmatprep.subr.bf16.mxu0 0
        %4246 = vmatpush1.bf16.msra.mxu0 0
        %4247 = vmatprep.subr.bf16.mxu0 0
        %4248 = vmatpush1.bf16.msra.mxu0 0
        %4249 = vmatprep.subr.bf16.mxu0 0
        %4250 = vmatpush1.bf16.msra.mxu0 0
        %4251 = vmatprep.subr.bf16.mxu0 0
        %4252 = vmatpush1.bf16.msra.mxu0 0
        %4253 = vmatprep.subr.bf16.mxu0 0
        %4254 = vmatpush1.bf16.msra.mxu0 0
        %4255 = vmatprep.subr.bf16.mxu0 0
        %4256 = vmatpush1.bf16.msra.mxu0 0
        %4257 = vmatprep.mubr.bf16.mxu0 0
        %4258 = vmatmul.mubr.bf16.gmra.mrb[0].mxu0 %v3868
        %v4259 = vpop.f32.mrb[0].mxu0
        %v4260 = vadd.f32 0.0, %v4259
        %v4261 = vpop.f32.mrb[0].mxu0
        %v4262 = vpop.f32.mrb[0].mxu0
        %v4263 = vadd.f32 0.0, %v4262
        %v4264 = vpop.f32.mrb[0].mxu0
        %4265 = vdwg.mxu0
        %s4266 = scalar_lea.vmem %s7, 48
        %v4267 = vld [vmem:[%s4266] sm:$0xf]
        %v4268 = vld [vmem:[%s4266 + $0x4] sm:$0xf]
        %v4269 = vld [vmem:[%s4266 + $0x8] sm:$0xf]
        %v4270 = vld [vmem:[%s4266 + $0xc] sm:$0xf]
        %v4275 = vunpack.c.l.b16 %v4267
        %v4276 = vunpack.c.l.b16 %v4268
        %v4277 = vunpack.c.l.b16 %v4269
        %v4278 = vunpack.c.l.b16 %v4270
        %v4279 = vpack.c.b16 %v4276, %v4275
        %v4280 = vpack.c.b16 %v4278, %v4277
        %4283 = vmatprep.subr.bf16.mxu0 0
        %4284 = vmatpush1.bf16.msra.mxu0 %v4279
        %4285 = vmatprep.subr.bf16.mxu0 0
        %4286 = vmatpush1.bf16.msra.mxu0 %v4280
        %4287 = vmatprep.subr.bf16.mxu0 0
        %4288 = vmatpush1.bf16.msra.mxu0 0
        %4289 = vmatprep.subr.bf16.mxu0 0
        %4290 = vmatpush1.bf16.msra.mxu0 0
        %4291 = vmatprep.subr.bf16.mxu0 0
        %4292 = vmatpush1.bf16.msra.mxu0 0
        %4293 = vmatprep.subr.bf16.mxu0 0
        %4294 = vmatpush1.bf16.msra.mxu0 0
        %4295 = vmatprep.subr.bf16.mxu0 0
        %4296 = vmatpush1.bf16.msra.mxu0 0
        %4297 = vmatprep.subr.bf16.mxu0 0
        %4298 = vmatpush1.bf16.msra.mxu0 0
        %4299 = vmatprep.subr.bf16.mxu0 0
        %4300 = vmatpush1.bf16.msra.mxu0 0
        %4301 = vmatprep.subr.bf16.mxu0 0
        %4302 = vmatpush1.bf16.msra.mxu0 0
        %4303 = vmatprep.subr.bf16.mxu0 0
        %4304 = vmatpush1.bf16.msra.mxu0 0
        %4305 = vmatprep.subr.bf16.mxu0 0
        %4306 = vmatpush1.bf16.msra.mxu0 0
        %4307 = vmatprep.subr.bf16.mxu0 0
        %4308 = vmatpush1.bf16.msra.mxu0 0
        %4309 = vmatprep.subr.bf16.mxu0 0
        %4310 = vmatpush1.bf16.msra.mxu0 0
        %4311 = vmatprep.subr.bf16.mxu0 0
        %4312 = vmatpush1.bf16.msra.mxu0 0
        %4313 = vmatprep.subr.bf16.mxu0 0
        %4314 = vmatpush1.bf16.msra.mxu0 0
        %4315 = vmatprep.mubr.bf16.mxu0 0
        %4316 = vmatmul.mubr.bf16.gmra.mrb[0].mxu0 %v3868
        %v4317 = vpop.f32.mrb[0].mxu0
        %v4318 = vadd.f32 0.0, %v4317
        %v4319 = vpop.f32.mrb[0].mxu0
        %v4320 = vpop.f32.mrb[0].mxu0
        %v4321 = vadd.f32 0.0, %v4320
        %v4322 = vpop.f32.mrb[0].mxu0
        %4323 = vdwg.mxu0
        %s4324 = scalar_lea.vmem %s8, 48
        %v4325 = vld [vmem:[%s4324] sm:$0xf]
        %v4326 = vld [vmem:[%s4324 + $0x4] sm:$0xf]
        %v4327 = vld [vmem:[%s4324 + $0x8] sm:$0xf]
        %v4328 = vld [vmem:[%s4324 + $0xc] sm:$0xf]
        %v4333 = vunpack.c.l.b16 %v4325
        %v4334 = vunpack.c.l.b16 %v4326
        %v4335 = vunpack.c.l.b16 %v4327
        %v4336 = vunpack.c.l.b16 %v4328
        %v4337 = vpack.c.b16 %v4334, %v4333
        %v4338 = vpack.c.b16 %v4336, %v4335
        %4341 = vmatprep.subr.bf16.mxu0 0
        %4342 = vmatpush1.bf16.msra.mxu0 %v4337
        %4343 = vmatprep.subr.bf16.mxu0 0
        %4344 = vmatpush1.bf16.msra.mxu0 %v4338
        %4345 = vmatprep.subr.bf16.mxu0 0
        %4346 = vmatpush1.bf16.msra.mxu0 0
        %4347 = vmatprep.subr.bf16.mxu0 0
        %4348 = vmatpush1.bf16.msra.mxu0 0
        %4349 = vmatprep.subr.bf16.mxu0 0
        %4350 = vmatpush1.bf16.msra.mxu0 0
        %4351 = vmatprep.subr.bf16.mxu0 0
        %4352 = vmatpush1.bf16.msra.mxu0 0
        %4353 = vmatprep.subr.bf16.mxu0 0
        %4354 = vmatpush1.bf16.msra.mxu0 0
        %4355 = vmatprep.subr.bf16.mxu0 0
        %4356 = vmatpush1.bf16.msra.mxu0 0
        %4357 = vmatprep.subr.bf16.mxu0 0
        %4358 = vmatpush1.bf16.msra.mxu0 0
        %4359 = vmatprep.subr.bf16.mxu0 0
        %4360 = vmatpush1.bf16.msra.mxu0 0
        %4361 = vmatprep.subr.bf16.mxu0 0
        %4362 = vmatpush1.bf16.msra.mxu0 0
        %4363 = vmatprep.subr.bf16.mxu0 0
        %4364 = vmatpush1.bf16.msra.mxu0 0
        %4365 = vmatprep.subr.bf16.mxu0 0
        %4366 = vmatpush1.bf16.msra.mxu0 0
        %4367 = vmatprep.subr.bf16.mxu0 0
        %4368 = vmatpush1.bf16.msra.mxu0 0
        %4369 = vmatprep.subr.bf16.mxu0 0
        %4370 = vmatpush1.bf16.msra.mxu0 0
        %4371 = vmatprep.subr.bf16.mxu0 0
        %4372 = vmatpush1.bf16.msra.mxu0 0
        %4373 = vmatprep.mubr.bf16.mxu0 0
        %4374 = vmatmul.mubr.bf16.gmra.mrb[0].mxu0 %v3868
        %v4375 = vpop.f32.mrb[0].mxu0
        %v4376 = vadd.f32 0.0, %v4375
        %v4377 = vpop.f32.mrb[0].mxu0
        %v4378 = vpop.f32.mrb[0].mxu0
        %v4379 = vadd.f32 0.0, %v4378
        %v4380 = vpop.f32.mrb[0].mxu0
        %4381 = vdwg.mxu0
        %v4382 = vpack.c.bf16 %v4263, %v4260
        %v4383 = vpack.c.bf16 %v4321, %v4318
        %v4385 = vsel %vm3054, %v4382, 0
        %v4388 = vsel %vm3054, %v4383, 0
        %4390 = vmatprep.subr.bf16.mxu0 0
        %4391 = vmatpush1.bf16.xpose.msra.mxu0 %v4388
        %4392 = vmatprep.subr.bf16.mxu0 0
        %4393 = vmatpush1.bf16.xpose.msra.mxu0 0
        %4394 = vmatprep.subr.bf16.mxu0 0
        %4395 = vmatpush1.bf16.xpose.msra.mxu0 0
        %4396 = vmatprep.subr.bf16.mxu0 0
        %4397 = vmatpush1.bf16.xpose.msra.mxu0 0
        %4398 = vmatprep.subr.bf16.mxu0 0
        %4399 = vmatpush1.bf16.xpose.msra.mxu0 0
        %4400 = vmatprep.subr.bf16.mxu0 0
        %4401 = vmatpush1.bf16.xpose.msra.mxu0 0
        %4402 = vmatprep.subr.bf16.mxu0 0
        %4403 = vmatpush1.bf16.xpose.msra.mxu0 0
        %4404 = vmatprep.subr.bf16.mxu0 0
        %4405 = vmatpush1.bf16.xpose.msra.mxu0 0
        %4406 = vmatprep.subr.bf16.mxu0 0
        %4407 = vmatpush1.bf16.xpose.msra.mxu0 0
        %4408 = vmatprep.subr.bf16.mxu0 0
        %4409 = vmatpush1.bf16.xpose.msra.mxu0 0
        %4410 = vmatprep.subr.bf16.mxu0 0
        %4411 = vmatpush1.bf16.xpose.msra.mxu0 0
        %4412 = vmatprep.subr.bf16.mxu0 0
        %4413 = vmatpush1.bf16.xpose.msra.mxu0 0
        %4414 = vmatprep.subr.bf16.mxu0 0
        %4415 = vmatpush1.bf16.xpose.msra.mxu0 0
        %4416 = vmatprep.subr.bf16.mxu0 0
        %4417 = vmatpush1.bf16.xpose.msra.mxu0 0
        %4418 = vmatprep.subr.bf16.mxu0 0
        %4419 = vmatpush1.bf16.xpose.msra.mxu0 0
        %4420 = vmatprep.subr.bf16.mxu0 0
        %4421 = vmatpush1.bf16.xpose.msra.mxu0 0
        %4422 = vmatprep.mubr.bf16.mxu0 0
        %4423 = vmatmul.mubr.bf16.gmra.mrb[0].mxu0 %v4385
        %v4424 = vpop.f32.mrb[0].mxu0
        %v4425 = vadd.f32 0.0, %v4424
        %v4426 = vpop.f32.mrb[0].mxu0
        %v4427 = vpop.f32.mrb[0].mxu0
        %v4428 = vadd.f32 0.0, %v4427
        %v4429 = vpop.f32.mrb[0].mxu0
        %4430 = vdwg.mxu0
        %v4431 = vmul.f32 %v4425, 0.25
        %v4432 = vmul.f32 %v4428, 0.25
        %v4433 = vsel %vm3054, %v4431, -inf
        %4434 = vmax.xlane.f32.xlu0 %v4433
        %v4435 = vpop.xlane.xlu0 %4434
        %v4436 = vsel %vm3054, %v4432, -inf
        %4437 = vmax.xlane.f32.xlu0 %v4436
        %v4438 = vpop.xlane.xlu0 %4437
        %v4439 = vsub.f32 %v4431, %v4435
        %v4440 = vsub.f32 %v4432, %v4438
        %v4441 = vmul.f32 %v4439, 1.442695
        %v4442 = vpow.pop %v4441
        %v4443 = vmul.f32 %v4440, 1.442695
        %v4444 = vpow.pop %v4443
        %v4445 = vsel %vm3054, %v4442, 0.0
        %4446 = vadd.xlane.f32.xlu0 %v4445
        %v4447 = vpop.xlane.xlu0 %4446
        %v4448 = vsel %vm3054, %v4444, 0.0
        %4449 = vadd.xlane.f32.xlu0 %v4448
        %v4450 = vpop.xlane.xlu0 %4449
        %v4451 = vrcp.pop %v4447
        %v4452 = vrcp.pop %v4450
        %v4453 = vmul.f32 %v4442, %v4451
        %v4454 = vmul.f32 %v4444, %v4452
        %v4455 = vpack.c.bf16 %v4454, %v4453
        %v4456 = vpack.c.bf16 %v4379, %v4376
        %v4458 = vsel %vm3054, %v4455, 0
        %4460 = vmatprep.subr.bf16.mxu0 0
        %4461 = vmatpush1.bf16.msra.mxu0 %v4456
        %4462 = vmatprep.subr.bf16.mxu0 0
        %4463 = vmatpush1.bf16.msra.mxu0 0
        %4464 = vmatprep.subr.bf16.mxu0 0
        %4465 = vmatpush1.bf16.msra.mxu0 0
        %4466 = vmatprep.subr.bf16.mxu0 0
        %4467 = vmatpush1.bf16.msra.mxu0 0
        %4468 = vmatprep.subr.bf16.mxu0 0
        %4469 = vmatpush1.bf16.msra.mxu0 0
        %4470 = vmatprep.subr.bf16.mxu0 0
        %4471 = vmatpush1.bf16.msra.mxu0 0
        %4472 = vmatprep.subr.bf16.mxu0 0
        %4473 = vmatpush1.bf16.msra.mxu0 0
        %4474 = vmatprep.subr.bf16.mxu0 0
        %4475 = vmatpush1.bf16.msra.mxu0 0
        %4476 = vmatprep.subr.bf16.mxu0 0
        %4477 = vmatpush1.bf16.msra.mxu0 0
        %4478 = vmatprep.subr.bf16.mxu0 0
        %4479 = vmatpush1.bf16.msra.mxu0 0
        %4480 = vmatprep.subr.bf16.mxu0 0
        %4481 = vmatpush1.bf16.msra.mxu0 0
        %4482 = vmatprep.subr.bf16.mxu0 0
        %4483 = vmatpush1.bf16.msra.mxu0 0
        %4484 = vmatprep.subr.bf16.mxu0 0
        %4485 = vmatpush1.bf16.msra.mxu0 0
        %4486 = vmatprep.subr.bf16.mxu0 0
        %4487 = vmatpush1.bf16.msra.mxu0 0
        %4488 = vmatprep.subr.bf16.mxu0 0
        %4489 = vmatpush1.bf16.msra.mxu0 0
        %4490 = vmatprep.subr.bf16.mxu0 0
        %4491 = vmatpush1.bf16.msra.mxu0 0
        %4492 = vmatprep.mubr.bf16.mxu0 0
        %4493 = vmatmul.mubr.bf16.gmra.mrb[0].mxu0 %v4458
        %v4494 = vpop.f32.mrb[0].mxu0
        %v4495 = vadd.f32 0.0, %v4494
        %v4496 = vpop.f32.mrb[0].mxu0
        %v4497 = vpop.f32.mrb[0].mxu0
        %v4498 = vadd.f32 0.0, %v4497
        %v4499 = vpop.f32.mrb[0].mxu0
        %4500 = vdwg.mxu0
        %v4501 = vpack.c.bf16 %v4498, %v4495
        %s4502 = scalar_lea.vmem %s9, 24
        %v4503 = vld [vmem:[%s4502] sm:$0xf]
        %v4504 = vld [vmem:[%s4502 + $0x4] sm:$0xf]
        %v4507 = vunpack.c.l.b16 %v4503
        %v4508 = vunpack.c.l.b16 %v4504
        %v4509 = vpack.c.b16 %v4508, %v4507
        %v4512 = vsel %vm3054, %v4501, 0
        %4514 = vmatprep.subr.bf16.mxu0 0
        %4515 = vmatpush1.bf16.msra.mxu0 %v4509
        %4516 = vmatprep.subr.bf16.mxu0 0
        %4517 = vmatpush1.bf16.msra.mxu0 0
        %4518 = vmatprep.subr.bf16.mxu0 0
        %4519 = vmatpush1.bf16.msra.mxu0 0
        %4520 = vmatprep.subr.bf16.mxu0 0
        %4521 = vmatpush1.bf16.msra.mxu0 0
        %4522 = vmatprep.subr.bf16.mxu0 0
        %4523 = vmatpush1.bf16.msra.mxu0 0
        %4524 = vmatprep.subr.bf16.mxu0 0
        %4525 = vmatpush1.bf16.msra.mxu0 0
        %4526 = vmatprep.subr.bf16.mxu0 0
        %4527 = vmatpush1.bf16.msra.mxu0 0
        %4528 = vmatprep.subr.bf16.mxu0 0
        %4529 = vmatpush1.bf16.msra.mxu0 0
        %4530 = vmatprep.subr.bf16.mxu0 0
        %4531 = vmatpush1.bf16.msra.mxu0 0
        %4532 = vmatprep.subr.bf16.mxu0 0
        %4533 = vmatpush1.bf16.msra.mxu0 0
        %4534 = vmatprep.subr.bf16.mxu0 0
        %4535 = vmatpush1.bf16.msra.mxu0 0
        %4536 = vmatprep.subr.bf16.mxu0 0
        %4537 = vmatpush1.bf16.msra.mxu0 0
        %4538 = vmatprep.subr.bf16.mxu0 0
        %4539 = vmatpush1.bf16.msra.mxu0 0
        %4540 = vmatprep.subr.bf16.mxu0 0
        %4541 = vmatpush1.bf16.msra.mxu0 0
        %4542 = vmatprep.subr.bf16.mxu0 0
        %4543 = vmatpush1.bf16.msra.mxu0 0
        %4544 = vmatprep.subr.bf16.mxu0 0
        %4545 = vmatpush1.bf16.msra.mxu0 0
        %4546 = vmatprep.mubr.bf16.mxu0 0
        %4547 = vmatmul.mubr.bf16.gmra.mrb[0].mxu0 %v4512
        %v4548 = vpop.f32.mrb[0].mxu0
        %v4549 = vadd.f32 0.0, %v4548
        %v4550 = vpop.f32.mrb[0].mxu0
        %v4551 = vpop.f32.mrb[0].mxu0
        %v4552 = vadd.f32 0.0, %v4551
        %v4553 = vpop.f32.mrb[0].mxu0
        %4554 = vdwg.mxu0
        %v4555 = vadd.f32 %v4206, %v4549
        %v4556 = vadd.f32 %v4207, %v4552
        %v4557 = vadd.f32 %v3799, %v4555
        %v4558 = vadd.f32 %v3800, %v4556
        %s4559 = scalar_lea.vmem %s11, 1
        %v4560 = vld [vmem:[%s4559] sm:$0x1]
        %s4561 = scalar_lea.vmem %s12, 1
        %v4562 = vld [vmem:[%s4561] sm:$0x1]
        %v4563 = vsel %vm785, %v4557, 0.0
        %4564 = vadd.xlane.f32.xlu0 %v4563
        %v4565 = vpop.xlane.xlu0 %4564
        %v4566 = vsel %vm785, %v4558, 0.0
        %4567 = vadd.xlane.f32.xlu0 %v4566
        %v4568 = vpop.xlane.xlu0 %4567
        %v4569 = vmul.f32 %v4565, %v2839
        %v4570 = vmul.f32 %v4568, %v2839
        %v4571 = vsub.f32 %v4557, %v4569
        %v4572 = vsub.f32 %v4558, %v4570
        %v4573 = vmul.f32 %v4571, %v4571
        %v4574 = vmul.f32 %v4572, %v4572
        %v4575 = vsel %vm785, %v4573, 0.0
        %4576 = vadd.xlane.f32.xlu0 %v4575
        %v4577 = vpop.xlane.xlu0 %4576
        %v4578 = vsel %vm785, %v4574, 0.0
        %4579 = vadd.xlane.f32.xlu0 %v4578
        %v4580 = vpop.xlane.xlu0 %4579
        %v4581 = vmul.f32 %v4577, %v2839
        %v4582 = vmul.f32 %v4580, %v2839
        %v4583 = vadd.f32 %v4581, 1e-05
        %v4584 = vadd.f32 %v4582, 1e-05
        %v4585 = vrsqrt.pop %v4583
        %v4586 = vrsqrt.pop %v4584
        %v4587 = vmul.f32 %v4571, %v4585
        %v4588 = vmul.f32 %v4572, %v4586
        %v4590 = vlaneseq
        %v4591 = vshrl.u32 %v4590, 7
        %v4592 = vsub.s32 0, %v4591
        %v4593 = vrot.slane %v4560, %v4592
        %v4595 = vmul.f32 %v4587, %v4593
        %v4596 = vmul.f32 %v4588, %v4593
        %v4598 = vlaneseq
        %v4599 = vshrl.u32 %v4598, 7
        %v4600 = vsub.s32 0, %v4599
        %v4601 = vrot.slane %v4562, %v4600
        %v4603 = vadd.f32 %v4595, %v4601
        %v4604 = vadd.f32 %v4596, %v4601
        %v4605 = vpack.c.bf16 %v4604, %v4603
        %s4606 = scalar_lea.vmem %s13, 16
        %v4607 = vld [vmem:[%s4606] sm:$0xf]
        %v4608 = vld [vmem:[%s4606 + $0x4] sm:$0xf]
        %v4609 = vld [vmem:[%s4606 + $0x8] sm:$0xf]
        %v4610 = vld [vmem:[%s4606 + $0xc] sm:$0xf]
        %s4611 = scalar_lea.vmem %s14, 1
        %v4612 = vld [vmem:[%s4611] sm:$0x1]
        %v4614 = vlaneseq
        %v4615 = vshrl.u32 %v4614, 7
        %v4616 = vsub.s32 0, %v4615
        %v4617 = vrot.slane %v4612, %v4616
        %v4623 = vunpack.c.l.b16 %v4607
        %v4624 = vunpack.c.l.b16 %v4608
        %v4625 = vunpack.c.l.b16 %v4609
        %v4626 = vunpack.c.l.b16 %v4610
        %v4627 = vpack.c.b16 %v4624, %v4623
        %v4628 = vpack.c.b16 %v4626, %v4625
        %v4632 = vsel %vm785, %v4605, 0
        %4634 = vmatprep.subr.bf16.mxu0 0
        %4635 = vmatpush1.bf16.msra.mxu0 %v4627
        %4636 = vmatprep.subr.bf16.mxu0 0
        %4637 = vmatpush1.bf16.msra.mxu0 %v4628
        %4638 = vmatprep.subr.bf16.mxu0 0
        %4639 = vmatpush1.bf16.msra.mxu0 0
        %4640 = vmatprep.subr.bf16.mxu0 0
        %4641 = vmatpush1.bf16.msra.mxu0 0
        %4642 = vmatprep.subr.bf16.mxu0 0
        %4643 = vmatpush1.bf16.msra.mxu0 0
        %4644 = vmatprep.subr.bf16.mxu0 0
        %4645 = vmatpush1.bf16.msra.mxu0 0
        %4646 = vmatprep.subr.bf16.mxu0 0
        %4647 = vmatpush1.bf16.msra.mxu0 0
        %4648 = vmatprep.subr.bf16.mxu0 0
        %4649 = vmatpush1.bf16.msra.mxu0 0
        %4650 = vmatprep.subr.bf16.mxu0 0
        %4651 = vmatpush1.bf16.msra.mxu0 0
        %4652 = vmatprep.subr.bf16.mxu0 0
        %4653 = vmatpush1.bf16.msra.mxu0 0
        %4654 = vmatprep.subr.bf16.mxu0 0
        %4655 = vmatpush1.bf16.msra.mxu0 0
        %4656 = vmatprep.subr.bf16.mxu0 0
        %4657 = vmatpush1.bf16.msra.mxu0 0
        %4658 = vmatprep.subr.bf16.mxu0 0
        %4659 = vmatpush1.bf16.msra.mxu0 0
        %4660 = vmatprep.subr.bf16.mxu0 0
        %4661 = vmatpush1.bf16.msra.mxu0 0
        %4662 = vmatprep.subr.bf16.mxu0 0
        %4663 = vmatpush1.bf16.msra.mxu0 0
        %4664 = vmatprep.subr.bf16.mxu0 0
        %4665 = vmatpush1.bf16.msra.mxu0 0
        %4666 = vmatprep.mubr.bf16.mxu0 0
        %4667 = vmatmul.mubr.bf16.gmra.mrb[0].mxu0 %v4632
        %v4668 = vpop.f32.mrb[0].mxu0
        %v4669 = vadd.f32 %v4617, %v4668
        %v4670 = vpop.f32.mrb[0].mxu0
        %v4671 = vpop.f32.mrb[0].mxu0
        %v4672 = vadd.f32 %v4617, %v4671
        %v4673 = vpop.f32.mrb[0].mxu0
        %4674 = vdwg.mxu0
        %v4675 = vmul.f32 %v4669, %v4669
        %v4676 = vmul.f32 %v4672, %v4672
        %v4677 = vmul.f32 %v4669, %v4675
        %v4678 = vmul.f32 %v4672, %v4676
        %v4679 = vmul.f32 %v4677, 0.044715
        %v4680 = vmul.f32 %v4678, 0.044715
        %v4681 = vadd.f32 %v4669, %v4679
        %v4682 = vadd.f32 %v4672, %v4680
        %v4683 = vmul.f32 %v4681, 0.7978846
        %v4684 = vmul.f32 %v4682, 0.7978846
        %v4685 = vtanh.pop %v4683
        %v4686 = vtanh.pop %v4684
        %v4687 = vadd.f32 %v4685, 1.0
        %v4688 = vadd.f32 %v4686, 1.0
        %v4689 = vmul.f32 %v4687, 0.5
        %v4690 = vmul.f32 %v4688, 0.5
        %v4691 = vmul.f32 %v4669, %v4689
        %v4692 = vmul.f32 %v4672, %v4690
        %v4693 = vpack.c.bf16 %v4692, %v4691
        %s4694 = scalar_lea.vmem %s15, 32
        %v4695 = vld [vmem:[%s4694] sm:$0xf]
        %v4696 = vld [vmem:[%s4694 + $0x4] sm:$0xf]
        %v4697 = vld [vmem:[%s4694 + $0x8] sm:$0xf]
        %v4698 = vld [vmem:[%s4694 + $0xc] sm:$0xf]
        %v4699 = vld [vmem:[%s4694 + $0x10] sm:$0xf]
        %v4700 = vld [vmem:[%s4694 + $0x14] sm:$0xf]
        %v4701 = vld [vmem:[%s4694 + $0x18] sm:$0xf]
        %v4702 = vld [vmem:[%s4694 + $0x1c] sm:$0xf]
        %s4703 = scalar_lea.vmem %s16, 1
        %v4704 = vld [vmem:[%s4703] sm:$0x1]
        %v4706 = vlaneseq
        %v4707 = vshrl.u32 %v4706, 7
        %v4708 = vsub.s32 0, %v4707
        %v4709 = vrot.slane %v4704, %v4708
        %v4719 = vunpack.c.l.b16 %v4695
        %v4720 = vunpack.c.l.b16 %v4696
        %v4721 = vunpack.c.l.b16 %v4697
        %v4722 = vunpack.c.l.b16 %v4698
        %v4723 = vunpack.c.l.b16 %v4699
        %v4724 = vunpack.c.l.b16 %v4700
        %v4725 = vunpack.c.l.b16 %v4701
        %v4726 = vunpack.c.l.b16 %v4702
        %v4727 = vpack.c.b16 %v4720, %v4719
        %v4728 = vpack.c.b16 %v4722, %v4721
        %v4729 = vpack.c.b16 %v4724, %v4723
        %v4730 = vpack.c.b16 %v4726, %v4725
        %v4736 = vsel %vm3754, %v4693, 0
        %4738 = vmatprep.subr.bf16.mxu0 0
        %4739 = vmatpush1.bf16.msra.mxu0 %v4727
        %4740 = vmatprep.subr.bf16.mxu0 0
        %4741 = vmatpush1.bf16.msra.mxu0 %v4728
        %4742 = vmatprep.subr.bf16.mxu0 0
        %4743 = vmatpush1.bf16.msra.mxu0 %v4729
        %4744 = vmatprep.subr.bf16.mxu0 0
        %4745 = vmatpush1.bf16.msra.mxu0 %v4730
        %4746 = vmatprep.subr.bf16.mxu0 0
        %4747 = vmatpush1.bf16.msra.mxu0 0
        %4748 = vmatprep.subr.bf16.mxu0 0
        %4749 = vmatpush1.bf16.msra.mxu0 0
        %4750 = vmatprep.subr.bf16.mxu0 0
        %4751 = vmatpush1.bf16.msra.mxu0 0
        %4752 = vmatprep.subr.bf16.mxu0 0
        %4753 = vmatpush1.bf16.msra.mxu0 0
        %4754 = vmatprep.subr.bf16.mxu0 0
        %4755 = vmatpush1.bf16.msra.mxu0 0
        %4756 = vmatprep.subr.bf16.mxu0 0
        %4757 = vmatpush1.bf16.msra.mxu0 0
        %4758 = vmatprep.subr.bf16.mxu0 0
        %4759 = vmatpush1.bf16.msra.mxu0 0
        %4760 = vmatprep.subr.bf16.mxu0 0
        %4761 = vmatpush1.bf16.msra.mxu0 0
        %4762 = vmatprep.subr.bf16.mxu0 0
        %4763 = vmatpush1.bf16.msra.mxu0 0
        %4764 = vmatprep.subr.bf16.mxu0 0
        %4765 = vmatpush1.bf16.msra.mxu0 0
        %4766 = vmatprep.subr.bf16.mxu0 0
        %4767 = vmatpush1.bf16.msra.mxu0 0
        %4768 = vmatprep.subr.bf16.mxu0 0
        %4769 = vmatpush1.bf16.msra.mxu0 0
        %4770 = vmatprep.mubr.bf16.mxu0 0
        %4771 = vmatmul.mubr.bf16.gmra.mrb[0].mxu0 %v4736
        %v4772 = vpop.f32.mrb[0].mxu0
        %v4773 = vadd.f32 %v4709, %v4772
        %v4774 = vpop.f32.mrb[0].mxu0
        %v4775 = vpop.f32.mrb[0].mxu0
        %v4776 = vadd.f32 %v4709, %v4775
        %v4777 = vpop.f32.mrb[0].mxu0
        %4778 = vdwg.mxu0
        %v4779 = vadd.f32 %v4557, %v4773
        %v4780 = vadd.f32 %v4558, %v4776
        %v4781 = vld [vmem:[%s17] sm:$0xff]
        %v4782 = vld [vmem:[%s17 + $0x8] sm:$0xff]
        %v4783 = vld [vmem:[%s17 + $0x10] sm:$0xff]
        %v4784 = vld [vmem:[%s17 + $0x18] sm:$0xff]
        %v4785 = vld [vmem:[#allocation5] sm:$0x1]
        %v4787 = vlaneseq
        %v4788 = vshrl.u32 %v4787, 7
        %v4789 = vsub.s32 0, %v4788
        %v4790 = vrot.slane %v4785, %v4789
        %v4793 = vsel %vm785, %v4779, 0
        %v4796 = vsel %vm785, %v4780, 0
        %4798 = vmatprep.subr.mxu0 0.0
        %4799 = vmatpush1.msra.mxu0 %v4781
        %4800 = vmatprep.subr.mxu0 0.0
        %4801 = vmatpush1.msra.mxu0 %v4782
        %4802 = vmatprep.subr.mxu0 0.0
        %4803 = vmatpush1.msra.mxu0 %v4783
        %4804 = vmatprep.subr.mxu0 0.0
        %4805 = vmatpush1.msra.mxu0 %v4784
        %4806 = vmatprep.subr.mxu0 0.0
        %4807 = vmatpush1.msra.mxu0 0.0
        %4808 = vmatprep.subr.mxu0 0.0
        %4809 = vmatpush1.msra.mxu0 0.0
        %4810 = vmatprep.subr.mxu0 0.0
        %4811 = vmatpush1.msra.mxu0 0.0
        %4812 = vmatprep.subr.mxu0 0.0
        %4813 = vmatpush1.msra.mxu0 0.0
        %4814 = vmatprep.subr.mxu0 0.0
        %4815 = vmatpush1.msra.mxu0 0.0
        %4816 = vmatprep.subr.mxu0 0.0
        %4817 = vmatpush1.msra.mxu0 0.0
        %4818 = vmatprep.subr.mxu0 0.0
        %4819 = vmatpush1.msra.mxu0 0.0
        %4820 = vmatprep.subr.mxu0 0.0
        %4821 = vmatpush1.msra.mxu0 0.0
        %4822 = vmatprep.subr.mxu0 0.0
        %4823 = vmatpush1.msra.mxu0 0.0
        %4824 = vmatprep.subr.mxu0 0.0
        %4825 = vmatpush1.msra.mxu0 0.0
        %4826 = vmatprep.subr.mxu0 0.0
        %4827 = vmatpush1.msra.mxu0 0.0
        %4828 = vmatprep.subr.mxu0 0.0
        %4829 = vmatpush1.msra.mxu0 0.0
        %4830 = vmatprep.subr.mxu0 0.0
        %4831 = vmatpush1.msra.mxu0 0.0
        %4832 = vmatprep.subr.mxu0 0.0
        %4833 = vmatpush1.msra.mxu0 0.0
        %4834 = vmatprep.subr.mxu0 0.0
        %4835 = vmatpush1.msra.mxu0 0.0
        %4836 = vmatprep.subr.mxu0 0.0
        %4837 = vmatpush1.msra.mxu0 0.0
        %4838 = vmatprep.subr.mxu0 0.0
        %4839 = vmatpush1.msra.mxu0 0.0
        %4840 = vmatprep.subr.mxu0 0.0
        %4841 = vmatpush1.msra.mxu0 0.0
        %4842 = vmatprep.subr.mxu0 0.0
        %4843 = vmatpush1.msra.mxu0 0.0
        %4844 = vmatprep.subr.mxu0 0.0
        %4845 = vmatpush1.msra.mxu0 0.0
        %4846 = vmatprep.subr.mxu0 0.0
        %4847 = vmatpush1.msra.mxu0 0.0
        %4848 = vmatprep.subr.mxu0 0.0
        %4849 = vmatpush1.msra.mxu0 0.0
        %4850 = vmatprep.subr.mxu0 0.0
        %4851 = vmatpush1.msra.mxu0 0.0
        %4852 = vmatprep.subr.mxu0 0.0
        %4853 = vmatpush1.msra.mxu0 0.0
        %4854 = vmatprep.subr.mxu0 0.0
        %4855 = vmatpush1.msra.mxu0 0.0
        %4856 = vmatprep.subr.mxu0 0.0
        %4857 = vmatpush1.msra.mxu0 0.0
        %4858 = vmatprep.subr.mxu0 0.0
        %4859 = vmatpush1.msra.mxu0 0.0
        %4860 = vmatprep.subr.mxu0 0.0
        %4861 = vmatpush1.msra.mxu0 0.0
        %4862 = vmatprep.mubr.f32.mxu0 0.0
        %4863 = vmatmul.mubr.f32.gmra.mrb[0].mxu0 %v4793
        %v4864 = vpop.f32.mrb[0].mxu0
        %v4865 = vadd.f32 %v4790, %v4864
        %v4866 = vpop.f32.mrb[0].mxu0
        %4867 = vmatprep.mubr.f32.mxu0 0.0
        %4868 = vmatmul.mubr.f32.gmra.mrb[0].mxu0 %v4796
        %v4869 = vpop.f32.mrb[0].mxu0
        %v4870 = vadd.f32 %v4790, %v4869
        %v4871 = vpop.f32.mrb[0].mxu0
        %4872 = vdwg.mxu0
        %vm4873 = vcmask 7168
        %v4874 = vsel %vm4873, %v4865, -inf
        %v4875 = vsel %vm4873, %v4870, -inf
        %v4876 = vmax.f32 %v4874, %v4875
        %v4877 = vrot.slane %v4876, 4
        %v4878 = vmax.f32 %v4876, %v4877
        %v4879 = vrot.slane %v4878, 2
        %v4880 = vmax.f32 %v4878, %v4879
        %v4881 = vrot.slane %v4880, 1
        %v4882 = vmax.f32 %v4880, %v4881
        %v4883 = vsub.f32 %v4865, %v4882
        %v4884 = vsub.f32 %v4870, %v4882
        %v4885 = vmul.f32 %v4883, 1.442695
        %v4886 = vpow.pop %v4885
        %v4887 = vmul.f32 %v4884, 1.442695
        %v4888 = vpow.pop %v4887
        %v4889 = vsel %vm4873, %v4886, 0.0
        %v4890 = vsel %vm4873, %v4888, 0.0
        %v4891 = vadd.f32 %v4889, %v4890
        %v4892 = vrot.slane %v4891, 4
        %v4893 = vadd.f32 %v4891, %v4892
        %v4894 = vrot.slane %v4893, 2
        %v4895 = vadd.f32 %v4893, %v4894
        %v4896 = vrot.slane %v4895, 1
        %v4897 = vadd.f32 %v4895, %v4896
        %v4898 = vrcp.pop %v4897
        %v4899 = vmul.f32 %v4886, %v4898
        %v4900 = vmul.f32 %v4888, %v4898
        %4902 = vset.pattern.permute.xlu0 0
        %4903 = vperm.xlu0 %4902, %v4899
        %v4904 = vpop.permute.xlu0 %4903
        %4907 = vset.pattern.permute.xlu0 0
        %4908 = vperm.xlu0 %4907, %v4900
        %v4909 = vpop.permute.xlu0 %4908
        %v4911 = vmul.f32 %v4904, %v4779
        %v4912 = vmul.f32 %v4909, %v4780
        %v4913 = vsel %vm785, %v4911, 0.0
        %v4914 = vsel %vm785, %v4912, 0.0
        %v4915 = vadd.f32 %v4913, %v4914
        %v4916 = vrot.slane %v4915, 4
        %v4917 = vadd.f32 %v4915, %v4916
        %v4918 = vrot.slane %v4917, 2
        %v4919 = vadd.f32 %v4917, %v4918
        %v4920 = vrot.slane %v4919, 1
        %v4921 = vadd.f32 %v4919, %v4920
        %v4922 = vld [vmem:[%s19] sm:$0xff]
        %v4923 = vld [vmem:[%s19 + $0x8] sm:$0xff]
        %v4924 = vld [vmem:[%s19 + $0x10] sm:$0xff]
        %v4925 = vld [vmem:[%s19 + $0x18] sm:$0xff]
        %v4926 = vld [vmem:[%s20] sm:$0x1]
        %v4928 = vsel %vm785, %v4921, 0
        %4930 = vmatprep.subr.mxu0 0.0
        %4931 = vmatpush1.msra.mxu0 %v4922
        %4932 = vmatprep.subr.mxu0 0.0
        %4933 = vmatpush1.msra.mxu0 %v4923
        %4934 = vmatprep.subr.mxu0 0.0
        %4935 = vmatpush1.msra.mxu0 %v4924
        %4936 = vmatprep.subr.mxu0 0.0
        %4937 = vmatpush1.msra.mxu0 %v4925
        %4938 = vmatprep.subr.mxu0 0.0
        %4939 = vmatpush1.msra.mxu0 0.0
        %4940 = vmatprep.subr.mxu0 0.0
        %4941 = vmatpush1.msra.mxu0 0.0
        %4942 = vmatprep.subr.mxu0 0.0
        %4943 = vmatpush1.msra.mxu0 0.0
        %4944 = vmatprep.subr.mxu0 0.0
        %4945 = vmatpush1.msra.mxu0 0.0
        %4946 = vmatprep.subr.mxu0 0.0
        %4947 = vmatpush1.msra.mxu0 0.0
        %4948 = vmatprep.subr.mxu0 0.0
        %4949 = vmatpush1.msra.mxu0 0.0
        %4950 = vmatprep.subr.mxu0 0.0
        %4951 = vmatpush1.msra.mxu0 0.0
        %4952 = vmatprep.subr.mxu0 0.0
        %4953 = vmatpush1.msra.mxu0 0.0
        %4954 = vmatprep.subr.mxu0 0.0
        %4955 = vmatpush1.msra.mxu0 0.0
        %4956 = vmatprep.subr.mxu0 0.0
        %4957 = vmatpush1.msra.mxu0 0.0
        %4958 = vmatprep.subr.mxu0 0.0
        %4959 = vmatpush1.msra.mxu0 0.0
        %4960 = vmatprep.subr.mxu0 0.0
        %4961 = vmatpush1.msra.mxu0 0.0
        %4962 = vmatprep.subr.mxu0 0.0
        %4963 = vmatpush1.msra.mxu0 0.0
        %4964 = vmatprep.subr.mxu0 0.0
        %4965 = vmatpush1.msra.mxu0 0.0
        %4966 = vmatprep.subr.mxu0 0.0
        %4967 = vmatpush1.msra.mxu0 0.0
        %4968 = vmatprep.subr.mxu0 0.0
        %4969 = vmatpush1.msra.mxu0 0.0
        %4970 = vmatprep.subr.mxu0 0.0
        %4971 = vmatpush1.msra.mxu0 0.0
        %4972 = vmatprep.subr.mxu0 0.0
        %4973 = vmatpush1.msra.mxu0 0.0
        %4974 = vmatprep.subr.mxu0 0.0
        %4975 = vmatpush1.msra.mxu0 0.0
        %4976 = vmatprep.subr.mxu0 0.0
        %4977 = vmatpush1.msra.mxu0 0.0
        %4978 = vmatprep.subr.mxu0 0.0
        %4979 = vmatpush1.msra.mxu0 0.0
        %4980 = vmatprep.subr.mxu0 0.0
        %4981 = vmatpush1.msra.mxu0 0.0
        %4982 = vmatprep.subr.mxu0 0.0
        %4983 = vmatpush1.msra.mxu0 0.0
        %4984 = vmatprep.subr.mxu0 0.0
        %4985 = vmatpush1.msra.mxu0 0.0
        %4986 = vmatprep.subr.mxu0 0.0
        %4987 = vmatpush1.msra.mxu0 0.0
        %4988 = vmatprep.subr.mxu0 0.0
        %4989 = vmatpush1.msra.mxu0 0.0
        %4990 = vmatprep.subr.mxu0 0.0
        %4991 = vmatpush1.msra.mxu0 0.0
        %4992 = vmatprep.subr.mxu0 0.0
        %4993 = vmatpush1.msra.mxu0 0.0
        %4994 = vmatprep.mubr.f32.mxu0 0.0
        %4995 = vmatmul.mubr.f32.gmra.mrb[0].mxu0 %v4928
        %v4996 = vpop.f32.mrb[0].mxu0
        %v4997 = vadd.f32 %v4926, %v4996
        %v4998 = vpop.f32.mrb[0].mxu0
        %4999 = vdwg.mxu0
        %vm5000 = vcmask 122880
        %5001 = vst.msk [vmem:[%s650] sm:$0x1] %vm5000, %v4997
        %s5002 = sand.u32 %s491, 1
        %s5003 = scalar_lea.sflag [#allocation7], %s5002
        %s5004 = sand.u32 %s491, 1
        %s5005 = scalar_lea.vmem [#allocation6], %s5004
        // Predicated region
        $region105: #{cct_forward.1} parent=103 // pred_check
          %p5006 = pneg %p501
        $region106: #{cct_forward.1} parent=103 // pred_check_branch
          %5008 = sbr.rel (%p5006) target = $region108
        $region107: #{cct_forward.1} parent=103 // pred_region
          %s5010 = ssub.s32 16, 16
          %5011 = vsyncadd %s5003, %s5010
          %s5012 = smul.addr %s37, 16
          %s5013 = scalar_lea.hbm %s21, %s5012
          %s5015 = sshll.u32 %s5005, 4
          %s5016 = int_to_ptr.vmem [resolvable:$true] %s5015
          %5018 = dma.vmem_to_hbm [thread:$0]  %s5016, 16, %s5013, %s5003
        $region108: #{cct_forward.1} parent=103 // pred_fallthru
          _
      $region104: #{cct_forward.1} parent=5 // pred_fallthru
        _
      %p5019 = scmp.le.s32.totalorder 2, %s32
      // Predicated region
      $region109: #{cct_forward.1} parent=5 // pred_check
        %p5020 = pneg %p5019
      $region110: #{cct_forward.1} parent=5 // pred_check_branch
        %5022 = sbr.rel (%p5020) target = $region112
      $region111: #{cct_forward.1} parent=5 // pred_region
        %s5023 = ssub.s32 %s32, 2
        // Predicated region
        $region113: #{cct_forward.1} parent=111 // pred_check
          %p5024 = pneg %p507
        $region114: #{cct_forward.1} parent=111 // pred_check_branch
          %5026 = sbr.rel (%p5024) target = $region116
        $region115: #{cct_forward.1} parent=111 // pred_region
          %s5027 = sand.u32 %s492, 1
          %s5028 = scalar_lea.sflag [#allocation7], %s5027
          %s5029 = sand.u32 %s492, 1
          %s5030 = scalar_lea.vmem [#allocation6], %s5029
          %5031 = dma.done %s5028, 16
        $region116: #{cct_forward.1} parent=111 // pred_fallthru
          _
      $region112: #{cct_forward.1} parent=5 // pred_fallthru
        _
    $region6: #{cct_forward.1} parent=1 // loop_footer
      %s36 = sadd.s32 1, %s32
    $region7: #{cct_forward.1} parent=1 // loop_footer_branch
      %31 = sbr.rel target = $region3
    $region8: #{cct_forward.1} parent=1 // loop_exit
      _
    %5032 = vsyncpa [#allocation7], 1
    %s5033 = scalar_lea.sflag [#allocation7], 1
    %5034 = vsyncpa %s5033, 1

</llo_original>
